<compile_context>
chip_gen: v7x
topology: tpu7x:2x2x1
jax: 0.10.0
libtpu: 0.0.40
codegen_flags: <defaults>
</compile_context>

<pallas_src>
import numpy as np

import jax
import jax.numpy as jnp
from jax import lax
from jax.experimental import pallas as pl
from jax.experimental.pallas import tpu as pltpu


# ----------------------------------------------------------------------------
# Fused Pallas kernel: conv1+ReLU -> conv2+ReLU -> MLP head (+sigmoid)
# (both avg-pools and the flatten selection are pre-folded into the operands)
# ----------------------------------------------------------------------------
def _fused_forward_kernel(xk_ref, a1s_ref, b1_ref, a2s_ref, b2_ref,
                          wv_ref, rv_ref, fc1b_ref, fc2w_ref, fc2b_ref,
                          out_ref):
    f32 = jnp.float32
    bf16 = jnp.bfloat16
    k = b1_ref.shape[0]                     # 5 width taps
    P1 = a1s_ref.shape[0] // k              # padded conv1 row block (224)
    P2 = a2s_ref.shape[0] // k              # padded conv2 row block (160)

    def conv_relu(x_bf16, a_stack_ref, b_ref, P):
        # One tall left matmul over all k stacked tap blocks, then k small
        # right matmuls on static, sublane-aligned row slices of the result.
        u = jnp.dot(a_stack_ref[...], x_bf16,
                    preferred_element_type=f32).astype(bf16)
        acc = None
        for j in range(k):                  # static unroll (k = 5)
            t = jnp.dot(u[j * P:(j + 1) * P, :], b_ref[j],
                        preferred_element_type=f32)
            acc = t if acc is None else acc + t
        return jnp.maximum(acc, 0.0).astype(bf16)

    x = xk_ref[...]                         # (Cin*H, N*W)  bf16

    # layer1: Conv2d(c,10,k5,s2) + ReLU   (pool1 folded into layer-2 operands)
    r1 = conv_relu(x, a1s_ref, b1_ref, P1)  # (224, N*22)  rows 220..223 zero

    # layer2: Conv2d(10,40,k5,s2) + ReLU  (pool2 folded into head operands)
    r2 = conv_relu(r1, a2s_ref, b2_ref, P2)  # (160, N*4)

    # layer3: Linear(160,100) -> Dropout(identity) -> ReLU -> Linear(100,o_f)
    #         -> Sigmoid.  rv[v] (0.5-valued) does the width pooling + picks
    #         per-sample columns; wv[v] = fc1 slice with height pooling folded.
    h = fc1b_ref[...]                       # (100, 1) f32, broadcasts over N
    for v in range(rv_ref.shape[0]):        # static unroll (2)
        cv = jnp.dot(r2, rv_ref[v], preferred_element_type=f32).astype(bf16)
        h = h + jnp.dot(wv_ref[v], cv, preferred_element_type=f32)   # (100, N)
    h = jnp.maximum(h, 0.0)   # TODO(synk): Dropout(p=0.5) -> eval-mode identity
    h = h.astype(bf16)
    y = jnp.dot(fc2w_ref[...], h, preferred_element_type=f32) + fc2b_ref[...]
    e = jnp.exp(-y)                                   # EUP
    out_ref[...] = pl.reciprocal(1.0 + e, approx=True)   # sigmoid, (o_f, N)


# ----------------------------------------------------------------------------
# Weight baking (runs ONCE, host-side numpy)
# ----------------------------------------------------------------------------
def _round_up(x, m):
    return ((x + m - 1) // m) * m


def _conv_left_taps(w, h_in, stride):
    """w: (Cout, Cin, k, k).  Per-width-tap left matrices a[j]:
    (Cout*OH, Cin*h_in) contracting (c_in, kernel-row)."""
    cout, cin, k, _ = w.shape
    oh = (h_in - k) // stride + 1
    a = np.zeros((k, cin * h_in, cout * oh), np.float32)
    for j in range(k):
        for i in range(k):
            for o_ in range(oh):
                hrow = stride * o_ + i
                rows = np.arange(cin) * h_in + hrow
                cols = np.arange(cout) * oh + o_
                a[j, rows[:, None], cols[None, :]] = w[:, :, i, j].T
    return np.transpose(a, (0, 2, 1)), oh            # (k, Cout*OH, Cin*h_in)


def _conv_right_taps(k, w_in, stride):
    """Per-width-tap selection b[j]: (w_in, OW), picks column stride*ow+j."""
    ow = (w_in - k) // stride + 1
    b = np.zeros((k, w_in, ow), np.float32)
    for j in range(k):
        for o_ in range(ow):
            b[j, stride * o_ + j, o_] = 1.0
    return b, ow


def _pool_map(n_in):
    """2->1 average pooling map (n_in, n_in//2), entries 0.5."""
    p = np.zeros((n_in, n_in // 2), np.float32)
    for u in range(n_in // 2):
        p[2 * u, u] = 0.5
        p[2 * u + 1, u] = 0.5
    return p


def bake_params(params, x_shape):
    """Bake PyTorch-layout params into bf16 kernel operands.
    NOTE: depends on batch size and spatial size (re-bake if they change)."""
    n, c, h, w = x_shape
    w1 = np.asarray(params["conv1_w"], np.float32)     # (10, c, 5, 5)
    w2 = np.asarray(params["conv2_w"], np.float32)     # (40, 10, 5, 5)
    fc1_w = np.asarray(params["fc1_w"], np.float32)    # (100, 160)
    fc1_b = np.asarray(params["fc1_b"], np.float32)    # (100,)
    fc2_w = np.asarray(params["fc2_w"], np.float32)    # (o_f, 100)
    fc2_b = np.asarray(params["fc2_b"], np.float32)    # (o_f,)
    k = w1.shape[2]
    co1, co2 = w1.shape[0], w2.shape[0]
    eye_n = np.eye(n, dtype=np.float32)

    # ---- stage 1: stacked left taps + block-diag right taps ----------------
    a1, oh1 = _conv_left_taps(w1, h, 2)                # (5, 220, 144)
    b1_s, ow1 = _conv_right_taps(k, w, 2)              # (5, 48, 22)
    P1 = _round_up(co1 * oh1, 8)                       # 224 (sublane multiple)
    a1s = np.zeros((k * P1, c * h), np.float32)
    for j in range(k):
        a1s[j * P1: j * P1 + co1 * oh1] = a1[j]
    b1 = np.stack([np.kron(eye_n, b1_s[j]) for j in range(k)])   # (5, n*48, n*22)

    # ---- pool1 maps, folded into stage 2 -----------------------------------
    p1h, p1w = oh1 // 2, ow1 // 2                      # 11, 11
    ph1_s, pw1_s = _pool_map(oh1), _pool_map(ow1)      # (22,11), (22,11)
    ph1t = np.kron(np.eye(co1, dtype=np.float32), ph1_s).T       # (110, 220)

    # ---- stage 2: pool1 folded into left (a2') and right (b2') taps --------
    a2, oh2 = _conv_left_taps(w2, p1h, 2)              # (5, 160, 110)
    b2_s, ow2 = _conv_right_taps(k, p1w, 2)            # (5, 11, 4)
    P2 = _round_up(co2 * oh2, 8)                       # 160
    a2s = np.zeros((k * P2, P1), np.float32)           # cols padded 220 -> 224
    for j in range(k):
        a2s[j * P2: j * P2 + co2 * oh2, : co1 * oh1] = a2[j] @ ph1t
    b2f_s = np.stack([pw1_s @ b2_s[j] for j in range(k)])        # (5, 22, 4)
    b2 = np.stack([np.kron(eye_n, b2f_s[j]) for j in range(k)])  # (5, n*22, n*4)

    # ---- head: pool2 + flatten-selection folded -----------------------------
    p2h, p2w = oh2 // 2, ow2 // 2                      # 2, 2
    assert fc1_w.shape[1] == co2 * p2h * p2w, "input size inconsistent with fc1"
    ph2_s, pw2_s = _pool_map(oh2), _pool_map(ow2)      # (4,2), (4,2)
    ph2t = np.kron(np.eye(co2, dtype=np.float32), ph2_s).T       # (80, 160)
    fc1_r = fc1_w.reshape(fc1_w.shape[0], co2, p2h, p2w)
    wv = np.stack([fc1_r[:, :, :, v].reshape(fc1_w.shape[0], co2 * p2h) @ ph2t
                   for v in range(p2w)])               # (2, 100, 160)
    rv = np.zeros((p2w, n * ow2, n), np.float32)       # width-pool + col select
    for v in range(p2w):
        for b_ in range(n):
            rv[v, b_ * ow2 + 2 * v, b_] = 0.5
            rv[v, b_ * ow2 + 2 * v + 1, b_] = 0.5

    bf = lambda arr: jnp.asarray(arr, jnp.bfloat16)
    f32 = lambda arr: jnp.asarray(arr, jnp.float32)
    return {
        "a1s": bf(a1s), "b1": bf(b1), "a2s": bf(a2s), "b2": bf(b2),
        "wv": bf(wv), "rv": bf(rv),
        "fc1_b": f32(fc1_b.reshape(-1, 1)),
        "fc2_w": bf(fc2_w), "fc2_b": f32(fc2_b.reshape(-1, 1)),
    }


# ----------------------------------------------------------------------------
# Model
# ----------------------------------------------------------------------------
def init_params(key, c=3, o_f=1):
    k1, k2, k3, k4, k5, k6 = jax.random.split(key, 6)
    return {
        "conv1_w": jax.random.normal(k1, (10, c, 5, 5), jnp.float32) * 0.05,
        "conv2_w": jax.random.normal(k2, (40, 10, 5, 5), jnp.float32) * 0.05,
        "fc1_w": jax.random.normal(k3, (100, 160), jnp.float32) * 0.05,  # (out,in)
        "fc1_b": jax.random.normal(k4, (100,), jnp.float32) * 0.05,
        "fc2_w": jax.random.normal(k5, (o_f, 100), jnp.float32) * 0.05,
        "fc2_b": jax.random.normal(k6, (o_f,), jnp.float32) * 0.05,
    }


@jax.jit
def mymodel_forward(baked, x):
    n, c, h, w = x.shape
    # Static-shape consistency guards (baked matrices are specialized to N,H,W).
    assert baked["a1s"].shape[1] == c * h, "re-bake: channel/height mismatch"
    assert baked["b1"].shape[1] == n * w, "re-bake: batch/width mismatch"
    # Only XLA glue on the activation path: one tiny relayout of the input to
    # (Cin*H, N*W) bf16 so every in-kernel op is a plain contiguous 2-D matmul.
    xk = jnp.transpose(x, (1, 2, 0, 3)).reshape(c * h, n * w).astype(jnp.bfloat16)
    o_f = baked["fc2_w"].shape[0]
    out = pl.pallas_call(
        _fused_forward_kernel,
        out_shape=jax.ShapeDtypeStruct((o_f, n), jnp.float32),
        # No grid / BlockSpecs: each operand is a single full-array VMEM block
        # (~0.9 MB bf16 total), no pipeline prologue/epilogue, one launch.
        compiler_params=pltpu.CompilerParams(vmem_limit_bytes=32 * 1024 * 1024),
    )(xk, baked["a1s"], baked["b1"], baked["a2s"], baked["b2"],
      baked["wv"], baked["rv"], baked["fc1_b"], baked["fc2_w"], baked["fc2_b"])
    return out.T                                        # (N, o_f), PyTorch layout


# ----------------------------------------------------------------------------
# Pure-JAX reference (XLA, f32) for correctness checking
# ----------------------------------------------------------------------------
def reference_forward(params, x):
    def block(y, wgt):
        y = lax.conv_general_dilated(y, wgt, (2, 2), "VALID",
                                     dimension_numbers=("NCHW", "OIHW", "NCHW"))
        y = jnp.maximum(y, 0.0)
        n_, c_, hh, ww = y.shape
        return y.reshape(n_, c_, hh // 2, 2, ww // 2, 2).mean(axis=(3, 5))

    y = block(x, params["conv1_w"])
    y = block(y, params["conv2_w"])
    flat = y.reshape(y.shape[0], -1)                    # (N, 160), torch order
    hdn = jnp.maximum(flat @ params["fc1_w"].T + params["fc1_b"], 0.0)
    logit = hdn @ params["fc2_w"].T + params["fc2_b"]
    return jax.nn.sigmoid(logit)


if __name__ == "__main__":
    key = jax.random.PRNGKey(0)
    pkey, xkey = jax.random.split(key)
    params = init_params(pkey, c=3, o_f=1)
    # 48x48 input: conv1->22, pool->11, conv2->4, pool->2  => 2*2*40 = 160 feats
    x = jax.random.normal(xkey, (2, 3, 48, 48), jnp.float32)

    baked = bake_params(params, x.shape)                # once, outside hot path
    y = jax.block_until_ready(mymodel_forward(baked, x))

    assert y.shape == (2, 1)
    assert bool(jnp.all((y >= 0.0) & (y <= 1.0)))
    y_ref = jax.block_until_ready(reference_forward(params, x))
    # bf16 operands + approx reciprocal => slightly relaxed parity tolerance.
    assert bool(jnp.allclose(y, y_ref, atol=1e-2)), (y, y_ref)
    print("KERNEL_OK")
</pallas_src>

<mosaic_0001>
module attributes {stable_mosaic.version = 11 : i64} {
  func.func @_fused_forward_kernel(%arg0: memref<144x96xbf16, #tpu.memory_space<vmem>>, %arg1: memref<1120x144xbf16, #tpu.memory_space<vmem>>, %arg2: memref<5x96x44xbf16, #tpu.memory_space<vmem>>, %arg3: memref<800x224xbf16, #tpu.memory_space<vmem>>, %arg4: memref<5x44x8xbf16, #tpu.memory_space<vmem>>, %arg5: memref<2x100x160xbf16, #tpu.memory_space<vmem>>, %arg6: memref<2x8x2xbf16, #tpu.memory_space<vmem>>, %arg7: memref<100x1xf32, #tpu.memory_space<vmem>>, %arg8: memref<1x100xbf16, #tpu.memory_space<vmem>>, %arg9: memref<1x1xf32, #tpu.memory_space<vmem>>, %arg10: memref<1x2xf32, #tpu.memory_space<vmem>>) attributes {dimension_semantics = [], scalar_prefetch = 0 : i64, scratch_operands = 0 : i64, tpu.core_type = #tpu.core_type<tc>} {
    %c0 = arith.constant 0 : index
    %c0_0 = arith.constant 0 : index
    %0 = vector.load %arg0[%c0, %c0_0] : memref<144x96xbf16, #tpu.memory_space<vmem>>, vector<144x96xbf16>
    %c0_1 = arith.constant 0 : index
    %c0_2 = arith.constant 0 : index
    %1 = vector.load %arg1[%c0_1, %c0_2] : memref<1120x144xbf16, #tpu.memory_space<vmem>>, vector<1120x144xbf16>
    %cst = arith.constant dense<0.000000e+00> : vector<1120x96xf32>
    %2 = tpu.matmul %1, %0, %cst {dimension_numbers = #tpu.dot_dimension_numbers<[1], [0], [0], [1], [0, 0, 1, 1], [], []>} : vector<1120x144xbf16>, vector<144x96xbf16>, vector<1120x96xf32> -> vector<1120x96xf32>
    %3 = arith.truncf %2 : vector<1120x96xf32> to vector<1120x96xbf16>
    %4 = vector.extract_strided_slice %3 {offsets = [0, 0], sizes = [224, 96], strides = [1, 1]} : vector<1120x96xbf16> to vector<224x96xbf16>
    %c0_3 = arith.constant 0 : index
    %c0_4 = arith.constant 0 : index
    %c0_5 = arith.constant 0 : index
    %5 = vector.load %arg2[%c0_3, %c0_4, %c0_5] : memref<5x96x44xbf16, #tpu.memory_space<vmem>>, vector<1x96x44xbf16>
    %6 = vector.shape_cast %5 : vector<1x96x44xbf16> to vector<96x44xbf16>
    %cst_6 = arith.constant dense<0.000000e+00> : vector<224x44xf32>
    %7 = tpu.matmul %4, %6, %cst_6 {dimension_numbers = #tpu.dot_dimension_numbers<[1], [0], [0], [1], [0, 0, 1, 1], [], []>} : vector<224x96xbf16>, vector<96x44xbf16>, vector<224x44xf32> -> vector<224x44xf32>
    %8 = vector.extract_strided_slice %3 {offsets = [224, 0], sizes = [224, 96], strides = [1, 1]} : vector<1120x96xbf16> to vector<224x96xbf16>
    %c1 = arith.constant 1 : index
    %c0_7 = arith.constant 0 : index
    %c0_8 = arith.constant 0 : index
    %9 = vector.load %arg2[%c1, %c0_7, %c0_8] : memref<5x96x44xbf16, #tpu.memory_space<vmem>>, vector<1x96x44xbf16>
    %10 = vector.shape_cast %9 : vector<1x96x44xbf16> to vector<96x44xbf16>
    %cst_9 = arith.constant dense<0.000000e+00> : vector<224x44xf32>
    %11 = tpu.matmul %8, %10, %cst_9 {dimension_numbers = #tpu.dot_dimension_numbers<[1], [0], [0], [1], [0, 0, 1, 1], [], []>} : vector<224x96xbf16>, vector<96x44xbf16>, vector<224x44xf32> -> vector<224x44xf32>
    %12 = arith.addf %7, %11 : vector<224x44xf32>
    %13 = vector.extract_strided_slice %3 {offsets = [448, 0], sizes = [224, 96], strides = [1, 1]} : vector<1120x96xbf16> to vector<224x96xbf16>
    %c2 = arith.constant 2 : index
    %c0_10 = arith.constant 0 : index
    %c0_11 = arith.constant 0 : index
    %14 = vector.load %arg2[%c2, %c0_10, %c0_11] : memref<5x96x44xbf16, #tpu.memory_space<vmem>>, vector<1x96x44xbf16>
    %15 = vector.shape_cast %14 : vector<1x96x44xbf16> to vector<96x44xbf16>
    %cst_12 = arith.constant dense<0.000000e+00> : vector<224x44xf32>
    %16 = tpu.matmul %13, %15, %cst_12 {dimension_numbers = #tpu.dot_dimension_numbers<[1], [0], [0], [1], [0, 0, 1, 1], [], []>} : vector<224x96xbf16>, vector<96x44xbf16>, vector<224x44xf32> -> vector<224x44xf32>
    %17 = arith.addf %12, %16 : vector<224x44xf32>
    %18 = vector.extract_strided_slice %3 {offsets = [672, 0], sizes = [224, 96], strides = [1, 1]} : vector<1120x96xbf16> to vector<224x96xbf16>
    %c3 = arith.constant 3 : index
    %c0_13 = arith.constant 0 : index
    %c0_14 = arith.constant 0 : index
    %19 = vector.load %arg2[%c3, %c0_13, %c0_14] : memref<5x96x44xbf16, #tpu.memory_space<vmem>>, vector<1x96x44xbf16>
    %20 = vector.shape_cast %19 : vector<1x96x44xbf16> to vector<96x44xbf16>
    %cst_15 = arith.constant dense<0.000000e+00> : vector<224x44xf32>
    %21 = tpu.matmul %18, %20, %cst_15 {dimension_numbers = #tpu.dot_dimension_numbers<[1], [0], [0], [1], [0, 0, 1, 1], [], []>} : vector<224x96xbf16>, vector<96x44xbf16>, vector<224x44xf32> -> vector<224x44xf32>
    %22 = arith.addf %17, %21 : vector<224x44xf32>
    %23 = vector.extract_strided_slice %3 {offsets = [896, 0], sizes = [224, 96], strides = [1, 1]} : vector<1120x96xbf16> to vector<224x96xbf16>
    %c4 = arith.constant 4 : index
    %c0_16 = arith.constant 0 : index
    %c0_17 = arith.constant 0 : index
    %24 = vector.load %arg2[%c4, %c0_16, %c0_17] : memref<5x96x44xbf16, #tpu.memory_space<vmem>>, vector<1x96x44xbf16>
    %25 = vector.shape_cast %24 : vector<1x96x44xbf16> to vector<96x44xbf16>
    %cst_18 = arith.constant dense<0.000000e+00> : vector<224x44xf32>
    %26 = tpu.matmul %23, %25, %cst_18 {dimension_numbers = #tpu.dot_dimension_numbers<[1], [0], [0], [1], [0, 0, 1, 1], [], []>} : vector<224x96xbf16>, vector<96x44xbf16>, vector<224x44xf32> -> vector<224x44xf32>
    %27 = arith.addf %22, %26 : vector<224x44xf32>
    %cst_19 = arith.constant 0.000000e+00 : f32
    %28 = vector.broadcast %cst_19 : f32 to vector<224x44xf32>
    %29 = arith.maximumf %27, %28 : vector<224x44xf32>
    %30 = arith.truncf %29 : vector<224x44xf32> to vector<224x44xbf16>
    %c0_20 = arith.constant 0 : index
    %c0_21 = arith.constant 0 : index
    %31 = vector.load %arg3[%c0_20, %c0_21] : memref<800x224xbf16, #tpu.memory_space<vmem>>, vector<800x224xbf16>
    %cst_22 = arith.constant dense<0.000000e+00> : vector<800x44xf32>
    %32 = tpu.matmul %31, %30, %cst_22 {dimension_numbers = #tpu.dot_dimension_numbers<[1], [0], [0], [1], [0, 0, 1, 1], [], []>} : vector<800x224xbf16>, vector<224x44xbf16>, vector<800x44xf32> -> vector<800x44xf32>
    %33 = arith.truncf %32 : vector<800x44xf32> to vector<800x44xbf16>
    %34 = vector.extract_strided_slice %33 {offsets = [0, 0], sizes = [160, 44], strides = [1, 1]} : vector<800x44xbf16> to vector<160x44xbf16>
    %c0_23 = arith.constant 0 : index
    %c0_24 = arith.constant 0 : index
    %c0_25 = arith.constant 0 : index
    %35 = vector.load %arg4[%c0_23, %c0_24, %c0_25] : memref<5x44x8xbf16, #tpu.memory_space<vmem>>, vector<1x44x8xbf16>
    %36 = vector.shape_cast %35 : vector<1x44x8xbf16> to vector<44x8xbf16>
    %cst_26 = arith.constant dense<0.000000e+00> : vector<160x8xf32>
    %37 = tpu.matmul %34, %36, %cst_26 {dimension_numbers = #tpu.dot_dimension_numbers<[1], [0], [0], [1], [0, 0, 1, 1], [], []>} : vector<160x44xbf16>, vector<44x8xbf16>, vector<160x8xf32> -> vector<160x8xf32>
    %38 = vector.extract_strided_slice %33 {offsets = [160, 0], sizes = [160, 44], strides = [1, 1]} : vector<800x44xbf16> to vector<160x44xbf16>
    %c1_27 = arith.constant 1 : index
    %c0_28 = arith.constant 0 : index
    %c0_29 = arith.constant 0 : index
    %39 = vector.load %arg4[%c1_27, %c0_28, %c0_29] : memref<5x44x8xbf16, #tpu.memory_space<vmem>>, vector<1x44x8xbf16>
    %40 = vector.shape_cast %39 : vector<1x44x8xbf16> to vector<44x8xbf16>
    %cst_30 = arith.constant dense<0.000000e+00> : vector<160x8xf32>
    %41 = tpu.matmul %38, %40, %cst_30 {dimension_numbers = #tpu.dot_dimension_numbers<[1], [0], [0], [1], [0, 0, 1, 1], [], []>} : vector<160x44xbf16>, vector<44x8xbf16>, vector<160x8xf32> -> vector<160x8xf32>
    %42 = arith.addf %37, %41 : vector<160x8xf32>
    %43 = vector.extract_strided_slice %33 {offsets = [320, 0], sizes = [160, 44], strides = [1, 1]} : vector<800x44xbf16> to vector<160x44xbf16>
    %c2_31 = arith.constant 2 : index
    %c0_32 = arith.constant 0 : index
    %c0_33 = arith.constant 0 : index
    %44 = vector.load %arg4[%c2_31, %c0_32, %c0_33] : memref<5x44x8xbf16, #tpu.memory_space<vmem>>, vector<1x44x8xbf16>
    %45 = vector.shape_cast %44 : vector<1x44x8xbf16> to vector<44x8xbf16>
    %cst_34 = arith.constant dense<0.000000e+00> : vector<160x8xf32>
    %46 = tpu.matmul %43, %45, %cst_34 {dimension_numbers = #tpu.dot_dimension_numbers<[1], [0], [0], [1], [0, 0, 1, 1], [], []>} : vector<160x44xbf16>, vector<44x8xbf16>, vector<160x8xf32> -> vector<160x8xf32>
    %47 = arith.addf %42, %46 : vector<160x8xf32>
    %48 = vector.extract_strided_slice %33 {offsets = [480, 0], sizes = [160, 44], strides = [1, 1]} : vector<800x44xbf16> to vector<160x44xbf16>
    %c3_35 = arith.constant 3 : index
    %c0_36 = arith.constant 0 : index
    %c0_37 = arith.constant 0 : index
    %49 = vector.load %arg4[%c3_35, %c0_36, %c0_37] : memref<5x44x8xbf16, #tpu.memory_space<vmem>>, vector<1x44x8xbf16>
    %50 = vector.shape_cast %49 : vector<1x44x8xbf16> to vector<44x8xbf16>
    %cst_38 = arith.constant dense<0.000000e+00> : vector<160x8xf32>
    %51 = tpu.matmul %48, %50, %cst_38 {dimension_numbers = #tpu.dot_dimension_numbers<[1], [0], [0], [1], [0, 0, 1, 1], [], []>} : vector<160x44xbf16>, vector<44x8xbf16>, vector<160x8xf32> -> vector<160x8xf32>
    %52 = arith.addf %47, %51 : vector<160x8xf32>
    %53 = vector.extract_strided_slice %33 {offsets = [640, 0], sizes = [160, 44], strides = [1, 1]} : vector<800x44xbf16> to vector<160x44xbf16>
    %c4_39 = arith.constant 4 : index
    %c0_40 = arith.constant 0 : index
    %c0_41 = arith.constant 0 : index
    %54 = vector.load %arg4[%c4_39, %c0_40, %c0_41] : memref<5x44x8xbf16, #tpu.memory_space<vmem>>, vector<1x44x8xbf16>
    %55 = vector.shape_cast %54 : vector<1x44x8xbf16> to vector<44x8xbf16>
    %cst_42 = arith.constant dense<0.000000e+00> : vector<160x8xf32>
    %56 = tpu.matmul %53, %55, %cst_42 {dimension_numbers = #tpu.dot_dimension_numbers<[1], [0], [0], [1], [0, 0, 1, 1], [], []>} : vector<160x44xbf16>, vector<44x8xbf16>, vector<160x8xf32> -> vector<160x8xf32>
    %57 = arith.addf %52, %56 : vector<160x8xf32>
    %cst_43 = arith.constant 0.000000e+00 : f32
    %58 = vector.broadcast %cst_43 : f32 to vector<160x8xf32>
    %59 = arith.maximumf %57, %58 : vector<160x8xf32>
    %60 = arith.truncf %59 : vector<160x8xf32> to vector<160x8xbf16>
    %c0_44 = arith.constant 0 : index
    %c0_45 = arith.constant 0 : index
    %61 = vector.load %arg7[%c0_44, %c0_45] : memref<100x1xf32, #tpu.memory_space<vmem>>, vector<100x1xf32>
    %c0_46 = arith.constant 0 : index
    %c0_47 = arith.constant 0 : index
    %c0_48 = arith.constant 0 : index
    %62 = vector.load %arg6[%c0_46, %c0_47, %c0_48] : memref<2x8x2xbf16, #tpu.memory_space<vmem>>, vector<1x8x2xbf16>
    %63 = vector.shape_cast %62 : vector<1x8x2xbf16> to vector<8x2xbf16>
    %cst_49 = arith.constant dense<0.000000e+00> : vector<160x2xf32>
    %64 = tpu.matmul %60, %63, %cst_49 {dimension_numbers = #tpu.dot_dimension_numbers<[1], [0], [0], [1], [0, 0, 1, 1], [], []>} : vector<160x8xbf16>, vector<8x2xbf16>, vector<160x2xf32> -> vector<160x2xf32>
    %65 = arith.truncf %64 : vector<160x2xf32> to vector<160x2xbf16>
    %c0_50 = arith.constant 0 : index
    %c0_51 = arith.constant 0 : index
    %c0_52 = arith.constant 0 : index
    %66 = vector.load %arg5[%c0_50, %c0_51, %c0_52] : memref<2x100x160xbf16, #tpu.memory_space<vmem>>, vector<1x100x160xbf16>
    %67 = vector.shape_cast %66 : vector<1x100x160xbf16> to vector<100x160xbf16>
    %cst_53 = arith.constant dense<0.000000e+00> : vector<100x2xf32>
    %68 = tpu.matmul %67, %65, %cst_53 {dimension_numbers = #tpu.dot_dimension_numbers<[1], [0], [0], [1], [0, 0, 1, 1], [], []>} : vector<100x160xbf16>, vector<160x2xbf16>, vector<100x2xf32> -> vector<100x2xf32>
    %69 = vector.broadcast %61 : vector<100x1xf32> to vector<100x2xf32>
    %70 = arith.addf %69, %68 : vector<100x2xf32>
    %c1_54 = arith.constant 1 : index
    %c0_55 = arith.constant 0 : index
    %c0_56 = arith.constant 0 : index
    %71 = vector.load %arg6[%c1_54, %c0_55, %c0_56] : memref<2x8x2xbf16, #tpu.memory_space<vmem>>, vector<1x8x2xbf16>
    %72 = vector.shape_cast %71 : vector<1x8x2xbf16> to vector<8x2xbf16>
    %cst_57 = arith.constant dense<0.000000e+00> : vector<160x2xf32>
    %73 = tpu.matmul %60, %72, %cst_57 {dimension_numbers = #tpu.dot_dimension_numbers<[1], [0], [0], [1], [0, 0, 1, 1], [], []>} : vector<160x8xbf16>, vector<8x2xbf16>, vector<160x2xf32> -> vector<160x2xf32>
    %74 = arith.truncf %73 : vector<160x2xf32> to vector<160x2xbf16>
    %c1_58 = arith.constant 1 : index
    %c0_59 = arith.constant 0 : index
    %c0_60 = arith.constant 0 : index
    %75 = vector.load %arg5[%c1_58, %c0_59, %c0_60] : memref<2x100x160xbf16, #tpu.memory_space<vmem>>, vector<1x100x160xbf16>
    %76 = vector.shape_cast %75 : vector<1x100x160xbf16> to vector<100x160xbf16>
    %cst_61 = arith.constant dense<0.000000e+00> : vector<100x2xf32>
    %77 = tpu.matmul %76, %74, %cst_61 {dimension_numbers = #tpu.dot_dimension_numbers<[1], [0], [0], [1], [0, 0, 1, 1], [], []>} : vector<100x160xbf16>, vector<160x2xbf16>, vector<100x2xf32> -> vector<100x2xf32>
    %78 = arith.addf %70, %77 : vector<100x2xf32>
    %cst_62 = arith.constant 0.000000e+00 : f32
    %79 = vector.broadcast %cst_62 : f32 to vector<100x2xf32>
    %80 = arith.maximumf %78, %79 : vector<100x2xf32>
    %81 = arith.truncf %80 : vector<100x2xf32> to vector<100x2xbf16>
    %c0_63 = arith.constant 0 : index
    %c0_64 = arith.constant 0 : index
    %82 = vector.load %arg8[%c0_63, %c0_64] : memref<1x100xbf16, #tpu.memory_space<vmem>>, vector<1x100xbf16>
    %cst_65 = arith.constant dense<0.000000e+00> : vector<1x2xf32>
    %83 = tpu.matmul %82, %81, %cst_65 {dimension_numbers = #tpu.dot_dimension_numbers<[1], [0], [0], [1], [0, 0, 1, 1], [], []>} : vector<1x100xbf16>, vector<100x2xbf16>, vector<1x2xf32> -> vector<1x2xf32>
    %c0_66 = arith.constant 0 : index
    %c0_67 = arith.constant 0 : index
    %84 = vector.load %arg9[%c0_66, %c0_67] : memref<1x1xf32, #tpu.memory_space<vmem>>, vector<1x1xf32>
    %85 = vector.broadcast %84 : vector<1x1xf32> to vector<1x2xf32>
    %86 = arith.addf %83, %85 : vector<1x2xf32>
    %cst_68 = arith.constant 0.000000e+00 : f32
    %87 = vector.broadcast %cst_68 : f32 to vector<1x2xf32>
    %88 = arith.subf %87, %86 : vector<1x2xf32>
    %89 = math.exp %88 : vector<1x2xf32>
    %cst_69 = arith.constant 1.000000e+00 : f32
    %90 = vector.broadcast %cst_69 : f32 to vector<1x2xf32>
    %91 = arith.addf %90, %89 : vector<1x2xf32>
    %92 = tpu.reciprocal %91 {approx = true} : vector<1x2xf32> -> vector<1x2xf32>
    %c0_70 = arith.constant 0 : index
    %c0_71 = arith.constant 0 : index
    %93 = vector.load %arg10[%c0_70, %c0_71] : memref<1x2xf32, #tpu.memory_space<vmem>>, vector<1x2xf32>
    tpu.vector_store %arg10[%c0_70, %c0_71], %92 {strides = array<i32>} : memref<1x2xf32, #tpu.memory_space<vmem>>, vector<1x2xf32>,
    return
  }
}

</mosaic_0001>

<llo_original>
// kernel: mymodel_forward.1
$region0: #{mymodel_forward.1}
  #allocation0 [shape = 'u32[]', space=smem, size = 0x4, offset = 0x4, fixed_abs, tag = 'smem constant byte address 0x4 - core index']
  #allocation1 [shape = 'u32[144,128]{1,0:T(1,128)}', space=vmem, size = 0x12000, scoped, tag = 'internal scratch']
  #allocation2 [shape = 'f32[1,1]{1,0:T(1,128)S(1)}', space=vmem, size = 0x200, scoped, tag = 'scoped memory for mymodel_forward.1']
  %s0 = inlined_call_operand.vmem [shape: bf16[144,96], index: 0, kind: input, shape index: {}]
  %s1 = inlined_call_operand.vmem [shape: bf16[1120,144], index: 1, kind: input, shape index: {}]
  %s2 = inlined_call_operand.vmem [shape: bf16[5,96,44], index: 2, kind: input, shape index: {}]
  %s3 = inlined_call_operand.vmem [shape: bf16[800,224], index: 3, kind: input, shape index: {}]
  %s4 = inlined_call_operand.vmem [shape: bf16[5,44,8], index: 4, kind: input, shape index: {}]
  %s5 = inlined_call_operand.vmem [shape: bf16[2,100,160], index: 5, kind: input, shape index: {}]
  %s6 = inlined_call_operand.vmem [shape: bf16[2,8,2], index: 6, kind: input, shape index: {}]
  %s7 = inlined_call_operand.vmem [shape: f32[100,1], index: 7, kind: input, shape index: {}]
  %s8 = inlined_call_operand.vmem [shape: bf16[1,100], index: 8, kind: input, shape index: {}]
  %s9 = inlined_call_operand.<no memory space> [shape: f32[1,1], index: 9, kind: input, shape index: {}]
  %s10 = inlined_call_operand.hbm [shape: f32[1,2], index: 10, kind: output, shape index: {}]
  %s11 = sld [smem:[#allocation0]]
  $region50: #{mymodel_forward.1} parent=0
    _
  %s13 = ssub.s32 1, %s11
  %s14 = scalar_select 0, %s13, %s11
  %v15 = vstv %s9
  %16 = vst [vmem:[#allocation2] sm:$0x1] %v15
  $region1: #{mymodel_forward.1} parent=0
    #allocation3 [shape = 'u8[512]{0}', space=vmem, size = 0x400, scoped, tag = 'output window, operand 0, single buffered']
    #allocation4 [shape = 's32[1]{0}', space=sflag, size = 0x4, scoped, tag = 'scoped memory for mymodel_forward.1']
    %17 = vsyncpa [#allocation4], 0
    // Predicated region
    $region2: #{mymodel_forward.1} parent=1 // pred_check
      _
    $region3: #{mymodel_forward.1} parent=1 // pred_check_branch
      %19 = sbr.rel (0) target = $region5
    $region4: #{mymodel_forward.1} parent=1 // pred_region
      _
    $region5: #{mymodel_forward.1} parent=1 // pred_fallthru
      _
    // Predicated region
    $region6: #{mymodel_forward.1} parent=1 // pred_check
      _
    $region7: #{mymodel_forward.1} parent=1 // pred_check_branch
      %21 = sbr.rel (0) target = $region9
    $region8: #{mymodel_forward.1} parent=1 // pred_region
      _
    $region9: #{mymodel_forward.1} parent=1 // pred_fallthru
      _
    // Predicated region
    $region10: #{mymodel_forward.1} parent=1 // pred_check
      _
    $region11: #{mymodel_forward.1} parent=1 // pred_check_branch
      %23 = sbr.rel (0) target = $region13
    $region12: #{mymodel_forward.1} parent=1 // pred_region
      _
    $region13: #{mymodel_forward.1} parent=1 // pred_fallthru
      _
    // Predicated region
    $region14: #{mymodel_forward.1} parent=1 // pred_check
      _
    $region15: #{mymodel_forward.1} parent=1 // pred_check_branch
      %25 = sbr.rel (0) target = $region17
    $region16: #{mymodel_forward.1} parent=1 // pred_region
      _
    $region17: #{mymodel_forward.1} parent=1 // pred_fallthru
      _
    // Predicated region
    $region18: #{mymodel_forward.1} parent=1 // pred_check
      _
    $region19: #{mymodel_forward.1} parent=1 // pred_check_branch
      %27 = sbr.rel (0) target = $region21
    $region20: #{mymodel_forward.1} parent=1 // pred_region
      _
    $region21: #{mymodel_forward.1} parent=1 // pred_fallthru
      _
    // Predicated region
    $region22: #{mymodel_forward.1} parent=1 // pred_check
      _
    $region23: #{mymodel_forward.1} parent=1 // pred_check_branch
      %29 = sbr.rel (0) target = $region25
    $region24: #{mymodel_forward.1} parent=1 // pred_region
      _
    $region25: #{mymodel_forward.1} parent=1 // pred_fallthru
      _
    // Predicated region
    $region26: #{mymodel_forward.1} parent=1 // pred_check
      _
    $region27: #{mymodel_forward.1} parent=1 // pred_check_branch
      %31 = sbr.rel (0) target = $region29
    $region28: #{mymodel_forward.1} parent=1 // pred_region
      _
    $region29: #{mymodel_forward.1} parent=1 // pred_fallthru
      _
    // Predicated region
    $region30: #{mymodel_forward.1} parent=1 // pred_check
      _
    $region31: #{mymodel_forward.1} parent=1 // pred_check_branch
      %33 = sbr.rel (0) target = $region33
    $region32: #{mymodel_forward.1} parent=1 // pred_region
      _
    $region33: #{mymodel_forward.1} parent=1 // pred_fallthru
      _
    // Predicated region
    $region34: #{mymodel_forward.1} parent=1 // pred_check
      _
    $region35: #{mymodel_forward.1} parent=1 // pred_check_branch
      %35 = sbr.rel (0) target = $region37
    $region36: #{mymodel_forward.1} parent=1 // pred_region
      _
    $region37: #{mymodel_forward.1} parent=1 // pred_fallthru
      _
    // Predicated region
    $region38: #{mymodel_forward.1} parent=1 // pred_check
      _
    $region39: #{mymodel_forward.1} parent=1 // pred_check_branch
      %37 = sbr.rel (0) target = $region41
    $region40: #{mymodel_forward.1} parent=1 // pred_region
      _
    $region41: #{mymodel_forward.1} parent=1 // pred_fallthru
      _
    %v39 = vld [vmem:[%s0] sm:$0xf]
    %v40 = vld [vmem:[%s0 + $0x4] sm:$0xf]
    %v41 = vld [vmem:[%s0 + $0x8] sm:$0xf]
    %v42 = vld [vmem:[%s0 + $0xc] sm:$0xf]
    %v43 = vld [vmem:[%s0 + $0x10] sm:$0xf]
    %v44 = vld [vmem:[%s0 + $0x14] sm:$0xf]
    %v45 = vld [vmem:[%s0 + $0x18] sm:$0xf]
    %v46 = vld [vmem:[%s0 + $0x1c] sm:$0xf]
    %v47 = vld [vmem:[%s0 + $0x20] sm:$0xf]
    %v48 = vld [vmem:[%s0 + $0x24] sm:$0xf]
    %v49 = vld [vmem:[%s0 + $0x28] sm:$0xf]
    %v50 = vld [vmem:[%s0 + $0x2c] sm:$0xf]
    %v51 = vld [vmem:[%s0 + $0x30] sm:$0xf]
    %v52 = vld [vmem:[%s0 + $0x34] sm:$0xf]
    %v53 = vld [vmem:[%s0 + $0x38] sm:$0xf]
    %v54 = vld [vmem:[%s0 + $0x3c] sm:$0xf]
    %v55 = vld [vmem:[%s0 + $0x40] sm:$0xf]
    %v56 = vld [vmem:[%s0 + $0x44] sm:$0xf]
    %v57 = vld [vmem:[%s1] sm:$0xff]
    %v58 = vld [vmem:[%s1 + $0x8] sm:$0xff]
    %v59 = vld [vmem:[%s1 + $0x10] sm:$0xff]
    %v60 = vld [vmem:[%s1 + $0x18] sm:$0xff]
    %v61 = vld [vmem:[%s1 + $0x20] sm:$0xff]
    %v62 = vld [vmem:[%s1 + $0x28] sm:$0xff]
    %v63 = vld [vmem:[%s1 + $0x30] sm:$0xff]
    %v64 = vld [vmem:[%s1 + $0x38] sm:$0xff]
    %v65 = vld [vmem:[%s1 + $0x40] sm:$0xff]
    %v66 = vld [vmem:[%s1 + $0x48] sm:$0xff]
    %v67 = vld [vmem:[%s1 + $0x50] sm:$0xff]
    %v68 = vld [vmem:[%s1 + $0x58] sm:$0xff]
    %v69 = vld [vmem:[%s1 + $0x60] sm:$0xff]
    %v70 = vld [vmem:[%s1 + $0x68] sm:$0xff]
    %v71 = vld [vmem:[%s1 + $0x70] sm:$0xff]
    %v72 = vld [vmem:[%s1 + $0x78] sm:$0xff]
    %v73 = vld [vmem:[%s1 + $0x80] sm:$0xff]
    %v74 = vld [vmem:[%s1 + $0x88] sm:$0xff]
    %v75 = vld [vmem:[%s1 + $0x90] sm:$0xff]
    %v76 = vld [vmem:[%s1 + $0x98] sm:$0xff]
    %v77 = vld [vmem:[%s1 + $0xa0] sm:$0xff]
    %v78 = vld [vmem:[%s1 + $0xa8] sm:$0xff]
    %v79 = vld [vmem:[%s1 + $0xb0] sm:$0xff]
    %v80 = vld [vmem:[%s1 + $0xb8] sm:$0xff]
    %v81 = vld [vmem:[%s1 + $0xc0] sm:$0xff]
    %v82 = vld [vmem:[%s1 + $0xc8] sm:$0xff]
    %v83 = vld [vmem:[%s1 + $0xd0] sm:$0xff]
    %v84 = vld [vmem:[%s1 + $0xd8] sm:$0xff]
    %v85 = vld [vmem:[%s1 + $0xe0] sm:$0xff]
    %v86 = vld [vmem:[%s1 + $0xe8] sm:$0xff]
    %v87 = vld [vmem:[%s1 + $0xf0] sm:$0xff]
    %v88 = vld [vmem:[%s1 + $0xf8] sm:$0xff]
    %v89 = vld [vmem:[%s1 + $0x100] sm:$0xff]
    %v90 = vld [vmem:[%s1 + $0x108] sm:$0xff]
    %v91 = vld [vmem:[%s1 + $0x110] sm:$0xff]
    %v92 = vld [vmem:[%s1 + $0x118] sm:$0xff]
    %v93 = vld [vmem:[%s1 + $0x120] sm:$0xff]
    %v94 = vld [vmem:[%s1 + $0x128] sm:$0xff]
    %v95 = vld [vmem:[%s1 + $0x130] sm:$0xff]
    %v96 = vld [vmem:[%s1 + $0x138] sm:$0xff]
    %v97 = vld [vmem:[%s1 + $0x140] sm:$0xff]
    %v98 = vld [vmem:[%s1 + $0x148] sm:$0xff]
    %v99 = vld [vmem:[%s1 + $0x150] sm:$0xff]
    %v100 = vld [vmem:[%s1 + $0x158] sm:$0xff]
    %v101 = vld [vmem:[%s1 + $0x160] sm:$0xff]
    %v102 = vld [vmem:[%s1 + $0x168] sm:$0xff]
    %v103 = vld [vmem:[%s1 + $0x170] sm:$0xff]
    %v104 = vld [vmem:[%s1 + $0x178] sm:$0xff]
    %v105 = vld [vmem:[%s1 + $0x180] sm:$0xff]
    %v106 = vld [vmem:[%s1 + $0x188] sm:$0xff]
    %v107 = vld [vmem:[%s1 + $0x190] sm:$0xff]
    %v108 = vld [vmem:[%s1 + $0x198] sm:$0xff]
    %v109 = vld [vmem:[%s1 + $0x1a0] sm:$0xff]
    %v110 = vld [vmem:[%s1 + $0x1a8] sm:$0xff]
    %v111 = vld [vmem:[%s1 + $0x1b0] sm:$0xff]
    %v112 = vld [vmem:[%s1 + $0x1b8] sm:$0xff]
    %v113 = vld [vmem:[%s1 + $0x1c0] sm:$0xff]
    %v114 = vld [vmem:[%s1 + $0x1c8] sm:$0xff]
    %v115 = vld [vmem:[%s1 + $0x1d0] sm:$0xff]
    %v116 = vld [vmem:[%s1 + $0x1d8] sm:$0xff]
    %v117 = vld [vmem:[%s1 + $0x1e0] sm:$0xff]
    %v118 = vld [vmem:[%s1 + $0x1e8] sm:$0xff]
    %v119 = vld [vmem:[%s1 + $0x1f0] sm:$0xff]
    %v120 = vld [vmem:[%s1 + $0x1f8] sm:$0xff]
    %v121 = vld [vmem:[%s1 + $0x200] sm:$0xff]
    %v122 = vld [vmem:[%s1 + $0x208] sm:$0xff]
    %v123 = vld [vmem:[%s1 + $0x210] sm:$0xff]
    %v124 = vld [vmem:[%s1 + $0x218] sm:$0xff]
    %v125 = vld [vmem:[%s1 + $0x220] sm:$0xff]
    %v126 = vld [vmem:[%s1 + $0x228] sm:$0xff]
    %v127 = vld [vmem:[%s1 + $0x230] sm:$0xff]
    %v128 = vld [vmem:[%s1 + $0x238] sm:$0xff]
    %v129 = vld [vmem:[%s1 + $0x240] sm:$0xff]
    %v130 = vld [vmem:[%s1 + $0x248] sm:$0xff]
    %v131 = vld [vmem:[%s1 + $0x250] sm:$0xff]
    %v132 = vld [vmem:[%s1 + $0x258] sm:$0xff]
    %v133 = vld [vmem:[%s1 + $0x260] sm:$0xff]
    %v134 = vld [vmem:[%s1 + $0x268] sm:$0xff]
    %v135 = vld [vmem:[%s1 + $0x270] sm:$0xff]
    %v136 = vld [vmem:[%s1 + $0x278] sm:$0xff]
    %v137 = vld [vmem:[%s1 + $0x280] sm:$0xff]
    %v138 = vld [vmem:[%s1 + $0x288] sm:$0xff]
    %v139 = vld [vmem:[%s1 + $0x290] sm:$0xff]
    %v140 = vld [vmem:[%s1 + $0x298] sm:$0xff]
    %v141 = vld [vmem:[%s1 + $0x2a0] sm:$0xff]
    %v142 = vld [vmem:[%s1 + $0x2a8] sm:$0xff]
    %v143 = vld [vmem:[%s1 + $0x2b0] sm:$0xff]
    %v144 = vld [vmem:[%s1 + $0x2b8] sm:$0xff]
    %v145 = vld [vmem:[%s1 + $0x2c0] sm:$0xff]
    %v146 = vld [vmem:[%s1 + $0x2c8] sm:$0xff]
    %v147 = vld [vmem:[%s1 + $0x2d0] sm:$0xff]
    %v148 = vld [vmem:[%s1 + $0x2d8] sm:$0xff]
    %v149 = vld [vmem:[%s1 + $0x2e0] sm:$0xff]
    %v150 = vld [vmem:[%s1 + $0x2e8] sm:$0xff]
    %v151 = vld [vmem:[%s1 + $0x2f0] sm:$0xff]
    %v152 = vld [vmem:[%s1 + $0x2f8] sm:$0xff]
    %v153 = vld [vmem:[%s1 + $0x300] sm:$0xff]
    %v154 = vld [vmem:[%s1 + $0x308] sm:$0xff]
    %v155 = vld [vmem:[%s1 + $0x310] sm:$0xff]
    %v156 = vld [vmem:[%s1 + $0x318] sm:$0xff]
    %v157 = vld [vmem:[%s1 + $0x320] sm:$0xff]
    %v158 = vld [vmem:[%s1 + $0x328] sm:$0xff]
    %v159 = vld [vmem:[%s1 + $0x330] sm:$0xff]
    %v160 = vld [vmem:[%s1 + $0x338] sm:$0xff]
    %v161 = vld [vmem:[%s1 + $0x340] sm:$0xff]
    %v162 = vld [vmem:[%s1 + $0x348] sm:$0xff]
    %v163 = vld [vmem:[%s1 + $0x350] sm:$0xff]
    %v164 = vld [vmem:[%s1 + $0x358] sm:$0xff]
    %v165 = vld [vmem:[%s1 + $0x360] sm:$0xff]
    %v166 = vld [vmem:[%s1 + $0x368] sm:$0xff]
    %v167 = vld [vmem:[%s1 + $0x370] sm:$0xff]
    %v168 = vld [vmem:[%s1 + $0x378] sm:$0xff]
    %v169 = vld [vmem:[%s1 + $0x380] sm:$0xff]
    %v170 = vld [vmem:[%s1 + $0x388] sm:$0xff]
    %v171 = vld [vmem:[%s1 + $0x390] sm:$0xff]
    %v172 = vld [vmem:[%s1 + $0x398] sm:$0xff]
    %v173 = vld [vmem:[%s1 + $0x3a0] sm:$0xff]
    %v174 = vld [vmem:[%s1 + $0x3a8] sm:$0xff]
    %v175 = vld [vmem:[%s1 + $0x3b0] sm:$0xff]
    %v176 = vld [vmem:[%s1 + $0x3b8] sm:$0xff]
    %v177 = vld [vmem:[%s1 + $0x3c0] sm:$0xff]
    %v178 = vld [vmem:[%s1 + $0x3c8] sm:$0xff]
    %v179 = vld [vmem:[%s1 + $0x3d0] sm:$0xff]
    %v180 = vld [vmem:[%s1 + $0x3d8] sm:$0xff]
    %v181 = vld [vmem:[%s1 + $0x3e0] sm:$0xff]
    %v182 = vld [vmem:[%s1 + $0x3e8] sm:$0xff]
    %v183 = vld [vmem:[%s1 + $0x3f0] sm:$0xff]
    %v184 = vld [vmem:[%s1 + $0x3f8] sm:$0xff]
    %v185 = vld [vmem:[%s1 + $0x400] sm:$0xff]
    %v186 = vld [vmem:[%s1 + $0x408] sm:$0xff]
    %v187 = vld [vmem:[%s1 + $0x410] sm:$0xff]
    %v188 = vld [vmem:[%s1 + $0x418] sm:$0xff]
    %v189 = vld [vmem:[%s1 + $0x420] sm:$0xff]
    %v190 = vld [vmem:[%s1 + $0x428] sm:$0xff]
    %v191 = vld [vmem:[%s1 + $0x430] sm:$0xff]
    %v192 = vld [vmem:[%s1 + $0x438] sm:$0xff]
    %v193 = vld [vmem:[%s1 + $0x440] sm:$0xff]
    %v194 = vld [vmem:[%s1 + $0x448] sm:$0xff]
    %v195 = vld [vmem:[%s1 + $0x450] sm:$0xff]
    %v196 = vld [vmem:[%s1 + $0x458] sm:$0xff]
    %v337 = vunpack.c.l.b16 %v57
    %v338 = vunpack.c.h.b16 %v57
    %v339 = vunpack.c.l.b16 %v58
    %v340 = vunpack.c.h.b16 %v58
    %v341 = vunpack.c.l.b16 %v59
    %v342 = vunpack.c.h.b16 %v59
    %v343 = vunpack.c.l.b16 %v60
    %v344 = vunpack.c.h.b16 %v60
    %v345 = vunpack.c.l.b16 %v61
    %v346 = vunpack.c.h.b16 %v61
    %v347 = vunpack.c.l.b16 %v62
    %v348 = vunpack.c.h.b16 %v62
    %v349 = vunpack.c.l.b16 %v63
    %v350 = vunpack.c.h.b16 %v63
    %v351 = vunpack.c.l.b16 %v64
    %v352 = vunpack.c.h.b16 %v64
    %v353 = vunpack.c.l.b16 %v65
    %v354 = vunpack.c.h.b16 %v65
    %v355 = vunpack.c.l.b16 %v66
    %v356 = vunpack.c.h.b16 %v66
    %v357 = vunpack.c.l.b16 %v67
    %v358 = vunpack.c.h.b16 %v67
    %v359 = vunpack.c.l.b16 %v68
    %v360 = vunpack.c.h.b16 %v68
    %v361 = vunpack.c.l.b16 %v69
    %v362 = vunpack.c.h.b16 %v69
    %v363 = vunpack.c.l.b16 %v70
    %v364 = vunpack.c.h.b16 %v70
    %v365 = vunpack.c.l.b16 %v71
    %v366 = vunpack.c.h.b16 %v71
    %v367 = vunpack.c.l.b16 %v72
    %v368 = vunpack.c.h.b16 %v72
    %v369 = vunpack.c.l.b16 %v73
    %v370 = vunpack.c.h.b16 %v73
    %v371 = vunpack.c.l.b16 %v74
    %v372 = vunpack.c.h.b16 %v74
    %v373 = vunpack.c.l.b16 %v75
    %v374 = vunpack.c.h.b16 %v75
    %v375 = vunpack.c.l.b16 %v76
    %v376 = vunpack.c.h.b16 %v76
    %v377 = vunpack.c.l.b16 %v77
    %v378 = vunpack.c.h.b16 %v77
    %v379 = vunpack.c.l.b16 %v78
    %v380 = vunpack.c.h.b16 %v78
    %v381 = vunpack.c.l.b16 %v79
    %v382 = vunpack.c.h.b16 %v79
    %v383 = vunpack.c.l.b16 %v80
    %v384 = vunpack.c.h.b16 %v80
    %v385 = vunpack.c.l.b16 %v81
    %v386 = vunpack.c.h.b16 %v81
    %v387 = vunpack.c.l.b16 %v82
    %v388 = vunpack.c.h.b16 %v82
    %v389 = vunpack.c.l.b16 %v83
    %v390 = vunpack.c.h.b16 %v83
    %v391 = vunpack.c.l.b16 %v84
    %v392 = vunpack.c.h.b16 %v84
    %v393 = vunpack.c.l.b16 %v85
    %v394 = vunpack.c.h.b16 %v85
    %v395 = vunpack.c.l.b16 %v86
    %v396 = vunpack.c.h.b16 %v86
    %v397 = vunpack.c.l.b16 %v87
    %v398 = vunpack.c.h.b16 %v87
    %v399 = vunpack.c.l.b16 %v88
    %v400 = vunpack.c.h.b16 %v88
    %v401 = vunpack.c.l.b16 %v89
    %v402 = vunpack.c.h.b16 %v89
    %v403 = vunpack.c.l.b16 %v90
    %v404 = vunpack.c.h.b16 %v90
    %v405 = vunpack.c.l.b16 %v91
    %v406 = vunpack.c.h.b16 %v91
    %v407 = vunpack.c.l.b16 %v92
    %v408 = vunpack.c.h.b16 %v92
    %v409 = vunpack.c.l.b16 %v93
    %v410 = vunpack.c.h.b16 %v93
    %v411 = vunpack.c.l.b16 %v94
    %v412 = vunpack.c.h.b16 %v94
    %v413 = vunpack.c.l.b16 %v95
    %v414 = vunpack.c.h.b16 %v95
    %v415 = vunpack.c.l.b16 %v96
    %v416 = vunpack.c.h.b16 %v96
    %v417 = vunpack.c.l.b16 %v97
    %v418 = vunpack.c.h.b16 %v97
    %v419 = vunpack.c.l.b16 %v98
    %v420 = vunpack.c.h.b16 %v98
    %v421 = vunpack.c.l.b16 %v99
    %v422 = vunpack.c.h.b16 %v99
    %v423 = vunpack.c.l.b16 %v100
    %v424 = vunpack.c.h.b16 %v100
    %v425 = vunpack.c.l.b16 %v101
    %v426 = vunpack.c.h.b16 %v101
    %v427 = vunpack.c.l.b16 %v102
    %v428 = vunpack.c.h.b16 %v102
    %v429 = vunpack.c.l.b16 %v103
    %v430 = vunpack.c.h.b16 %v103
    %v431 = vunpack.c.l.b16 %v104
    %v432 = vunpack.c.h.b16 %v104
    %v433 = vunpack.c.l.b16 %v105
    %v434 = vunpack.c.h.b16 %v105
    %v435 = vunpack.c.l.b16 %v106
    %v436 = vunpack.c.h.b16 %v106
    %v437 = vunpack.c.l.b16 %v107
    %v438 = vunpack.c.h.b16 %v107
    %v439 = vunpack.c.l.b16 %v108
    %v440 = vunpack.c.h.b16 %v108
    %v441 = vunpack.c.l.b16 %v109
    %v442 = vunpack.c.h.b16 %v109
    %v443 = vunpack.c.l.b16 %v110
    %v444 = vunpack.c.h.b16 %v110
    %v445 = vunpack.c.l.b16 %v111
    %v446 = vunpack.c.h.b16 %v111
    %v447 = vunpack.c.l.b16 %v112
    %v448 = vunpack.c.h.b16 %v112
    %v449 = vunpack.c.l.b16 %v113
    %v450 = vunpack.c.h.b16 %v113
    %v451 = vunpack.c.l.b16 %v114
    %v452 = vunpack.c.h.b16 %v114
    %v453 = vunpack.c.l.b16 %v115
    %v454 = vunpack.c.h.b16 %v115
    %v455 = vunpack.c.l.b16 %v116
    %v456 = vunpack.c.h.b16 %v116
    %v457 = vunpack.c.l.b16 %v117
    %v458 = vunpack.c.h.b16 %v117
    %v459 = vunpack.c.l.b16 %v118
    %v460 = vunpack.c.h.b16 %v118
    %v461 = vunpack.c.l.b16 %v119
    %v462 = vunpack.c.h.b16 %v119
    %v463 = vunpack.c.l.b16 %v120
    %v464 = vunpack.c.h.b16 %v120
    %v465 = vunpack.c.l.b16 %v121
    %v466 = vunpack.c.h.b16 %v121
    %v467 = vunpack.c.l.b16 %v122
    %v468 = vunpack.c.h.b16 %v122
    %v469 = vunpack.c.l.b16 %v123
    %v470 = vunpack.c.h.b16 %v123
    %v471 = vunpack.c.l.b16 %v124
    %v472 = vunpack.c.h.b16 %v124
    %v473 = vunpack.c.l.b16 %v125
    %v474 = vunpack.c.h.b16 %v125
    %v475 = vunpack.c.l.b16 %v126
    %v476 = vunpack.c.h.b16 %v126
    %v477 = vunpack.c.l.b16 %v127
    %v478 = vunpack.c.h.b16 %v127
    %v479 = vunpack.c.l.b16 %v128
    %v480 = vunpack.c.h.b16 %v128
    %v481 = vunpack.c.l.b16 %v129
    %v482 = vunpack.c.h.b16 %v129
    %v483 = vunpack.c.l.b16 %v130
    %v484 = vunpack.c.h.b16 %v130
    %v485 = vunpack.c.l.b16 %v131
    %v486 = vunpack.c.h.b16 %v131
    %v487 = vunpack.c.l.b16 %v132
    %v488 = vunpack.c.h.b16 %v132
    %v489 = vunpack.c.l.b16 %v133
    %v490 = vunpack.c.h.b16 %v133
    %v491 = vunpack.c.l.b16 %v134
    %v492 = vunpack.c.h.b16 %v134
    %v493 = vunpack.c.l.b16 %v135
    %v494 = vunpack.c.h.b16 %v135
    %v495 = vunpack.c.l.b16 %v136
    %v496 = vunpack.c.h.b16 %v136
    %v497 = vunpack.c.l.b16 %v137
    %v498 = vunpack.c.h.b16 %v137
    %v499 = vunpack.c.l.b16 %v138
    %v500 = vunpack.c.h.b16 %v138
    %v501 = vunpack.c.l.b16 %v139
    %v502 = vunpack.c.h.b16 %v139
    %v503 = vunpack.c.l.b16 %v140
    %v504 = vunpack.c.h.b16 %v140
    %v505 = vunpack.c.l.b16 %v141
    %v506 = vunpack.c.h.b16 %v141
    %v507 = vunpack.c.l.b16 %v142
    %v508 = vunpack.c.h.b16 %v142
    %v509 = vunpack.c.l.b16 %v143
    %v510 = vunpack.c.h.b16 %v143
    %v511 = vunpack.c.l.b16 %v144
    %v512 = vunpack.c.h.b16 %v144
    %v513 = vunpack.c.l.b16 %v145
    %v514 = vunpack.c.h.b16 %v145
    %v515 = vunpack.c.l.b16 %v146
    %v516 = vunpack.c.h.b16 %v146
    %v517 = vunpack.c.l.b16 %v147
    %v518 = vunpack.c.h.b16 %v147
    %v519 = vunpack.c.l.b16 %v148
    %v520 = vunpack.c.h.b16 %v148
    %v521 = vunpack.c.l.b16 %v149
    %v522 = vunpack.c.h.b16 %v149
    %v523 = vunpack.c.l.b16 %v150
    %v524 = vunpack.c.h.b16 %v150
    %v525 = vunpack.c.l.b16 %v151
    %v526 = vunpack.c.h.b16 %v151
    %v527 = vunpack.c.l.b16 %v152
    %v528 = vunpack.c.h.b16 %v152
    %v529 = vunpack.c.l.b16 %v153
    %v530 = vunpack.c.h.b16 %v153
    %v531 = vunpack.c.l.b16 %v154
    %v532 = vunpack.c.h.b16 %v154
    %v533 = vunpack.c.l.b16 %v155
    %v534 = vunpack.c.h.b16 %v155
    %v535 = vunpack.c.l.b16 %v156
    %v536 = vunpack.c.h.b16 %v156
    %v537 = vunpack.c.l.b16 %v157
    %v538 = vunpack.c.h.b16 %v157
    %v539 = vunpack.c.l.b16 %v158
    %v540 = vunpack.c.h.b16 %v158
    %v541 = vunpack.c.l.b16 %v159
    %v542 = vunpack.c.h.b16 %v159
    %v543 = vunpack.c.l.b16 %v160
    %v544 = vunpack.c.h.b16 %v160
    %v545 = vunpack.c.l.b16 %v161
    %v546 = vunpack.c.h.b16 %v161
    %v547 = vunpack.c.l.b16 %v162
    %v548 = vunpack.c.h.b16 %v162
    %v549 = vunpack.c.l.b16 %v163
    %v550 = vunpack.c.h.b16 %v163
    %v551 = vunpack.c.l.b16 %v164
    %v552 = vunpack.c.h.b16 %v164
    %v553 = vunpack.c.l.b16 %v165
    %v554 = vunpack.c.h.b16 %v165
    %v555 = vunpack.c.l.b16 %v166
    %v556 = vunpack.c.h.b16 %v166
    %v557 = vunpack.c.l.b16 %v167
    %v558 = vunpack.c.h.b16 %v167
    %v559 = vunpack.c.l.b16 %v168
    %v560 = vunpack.c.h.b16 %v168
    %v561 = vunpack.c.l.b16 %v169
    %v562 = vunpack.c.h.b16 %v169
    %v563 = vunpack.c.l.b16 %v170
    %v564 = vunpack.c.h.b16 %v170
    %v565 = vunpack.c.l.b16 %v171
    %v566 = vunpack.c.h.b16 %v171
    %v567 = vunpack.c.l.b16 %v172
    %v568 = vunpack.c.h.b16 %v172
    %v569 = vunpack.c.l.b16 %v173
    %v570 = vunpack.c.h.b16 %v173
    %v571 = vunpack.c.l.b16 %v174
    %v572 = vunpack.c.h.b16 %v174
    %v573 = vunpack.c.l.b16 %v175
    %v574 = vunpack.c.h.b16 %v175
    %v575 = vunpack.c.l.b16 %v176
    %v576 = vunpack.c.h.b16 %v176
    %v577 = vunpack.c.l.b16 %v177
    %v578 = vunpack.c.h.b16 %v177
    %v579 = vunpack.c.l.b16 %v178
    %v580 = vunpack.c.h.b16 %v178
    %v581 = vunpack.c.l.b16 %v179
    %v582 = vunpack.c.h.b16 %v179
    %v583 = vunpack.c.l.b16 %v180
    %v584 = vunpack.c.h.b16 %v180
    %v585 = vunpack.c.l.b16 %v181
    %v586 = vunpack.c.h.b16 %v181
    %v587 = vunpack.c.l.b16 %v182
    %v588 = vunpack.c.h.b16 %v182
    %v589 = vunpack.c.l.b16 %v183
    %v590 = vunpack.c.h.b16 %v183
    %v591 = vunpack.c.l.b16 %v184
    %v592 = vunpack.c.h.b16 %v184
    %v593 = vunpack.c.l.b16 %v185
    %v594 = vunpack.c.h.b16 %v185
    %v595 = vunpack.c.l.b16 %v186
    %v596 = vunpack.c.h.b16 %v186
    %v597 = vunpack.c.l.b16 %v187
    %v598 = vunpack.c.h.b16 %v187
    %v599 = vunpack.c.l.b16 %v188
    %v600 = vunpack.c.h.b16 %v188
    %v601 = vunpack.c.l.b16 %v189
    %v602 = vunpack.c.h.b16 %v189
    %v603 = vunpack.c.l.b16 %v190
    %v604 = vunpack.c.h.b16 %v190
    %v605 = vunpack.c.l.b16 %v191
    %v606 = vunpack.c.h.b16 %v191
    %v607 = vunpack.c.l.b16 %v192
    %v608 = vunpack.c.h.b16 %v192
    %v609 = vunpack.c.l.b16 %v193
    %v610 = vunpack.c.h.b16 %v193
    %v611 = vunpack.c.l.b16 %v194
    %v612 = vunpack.c.h.b16 %v194
    %v613 = vunpack.c.l.b16 %v195
    %v614 = vunpack.c.h.b16 %v195
    %v615 = vunpack.c.l.b16 %v196
    %v616 = vunpack.c.h.b16 %v196
    %v617 = vpack.c.b16 %v339, %v337
    %v618 = vpack.c.b16 %v340, %v338
    %v619 = vpack.c.b16 %v343, %v341
    %v620 = vpack.c.b16 %v344, %v342
    %v621 = vpack.c.b16 %v347, %v345
    %v622 = vpack.c.b16 %v348, %v346
    %v623 = vpack.c.b16 %v351, %v349
    %v624 = vpack.c.b16 %v352, %v350
    %v625 = vpack.c.b16 %v355, %v353
    %v626 = vpack.c.b16 %v356, %v354
    %v627 = vpack.c.b16 %v359, %v357
    %v628 = vpack.c.b16 %v360, %v358
    %v629 = vpack.c.b16 %v363, %v361
    %v630 = vpack.c.b16 %v364, %v362
    %v631 = vpack.c.b16 %v367, %v365
    %v632 = vpack.c.b16 %v368, %v366
    %v633 = vpack.c.b16 %v371, %v369
    %v634 = vpack.c.b16 %v372, %v370
    %v635 = vpack.c.b16 %v375, %v373
    %v636 = vpack.c.b16 %v376, %v374
    %v637 = vpack.c.b16 %v379, %v377
    %v638 = vpack.c.b16 %v380, %v378
    %v639 = vpack.c.b16 %v383, %v381
    %v640 = vpack.c.b16 %v384, %v382
    %v641 = vpack.c.b16 %v387, %v385
    %v642 = vpack.c.b16 %v388, %v386
    %v643 = vpack.c.b16 %v391, %v389
    %v644 = vpack.c.b16 %v392, %v390
    %v645 = vpack.c.b16 %v395, %v393
    %v646 = vpack.c.b16 %v396, %v394
    %v647 = vpack.c.b16 %v399, %v397
    %v648 = vpack.c.b16 %v400, %v398
    %v649 = vpack.c.b16 %v403, %v401
    %v650 = vpack.c.b16 %v404, %v402
    %v651 = vpack.c.b16 %v407, %v405
    %v652 = vpack.c.b16 %v408, %v406
    %v653 = vpack.c.b16 %v411, %v409
    %v654 = vpack.c.b16 %v412, %v410
    %v655 = vpack.c.b16 %v415, %v413
    %v656 = vpack.c.b16 %v416, %v414
    %v657 = vpack.c.b16 %v419, %v417
    %v658 = vpack.c.b16 %v420, %v418
    %v659 = vpack.c.b16 %v423, %v421
    %v660 = vpack.c.b16 %v424, %v422
    %v661 = vpack.c.b16 %v427, %v425
    %v662 = vpack.c.b16 %v428, %v426
    %v663 = vpack.c.b16 %v431, %v429
    %v664 = vpack.c.b16 %v432, %v430
    %v665 = vpack.c.b16 %v435, %v433
    %v666 = vpack.c.b16 %v436, %v434
    %v667 = vpack.c.b16 %v439, %v437
    %v668 = vpack.c.b16 %v440, %v438
    %v669 = vpack.c.b16 %v443, %v441
    %v670 = vpack.c.b16 %v444, %v442
    %v671 = vpack.c.b16 %v447, %v445
    %v672 = vpack.c.b16 %v448, %v446
    %v673 = vpack.c.b16 %v451, %v449
    %v674 = vpack.c.b16 %v452, %v450
    %v675 = vpack.c.b16 %v455, %v453
    %v676 = vpack.c.b16 %v456, %v454
    %v677 = vpack.c.b16 %v459, %v457
    %v678 = vpack.c.b16 %v460, %v458
    %v679 = vpack.c.b16 %v463, %v461
    %v680 = vpack.c.b16 %v464, %v462
    %v681 = vpack.c.b16 %v467, %v465
    %v682 = vpack.c.b16 %v468, %v466
    %v683 = vpack.c.b16 %v471, %v469
    %v684 = vpack.c.b16 %v472, %v470
    %v685 = vpack.c.b16 %v475, %v473
    %v686 = vpack.c.b16 %v476, %v474
    %v687 = vpack.c.b16 %v479, %v477
    %v688 = vpack.c.b16 %v480, %v478
    %v689 = vpack.c.b16 %v483, %v481
    %v690 = vpack.c.b16 %v484, %v482
    %v691 = vpack.c.b16 %v487, %v485
    %v692 = vpack.c.b16 %v488, %v486
    %v693 = vpack.c.b16 %v491, %v489
    %v694 = vpack.c.b16 %v492, %v490
    %v695 = vpack.c.b16 %v495, %v493
    %v696 = vpack.c.b16 %v496, %v494
    %v697 = vpack.c.b16 %v499, %v497
    %v698 = vpack.c.b16 %v500, %v498
    %v699 = vpack.c.b16 %v503, %v501
    %v700 = vpack.c.b16 %v504, %v502
    %v701 = vpack.c.b16 %v507, %v505
    %v702 = vpack.c.b16 %v508, %v506
    %v703 = vpack.c.b16 %v511, %v509
    %v704 = vpack.c.b16 %v512, %v510
    %v705 = vpack.c.b16 %v515, %v513
    %v706 = vpack.c.b16 %v516, %v514
    %v707 = vpack.c.b16 %v519, %v517
    %v708 = vpack.c.b16 %v520, %v518
    %v709 = vpack.c.b16 %v523, %v521
    %v710 = vpack.c.b16 %v524, %v522
    %v711 = vpack.c.b16 %v527, %v525
    %v712 = vpack.c.b16 %v528, %v526
    %v713 = vpack.c.b16 %v531, %v529
    %v714 = vpack.c.b16 %v532, %v530
    %v715 = vpack.c.b16 %v535, %v533
    %v716 = vpack.c.b16 %v536, %v534
    %v717 = vpack.c.b16 %v539, %v537
    %v718 = vpack.c.b16 %v540, %v538
    %v719 = vpack.c.b16 %v543, %v541
    %v720 = vpack.c.b16 %v544, %v542
    %v721 = vpack.c.b16 %v547, %v545
    %v722 = vpack.c.b16 %v548, %v546
    %v723 = vpack.c.b16 %v551, %v549
    %v724 = vpack.c.b16 %v552, %v550
    %v725 = vpack.c.b16 %v555, %v553
    %v726 = vpack.c.b16 %v556, %v554
    %v727 = vpack.c.b16 %v559, %v557
    %v728 = vpack.c.b16 %v560, %v558
    %v729 = vpack.c.b16 %v563, %v561
    %v730 = vpack.c.b16 %v564, %v562
    %v731 = vpack.c.b16 %v567, %v565
    %v732 = vpack.c.b16 %v568, %v566
    %v733 = vpack.c.b16 %v571, %v569
    %v734 = vpack.c.b16 %v572, %v570
    %v735 = vpack.c.b16 %v575, %v573
    %v736 = vpack.c.b16 %v576, %v574
    %v737 = vpack.c.b16 %v579, %v577
    %v738 = vpack.c.b16 %v580, %v578
    %v739 = vpack.c.b16 %v583, %v581
    %v740 = vpack.c.b16 %v584, %v582
    %v741 = vpack.c.b16 %v587, %v585
    %v742 = vpack.c.b16 %v588, %v586
    %v743 = vpack.c.b16 %v591, %v589
    %v744 = vpack.c.b16 %v592, %v590
    %v745 = vpack.c.b16 %v595, %v593
    %v746 = vpack.c.b16 %v596, %v594
    %v747 = vpack.c.b16 %v599, %v597
    %v748 = vpack.c.b16 %v600, %v598
    %v749 = vpack.c.b16 %v603, %v601
    %v750 = vpack.c.b16 %v604, %v602
    %v751 = vpack.c.b16 %v607, %v605
    %v752 = vpack.c.b16 %v608, %v606
    %v753 = vpack.c.b16 %v611, %v609
    %v754 = vpack.c.b16 %v612, %v610
    %v755 = vpack.c.b16 %v615, %v613
    %v756 = vpack.c.b16 %v616, %v614
    %v845 = vunpack.c.l.b16 %v39
    %v846 = vunpack.c.l.b16 %v40
    %v847 = vunpack.c.l.b16 %v41
    %v848 = vunpack.c.l.b16 %v42
    %v849 = vunpack.c.l.b16 %v43
    %v850 = vunpack.c.l.b16 %v44
    %v851 = vunpack.c.l.b16 %v45
    %v852 = vunpack.c.l.b16 %v46
    %v853 = vunpack.c.l.b16 %v47
    %v854 = vunpack.c.l.b16 %v48
    %v855 = vunpack.c.l.b16 %v49
    %v856 = vunpack.c.l.b16 %v50
    %v857 = vunpack.c.l.b16 %v51
    %v858 = vunpack.c.l.b16 %v52
    %v859 = vunpack.c.l.b16 %v53
    %v860 = vunpack.c.l.b16 %v54
    %v861 = vunpack.c.l.b16 %v55
    %v862 = vunpack.c.l.b16 %v56
    %v863 = vpack.c.b16 %v846, %v845
    %v864 = vpack.c.b16 %v848, %v847
    %v865 = vpack.c.b16 %v850, %v849
    %v866 = vpack.c.b16 %v852, %v851
    %v867 = vpack.c.b16 %v854, %v853
    %v868 = vpack.c.b16 %v856, %v855
    %v869 = vpack.c.b16 %v858, %v857
    %v870 = vpack.c.b16 %v860, %v859
    %v871 = vpack.c.b16 %v862, %v861
    %vm881 = vcmask 130048
    %v883 = vsel %vm881, %v618, 0
    %v886 = vsel %vm881, %v620, 0
    %v889 = vsel %vm881, %v622, 0
    %v892 = vsel %vm881, %v624, 0
    %v895 = vsel %vm881, %v626, 0
    %v898 = vsel %vm881, %v628, 0
    %v901 = vsel %vm881, %v630, 0
    %v904 = vsel %vm881, %v632, 0
    %v907 = vsel %vm881, %v634, 0
    %v910 = vsel %vm881, %v636, 0
    %v913 = vsel %vm881, %v638, 0
    %v916 = vsel %vm881, %v640, 0
    %v919 = vsel %vm881, %v642, 0
    %v922 = vsel %vm881, %v644, 0
    %v925 = vsel %vm881, %v646, 0
    %v928 = vsel %vm881, %v648, 0
    %v931 = vsel %vm881, %v650, 0
    %v934 = vsel %vm881, %v652, 0
    %v937 = vsel %vm881, %v654, 0
    %v940 = vsel %vm881, %v656, 0
    %v943 = vsel %vm881, %v658, 0
    %v946 = vsel %vm881, %v660, 0
    %v949 = vsel %vm881, %v662, 0
    %v952 = vsel %vm881, %v664, 0
    %v955 = vsel %vm881, %v666, 0
    %v958 = vsel %vm881, %v668, 0
    %v961 = vsel %vm881, %v670, 0
    %v964 = vsel %vm881, %v672, 0
    %v967 = vsel %vm881, %v674, 0
    %v970 = vsel %vm881, %v676, 0
    %v973 = vsel %vm881, %v678, 0
    %v976 = vsel %vm881, %v680, 0
    %v979 = vsel %vm881, %v682, 0
    %v982 = vsel %vm881, %v684, 0
    %v985 = vsel %vm881, %v686, 0
    %v988 = vsel %vm881, %v688, 0
    %v991 = vsel %vm881, %v690, 0
    %v994 = vsel %vm881, %v692, 0
    %v997 = vsel %vm881, %v694, 0
    %v1000 = vsel %vm881, %v696, 0
    %v1003 = vsel %vm881, %v698, 0
    %v1006 = vsel %vm881, %v700, 0
    %v1009 = vsel %vm881, %v702, 0
    %v1012 = vsel %vm881, %v704, 0
    %v1015 = vsel %vm881, %v706, 0
    %v1018 = vsel %vm881, %v708, 0
    %v1021 = vsel %vm881, %v710, 0
    %v1024 = vsel %vm881, %v712, 0
    %v1027 = vsel %vm881, %v714, 0
    %v1030 = vsel %vm881, %v716, 0
    %v1033 = vsel %vm881, %v718, 0
    %v1036 = vsel %vm881, %v720, 0
    %v1039 = vsel %vm881, %v722, 0
    %v1042 = vsel %vm881, %v724, 0
    %v1045 = vsel %vm881, %v726, 0
    %v1048 = vsel %vm881, %v728, 0
    %v1051 = vsel %vm881, %v730, 0
    %v1054 = vsel %vm881, %v732, 0
    %v1057 = vsel %vm881, %v734, 0
    %v1060 = vsel %vm881, %v736, 0
    %v1063 = vsel %vm881, %v738, 0
    %v1066 = vsel %vm881, %v740, 0
    %v1069 = vsel %vm881, %v742, 0
    %v1072 = vsel %vm881, %v744, 0
    %v1075 = vsel %vm881, %v746, 0
    %v1078 = vsel %vm881, %v748, 0
    %v1081 = vsel %vm881, %v750, 0
    %v1084 = vsel %vm881, %v752, 0
    %v1087 = vsel %vm881, %v754, 0
    %v1090 = vsel %vm881, %v756, 0
    %1092 = vmatprep.subr.bf16.mxu0 0
    %1093 = vmatpush1.bf16.msra.mxu0 %v863
    %1094 = vmatprep.subr.bf16.mxu0 0
    %1095 = vmatpush1.bf16.msra.mxu0 %v864
    %1096 = vmatprep.subr.bf16.mxu0 0
    %1097 = vmatpush1.bf16.msra.mxu0 %v865
    %1098 = vmatprep.subr.bf16.mxu0 0
    %1099 = vmatpush1.bf16.msra.mxu0 %v866
    %1100 = vmatprep.subr.bf16.mxu0 0
    %1101 = vmatpush1.bf16.msra.mxu0 %v867
    %1102 = vmatprep.subr.bf16.mxu0 0
    %1103 = vmatpush1.bf16.msra.mxu0 %v868
    %1104 = vmatprep.subr.bf16.mxu0 0
    %1105 = vmatpush1.bf16.msra.mxu0 %v869
    %1106 = vmatprep.subr.bf16.mxu0 0
    %1107 = vmatpush1.bf16.msra.mxu0 %v870
    %1108 = vmatprep.subr.bf16.mxu0 0
    %1109 = vmatpush1.bf16.msra.mxu0 %v871
    %1110 = vmatprep.subr.bf16.mxu0 0
    %1111 = vmatpush1.bf16.msra.mxu0 0
    %1112 = vmatprep.subr.bf16.mxu0 0
    %1113 = vmatpush1.bf16.msra.mxu0 0
    %1114 = vmatprep.subr.bf16.mxu0 0
    %1115 = vmatpush1.bf16.msra.mxu0 0
    %1116 = vmatprep.subr.bf16.mxu0 0
    %1117 = vmatpush1.bf16.msra.mxu0 0
    %1118 = vmatprep.subr.bf16.mxu0 0
    %1119 = vmatpush1.bf16.msra.mxu0 0
    %1120 = vmatprep.subr.bf16.mxu0 0
    %1121 = vmatpush1.bf16.msra.mxu0 0
    %1122 = vmatprep.subr.bf16.mxu0 0
    %1123 = vmatpush1.bf16.msra.mxu0 0
    %1124 = vmatprep.mubr.bf16.mxu0 %v883
    %1125 = vmatmul.mubr.bf16.gmra.mrb[0].mxu0 %v617
    %v1126 = vpop.f32.mrb[0].mxu0
    %v1127 = vadd.f32 0.0, %v1126
    %v1128 = vpop.f32.mrb[0].mxu0
    %v1129 = vpop.f32.mrb[0].mxu0
    %v1130 = vadd.f32 0.0, %v1129
    %v1131 = vpop.f32.mrb[0].mxu0
    %1132 = vmatprep.mubr.bf16.mxu0 %v886
    %1133 = vmatmul.mubr.bf16.gmra.mrb[0].mxu0 %v619
    %v1134 = vpop.f32.mrb[0].mxu0
    %v1135 = vadd.f32 0.0, %v1134
    %v1136 = vpop.f32.mrb[0].mxu0
    %v1137 = vpop.f32.mrb[0].mxu0
    %v1138 = vadd.f32 0.0, %v1137
    %v1139 = vpop.f32.mrb[0].mxu0
    %1140 = vmatprep.mubr.bf16.mxu0 %v889
    %1141 = vmatmul.mubr.bf16.gmra.mrb[0].mxu0 %v621
    %v1142 = vpop.f32.mrb[0].mxu0
    %v1143 = vadd.f32 0.0, %v1142
    %v1144 = vpop.f32.mrb[0].mxu0
    %v1145 = vpop.f32.mrb[0].mxu0
    %v1146 = vadd.f32 0.0, %v1145
    %v1147 = vpop.f32.mrb[0].mxu0
    %1148 = vmatprep.mubr.bf16.mxu0 %v892
    %1149 = vmatmul.mubr.bf16.gmra.mrb[0].mxu0 %v623
    %v1150 = vpop.f32.mrb[0].mxu0
    %v1151 = vadd.f32 0.0, %v1150
    %v1152 = vpop.f32.mrb[0].mxu0
    %v1153 = vpop.f32.mrb[0].mxu0
    %v1154 = vadd.f32 0.0, %v1153
    %v1155 = vpop.f32.mrb[0].mxu0
    %1156 = vmatprep.mubr.bf16.mxu0 %v895
    %1157 = vmatmul.mubr.bf16.gmra.mrb[0].mxu0 %v625
    %v1158 = vpop.f32.mrb[0].mxu0
    %v1159 = vadd.f32 0.0, %v1158
    %v1160 = vpop.f32.mrb[0].mxu0
    %v1161 = vpop.f32.mrb[0].mxu0
    %v1162 = vadd.f32 0.0, %v1161
    %v1163 = vpop.f32.mrb[0].mxu0
    %1164 = vmatprep.mubr.bf16.mxu0 %v898
    %1165 = vmatmul.mubr.bf16.gmra.mrb[0].mxu0 %v627
    %v1166 = vpop.f32.mrb[0].mxu0
    %v1167 = vadd.f32 0.0, %v1166
    %v1168 = vpop.f32.mrb[0].mxu0
    %v1169 = vpop.f32.mrb[0].mxu0
    %v1170 = vadd.f32 0.0, %v1169
    %v1171 = vpop.f32.mrb[0].mxu0
    %1172 = vmatprep.mubr.bf16.mxu0 %v901
    %1173 = vmatmul.mubr.bf16.gmra.mrb[0].mxu0 %v629
    %v1174 = vpop.f32.mrb[0].mxu0
    %v1175 = vadd.f32 0.0, %v1174
    %v1176 = vpop.f32.mrb[0].mxu0
    %v1177 = vpop.f32.mrb[0].mxu0
    %v1178 = vadd.f32 0.0, %v1177
    %v1179 = vpop.f32.mrb[0].mxu0
    %1180 = vmatprep.mubr.bf16.mxu0 %v904
    %1181 = vmatmul.mubr.bf16.gmra.mrb[0].mxu0 %v631
    %v1182 = vpop.f32.mrb[0].mxu0
    %v1183 = vadd.f32 0.0, %v1182
    %v1184 = vpop.f32.mrb[0].mxu0
    %v1185 = vpop.f32.mrb[0].mxu0
    %v1186 = vadd.f32 0.0, %v1185
    %v1187 = vpop.f32.mrb[0].mxu0
    %1188 = vmatprep.mubr.bf16.mxu0 %v907
    %1189 = vmatmul.mubr.bf16.gmra.mrb[0].mxu0 %v633
    %v1190 = vpop.f32.mrb[0].mxu0
    %v1191 = vadd.f32 0.0, %v1190
    %v1192 = vpop.f32.mrb[0].mxu0
    %v1193 = vpop.f32.mrb[0].mxu0
    %v1194 = vadd.f32 0.0, %v1193
    %v1195 = vpop.f32.mrb[0].mxu0
    %1196 = vmatprep.mubr.bf16.mxu0 %v910
    %1197 = vmatmul.mubr.bf16.gmra.mrb[0].mxu0 %v635
    %v1198 = vpop.f32.mrb[0].mxu0
    %v1199 = vadd.f32 0.0, %v1198
    %v1200 = vpop.f32.mrb[0].mxu0
    %v1201 = vpop.f32.mrb[0].mxu0
    %v1202 = vadd.f32 0.0, %v1201
    %v1203 = vpop.f32.mrb[0].mxu0
    %1204 = vmatprep.mubr.bf16.mxu0 %v913
    %1205 = vmatmul.mubr.bf16.gmra.mrb[0].mxu0 %v637
    %v1206 = vpop.f32.mrb[0].mxu0
    %v1207 = vadd.f32 0.0, %v1206
    %v1208 = vpop.f32.mrb[0].mxu0
    %v1209 = vpop.f32.mrb[0].mxu0
    %v1210 = vadd.f32 0.0, %v1209
    %v1211 = vpop.f32.mrb[0].mxu0
    %1212 = vmatprep.mubr.bf16.mxu0 %v916
    %1213 = vmatmul.mubr.bf16.gmra.mrb[0].mxu0 %v639
    %v1214 = vpop.f32.mrb[0].mxu0
    %v1215 = vadd.f32 0.0, %v1214
    %v1216 = vpop.f32.mrb[0].mxu0
    %v1217 = vpop.f32.mrb[0].mxu0
    %v1218 = vadd.f32 0.0, %v1217
    %v1219 = vpop.f32.mrb[0].mxu0
    %1220 = vmatprep.mubr.bf16.mxu0 %v919
    %1221 = vmatmul.mubr.bf16.gmra.mrb[0].mxu0 %v641
    %v1222 = vpop.f32.mrb[0].mxu0
    %v1223 = vadd.f32 0.0, %v1222
    %v1224 = vpop.f32.mrb[0].mxu0
    %v1225 = vpop.f32.mrb[0].mxu0
    %v1226 = vadd.f32 0.0, %v1225
    %v1227 = vpop.f32.mrb[0].mxu0
    %1228 = vmatprep.mubr.bf16.mxu0 %v922
    %1229 = vmatmul.mubr.bf16.gmra.mrb[0].mxu0 %v643
    %v1230 = vpop.f32.mrb[0].mxu0
    %v1231 = vadd.f32 0.0, %v1230
    %v1232 = vpop.f32.mrb[0].mxu0
    %v1233 = vpop.f32.mrb[0].mxu0
    %v1234 = vadd.f32 0.0, %v1233
    %v1235 = vpop.f32.mrb[0].mxu0
    %1236 = vmatprep.mubr.bf16.mxu0 %v925
    %1237 = vmatmul.mubr.bf16.gmra.mrb[0].mxu0 %v645
    %v1238 = vpop.f32.mrb[0].mxu0
    %v1239 = vadd.f32 0.0, %v1238
    %v1240 = vpop.f32.mrb[0].mxu0
    %v1241 = vpop.f32.mrb[0].mxu0
    %v1242 = vadd.f32 0.0, %v1241
    %v1243 = vpop.f32.mrb[0].mxu0
    %1244 = vmatprep.mubr.bf16.mxu0 %v928
    %1245 = vmatmul.mubr.bf16.gmra.mrb[0].mxu0 %v647
    %v1246 = vpop.f32.mrb[0].mxu0
    %v1247 = vadd.f32 0.0, %v1246
    %v1248 = vpop.f32.mrb[0].mxu0
    %v1249 = vpop.f32.mrb[0].mxu0
    %v1250 = vadd.f32 0.0, %v1249
    %v1251 = vpop.f32.mrb[0].mxu0
    %1252 = vmatprep.mubr.bf16.mxu0 %v931
    %1253 = vmatmul.mubr.bf16.gmra.mrb[0].mxu0 %v649
    %v1254 = vpop.f32.mrb[0].mxu0
    %v1255 = vadd.f32 0.0, %v1254
    %v1256 = vpop.f32.mrb[0].mxu0
    %v1257 = vpop.f32.mrb[0].mxu0
    %v1258 = vadd.f32 0.0, %v1257
    %v1259 = vpop.f32.mrb[0].mxu0
    %1260 = vmatprep.mubr.bf16.mxu0 %v934
    %1261 = vmatmul.mubr.bf16.gmra.mrb[0].mxu0 %v651
    %v1262 = vpop.f32.mrb[0].mxu0
    %v1263 = vadd.f32 0.0, %v1262
    %v1264 = vpop.f32.mrb[0].mxu0
    %v1265 = vpop.f32.mrb[0].mxu0
    %v1266 = vadd.f32 0.0, %v1265
    %v1267 = vpop.f32.mrb[0].mxu0
    %1268 = vmatprep.mubr.bf16.mxu0 %v937
    %1269 = vmatmul.mubr.bf16.gmra.mrb[0].mxu0 %v653
    %v1270 = vpop.f32.mrb[0].mxu0
    %v1271 = vadd.f32 0.0, %v1270
    %v1272 = vpop.f32.mrb[0].mxu0
    %v1273 = vpop.f32.mrb[0].mxu0
    %v1274 = vadd.f32 0.0, %v1273
    %v1275 = vpop.f32.mrb[0].mxu0
    %1276 = vmatprep.mubr.bf16.mxu0 %v940
    %1277 = vmatmul.mubr.bf16.gmra.mrb[0].mxu0 %v655
    %v1278 = vpop.f32.mrb[0].mxu0
    %v1279 = vadd.f32 0.0, %v1278
    %v1280 = vpop.f32.mrb[0].mxu0
    %v1281 = vpop.f32.mrb[0].mxu0
    %v1282 = vadd.f32 0.0, %v1281
    %v1283 = vpop.f32.mrb[0].mxu0
    %1284 = vmatprep.mubr.bf16.mxu0 %v943
    %1285 = vmatmul.mubr.bf16.gmra.mrb[0].mxu0 %v657
    %v1286 = vpop.f32.mrb[0].mxu0
    %v1287 = vadd.f32 0.0, %v1286
    %v1288 = vpop.f32.mrb[0].mxu0
    %v1289 = vpop.f32.mrb[0].mxu0
    %v1290 = vadd.f32 0.0, %v1289
    %v1291 = vpop.f32.mrb[0].mxu0
    %1292 = vmatprep.mubr.bf16.mxu0 %v946
    %1293 = vmatmul.mubr.bf16.gmra.mrb[0].mxu0 %v659
    %v1294 = vpop.f32.mrb[0].mxu0
    %v1295 = vadd.f32 0.0, %v1294
    %v1296 = vpop.f32.mrb[0].mxu0
    %v1297 = vpop.f32.mrb[0].mxu0
    %v1298 = vadd.f32 0.0, %v1297
    %v1299 = vpop.f32.mrb[0].mxu0
    %1300 = vmatprep.mubr.bf16.mxu0 %v949
    %1301 = vmatmul.mubr.bf16.gmra.mrb[0].mxu0 %v661
    %v1302 = vpop.f32.mrb[0].mxu0
    %v1303 = vadd.f32 0.0, %v1302
    %v1304 = vpop.f32.mrb[0].mxu0
    %v1305 = vpop.f32.mrb[0].mxu0
    %v1306 = vadd.f32 0.0, %v1305
    %v1307 = vpop.f32.mrb[0].mxu0
    %1308 = vmatprep.mubr.bf16.mxu0 %v952
    %1309 = vmatmul.mubr.bf16.gmra.mrb[0].mxu0 %v663
    %v1310 = vpop.f32.mrb[0].mxu0
    %v1311 = vadd.f32 0.0, %v1310
    %v1312 = vpop.f32.mrb[0].mxu0
    %v1313 = vpop.f32.mrb[0].mxu0
    %v1314 = vadd.f32 0.0, %v1313
    %v1315 = vpop.f32.mrb[0].mxu0
    %1316 = vmatprep.mubr.bf16.mxu0 %v955
    %1317 = vmatmul.mubr.bf16.gmra.mrb[0].mxu0 %v665
    %v1318 = vpop.f32.mrb[0].mxu0
    %v1319 = vadd.f32 0.0, %v1318
    %v1320 = vpop.f32.mrb[0].mxu0
    %v1321 = vpop.f32.mrb[0].mxu0
    %v1322 = vadd.f32 0.0, %v1321
    %v1323 = vpop.f32.mrb[0].mxu0
    %1324 = vmatprep.mubr.bf16.mxu0 %v958
    %1325 = vmatmul.mubr.bf16.gmra.mrb[0].mxu0 %v667
    %v1326 = vpop.f32.mrb[0].mxu0
    %v1327 = vadd.f32 0.0, %v1326
    %v1328 = vpop.f32.mrb[0].mxu0
    %v1329 = vpop.f32.mrb[0].mxu0
    %v1330 = vadd.f32 0.0, %v1329
    %v1331 = vpop.f32.mrb[0].mxu0
    %1332 = vmatprep.mubr.bf16.mxu0 %v961
    %1333 = vmatmul.mubr.bf16.gmra.mrb[0].mxu0 %v669
    %v1334 = vpop.f32.mrb[0].mxu0
    %v1335 = vadd.f32 0.0, %v1334
    %v1336 = vpop.f32.mrb[0].mxu0
    %v1337 = vpop.f32.mrb[0].mxu0
    %v1338 = vadd.f32 0.0, %v1337
    %v1339 = vpop.f32.mrb[0].mxu0
    %1340 = vmatprep.mubr.bf16.mxu0 %v964
    %1341 = vmatmul.mubr.bf16.gmra.mrb[0].mxu0 %v671
    %v1342 = vpop.f32.mrb[0].mxu0
    %v1343 = vadd.f32 0.0, %v1342
    %v1344 = vpop.f32.mrb[0].mxu0
    %v1345 = vpop.f32.mrb[0].mxu0
    %v1346 = vadd.f32 0.0, %v1345
    %v1347 = vpop.f32.mrb[0].mxu0
    %1348 = vmatprep.mubr.bf16.mxu0 %v967
    %1349 = vmatmul.mubr.bf16.gmra.mrb[0].mxu0 %v673
    %v1350 = vpop.f32.mrb[0].mxu0
    %v1351 = vadd.f32 0.0, %v1350
    %v1352 = vpop.f32.mrb[0].mxu0
    %v1353 = vpop.f32.mrb[0].mxu0
    %v1354 = vadd.f32 0.0, %v1353
    %v1355 = vpop.f32.mrb[0].mxu0
    %1356 = vmatprep.mubr.bf16.mxu0 %v970
    %1357 = vmatmul.mubr.bf16.gmra.mrb[0].mxu0 %v675
    %v1358 = vpop.f32.mrb[0].mxu0
    %v1359 = vadd.f32 0.0, %v1358
    %v1360 = vpop.f32.mrb[0].mxu0
    %v1361 = vpop.f32.mrb[0].mxu0
    %v1362 = vadd.f32 0.0, %v1361
    %v1363 = vpop.f32.mrb[0].mxu0
    %1364 = vmatprep.mubr.bf16.mxu0 %v973
    %1365 = vmatmul.mubr.bf16.gmra.mrb[0].mxu0 %v677
    %v1366 = vpop.f32.mrb[0].mxu0
    %v1367 = vadd.f32 0.0, %v1366
    %v1368 = vpop.f32.mrb[0].mxu0
    %v1369 = vpop.f32.mrb[0].mxu0
    %v1370 = vadd.f32 0.0, %v1369
    %v1371 = vpop.f32.mrb[0].mxu0
    %1372 = vmatprep.mubr.bf16.mxu0 %v976
    %1373 = vmatmul.mubr.bf16.gmra.mrb[0].mxu0 %v679
    %v1374 = vpop.f32.mrb[0].mxu0
    %v1375 = vadd.f32 0.0, %v1374
    %v1376 = vpop.f32.mrb[0].mxu0
    %v1377 = vpop.f32.mrb[0].mxu0
    %v1378 = vadd.f32 0.0, %v1377
    %v1379 = vpop.f32.mrb[0].mxu0
    %1380 = vmatprep.mubr.bf16.mxu0 %v979
    %1381 = vmatmul.mubr.bf16.gmra.mrb[0].mxu0 %v681
    %v1382 = vpop.f32.mrb[0].mxu0
    %v1383 = vadd.f32 0.0, %v1382
    %v1384 = vpop.f32.mrb[0].mxu0
    %v1385 = vpop.f32.mrb[0].mxu0
    %v1386 = vadd.f32 0.0, %v1385
    %v1387 = vpop.f32.mrb[0].mxu0
    %1388 = vmatprep.mubr.bf16.mxu0 %v982
    %1389 = vmatmul.mubr.bf16.gmra.mrb[0].mxu0 %v683
    %v1390 = vpop.f32.mrb[0].mxu0
    %v1391 = vadd.f32 0.0, %v1390
    %v1392 = vpop.f32.mrb[0].mxu0
    %v1393 = vpop.f32.mrb[0].mxu0
    %v1394 = vadd.f32 0.0, %v1393
    %v1395 = vpop.f32.mrb[0].mxu0
    %1396 = vmatprep.mubr.bf16.mxu0 %v985
    %1397 = vmatmul.mubr.bf16.gmra.mrb[0].mxu0 %v685
    %v1398 = vpop.f32.mrb[0].mxu0
    %v1399 = vadd.f32 0.0, %v1398
    %v1400 = vpop.f32.mrb[0].mxu0
    %v1401 = vpop.f32.mrb[0].mxu0
    %v1402 = vadd.f32 0.0, %v1401
    %v1403 = vpop.f32.mrb[0].mxu0
    %1404 = vmatprep.mubr.bf16.mxu0 %v988
    %1405 = vmatmul.mubr.bf16.gmra.mrb[0].mxu0 %v687
    %v1406 = vpop.f32.mrb[0].mxu0
    %v1407 = vadd.f32 0.0, %v1406
    %v1408 = vpop.f32.mrb[0].mxu0
    %v1409 = vpop.f32.mrb[0].mxu0
    %v1410 = vadd.f32 0.0, %v1409
    %v1411 = vpop.f32.mrb[0].mxu0
    %1412 = vmatprep.mubr.bf16.mxu0 %v991
    %1413 = vmatmul.mubr.bf16.gmra.mrb[0].mxu0 %v689
    %v1414 = vpop.f32.mrb[0].mxu0
    %v1415 = vadd.f32 0.0, %v1414
    %v1416 = vpop.f32.mrb[0].mxu0
    %v1417 = vpop.f32.mrb[0].mxu0
    %v1418 = vadd.f32 0.0, %v1417
    %v1419 = vpop.f32.mrb[0].mxu0
    %1420 = vmatprep.mubr.bf16.mxu0 %v994
    %1421 = vmatmul.mubr.bf16.gmra.mrb[0].mxu0 %v691
    %v1422 = vpop.f32.mrb[0].mxu0
    %v1423 = vadd.f32 0.0, %v1422
    %v1424 = vpop.f32.mrb[0].mxu0
    %v1425 = vpop.f32.mrb[0].mxu0
    %v1426 = vadd.f32 0.0, %v1425
    %v1427 = vpop.f32.mrb[0].mxu0
    %1428 = vmatprep.mubr.bf16.mxu0 %v997
    %1429 = vmatmul.mubr.bf16.gmra.mrb[0].mxu0 %v693
    %v1430 = vpop.f32.mrb[0].mxu0
    %v1431 = vadd.f32 0.0, %v1430
    %v1432 = vpop.f32.mrb[0].mxu0
    %v1433 = vpop.f32.mrb[0].mxu0
    %v1434 = vadd.f32 0.0, %v1433
    %v1435 = vpop.f32.mrb[0].mxu0
    %1436 = vmatprep.mubr.bf16.mxu0 %v1000
    %1437 = vmatmul.mubr.bf16.gmra.mrb[0].mxu0 %v695
    %v1438 = vpop.f32.mrb[0].mxu0
    %v1439 = vadd.f32 0.0, %v1438
    %v1440 = vpop.f32.mrb[0].mxu0
    %v1441 = vpop.f32.mrb[0].mxu0
    %v1442 = vadd.f32 0.0, %v1441
    %v1443 = vpop.f32.mrb[0].mxu0
    %1444 = vmatprep.mubr.bf16.mxu0 %v1003
    %1445 = vmatmul.mubr.bf16.gmra.mrb[0].mxu0 %v697
    %v1446 = vpop.f32.mrb[0].mxu0
    %v1447 = vadd.f32 0.0, %v1446
    %v1448 = vpop.f32.mrb[0].mxu0
    %v1449 = vpop.f32.mrb[0].mxu0
    %v1450 = vadd.f32 0.0, %v1449
    %v1451 = vpop.f32.mrb[0].mxu0
    %1452 = vmatprep.mubr.bf16.mxu0 %v1006
    %1453 = vmatmul.mubr.bf16.gmra.mrb[0].mxu0 %v699
    %v1454 = vpop.f32.mrb[0].mxu0
    %v1455 = vadd.f32 0.0, %v1454
    %v1456 = vpop.f32.mrb[0].mxu0
    %v1457 = vpop.f32.mrb[0].mxu0
    %v1458 = vadd.f32 0.0, %v1457
    %v1459 = vpop.f32.mrb[0].mxu0
    %1460 = vmatprep.mubr.bf16.mxu0 %v1009
    %1461 = vmatmul.mubr.bf16.gmra.mrb[0].mxu0 %v701
    %v1462 = vpop.f32.mrb[0].mxu0
    %v1463 = vadd.f32 0.0, %v1462
    %v1464 = vpop.f32.mrb[0].mxu0
    %v1465 = vpop.f32.mrb[0].mxu0
    %v1466 = vadd.f32 0.0, %v1465
    %v1467 = vpop.f32.mrb[0].mxu0
    %1468 = vmatprep.mubr.bf16.mxu0 %v1012
    %1469 = vmatmul.mubr.bf16.gmra.mrb[0].mxu0 %v703
    %v1470 = vpop.f32.mrb[0].mxu0
    %v1471 = vadd.f32 0.0, %v1470
    %v1472 = vpop.f32.mrb[0].mxu0
    %v1473 = vpop.f32.mrb[0].mxu0
    %v1474 = vadd.f32 0.0, %v1473
    %v1475 = vpop.f32.mrb[0].mxu0
    %1476 = vmatprep.mubr.bf16.mxu0 %v1015
    %1477 = vmatmul.mubr.bf16.gmra.mrb[0].mxu0 %v705
    %v1478 = vpop.f32.mrb[0].mxu0
    %v1479 = vadd.f32 0.0, %v1478
    %v1480 = vpop.f32.mrb[0].mxu0
    %v1481 = vpop.f32.mrb[0].mxu0
    %v1482 = vadd.f32 0.0, %v1481
    %v1483 = vpop.f32.mrb[0].mxu0
    %1484 = vmatprep.mubr.bf16.mxu0 %v1018
    %1485 = vmatmul.mubr.bf16.gmra.mrb[0].mxu0 %v707
    %v1486 = vpop.f32.mrb[0].mxu0
    %v1487 = vadd.f32 0.0, %v1486
    %v1488 = vpop.f32.mrb[0].mxu0
    %v1489 = vpop.f32.mrb[0].mxu0
    %v1490 = vadd.f32 0.0, %v1489
    %v1491 = vpop.f32.mrb[0].mxu0
    %1492 = vmatprep.mubr.bf16.mxu0 %v1021
    %1493 = vmatmul.mubr.bf16.gmra.mrb[0].mxu0 %v709
    %v1494 = vpop.f32.mrb[0].mxu0
    %v1495 = vadd.f32 0.0, %v1494
    %v1496 = vpop.f32.mrb[0].mxu0
    %v1497 = vpop.f32.mrb[0].mxu0
    %v1498 = vadd.f32 0.0, %v1497
    %v1499 = vpop.f32.mrb[0].mxu0
    %1500 = vmatprep.mubr.bf16.mxu0 %v1024
    %1501 = vmatmul.mubr.bf16.gmra.mrb[0].mxu0 %v711
    %v1502 = vpop.f32.mrb[0].mxu0
    %v1503 = vadd.f32 0.0, %v1502
    %v1504 = vpop.f32.mrb[0].mxu0
    %v1505 = vpop.f32.mrb[0].mxu0
    %v1506 = vadd.f32 0.0, %v1505
    %v1507 = vpop.f32.mrb[0].mxu0
    %1508 = vmatprep.mubr.bf16.mxu0 %v1027
    %1509 = vmatmul.mubr.bf16.gmra.mrb[0].mxu0 %v713
    %v1510 = vpop.f32.mrb[0].mxu0
    %v1511 = vadd.f32 0.0, %v1510
    %v1512 = vpop.f32.mrb[0].mxu0
    %v1513 = vpop.f32.mrb[0].mxu0
    %v1514 = vadd.f32 0.0, %v1513
    %v1515 = vpop.f32.mrb[0].mxu0
    %1516 = vmatprep.mubr.bf16.mxu0 %v1030
    %1517 = vmatmul.mubr.bf16.gmra.mrb[0].mxu0 %v715
    %v1518 = vpop.f32.mrb[0].mxu0
    %v1519 = vadd.f32 0.0, %v1518
    %v1520 = vpop.f32.mrb[0].mxu0
    %v1521 = vpop.f32.mrb[0].mxu0
    %v1522 = vadd.f32 0.0, %v1521
    %v1523 = vpop.f32.mrb[0].mxu0
    %1524 = vmatprep.mubr.bf16.mxu0 %v1033
    %1525 = vmatmul.mubr.bf16.gmra.mrb[0].mxu0 %v717
    %v1526 = vpop.f32.mrb[0].mxu0
    %v1527 = vadd.f32 0.0, %v1526
    %v1528 = vpop.f32.mrb[0].mxu0
    %v1529 = vpop.f32.mrb[0].mxu0
    %v1530 = vadd.f32 0.0, %v1529
    %v1531 = vpop.f32.mrb[0].mxu0
    %1532 = vmatprep.mubr.bf16.mxu0 %v1036
    %1533 = vmatmul.mubr.bf16.gmra.mrb[0].mxu0 %v719
    %v1534 = vpop.f32.mrb[0].mxu0
    %v1535 = vadd.f32 0.0, %v1534
    %v1536 = vpop.f32.mrb[0].mxu0
    %v1537 = vpop.f32.mrb[0].mxu0
    %v1538 = vadd.f32 0.0, %v1537
    %v1539 = vpop.f32.mrb[0].mxu0
    %1540 = vmatprep.mubr.bf16.mxu0 %v1039
    %1541 = vmatmul.mubr.bf16.gmra.mrb[0].mxu0 %v721
    %v1542 = vpop.f32.mrb[0].mxu0
    %v1543 = vadd.f32 0.0, %v1542
    %v1544 = vpop.f32.mrb[0].mxu0
    %v1545 = vpop.f32.mrb[0].mxu0
    %v1546 = vadd.f32 0.0, %v1545
    %v1547 = vpop.f32.mrb[0].mxu0
    %1548 = vmatprep.mubr.bf16.mxu0 %v1042
    %1549 = vmatmul.mubr.bf16.gmra.mrb[0].mxu0 %v723
    %v1550 = vpop.f32.mrb[0].mxu0
    %v1551 = vadd.f32 0.0, %v1550
    %v1552 = vpop.f32.mrb[0].mxu0
    %v1553 = vpop.f32.mrb[0].mxu0
    %v1554 = vadd.f32 0.0, %v1553
    %v1555 = vpop.f32.mrb[0].mxu0
    %1556 = vmatprep.mubr.bf16.mxu0 %v1045
    %1557 = vmatmul.mubr.bf16.gmra.mrb[0].mxu0 %v725
    %v1558 = vpop.f32.mrb[0].mxu0
    %v1559 = vadd.f32 0.0, %v1558
    %v1560 = vpop.f32.mrb[0].mxu0
    %v1561 = vpop.f32.mrb[0].mxu0
    %v1562 = vadd.f32 0.0, %v1561
    %v1563 = vpop.f32.mrb[0].mxu0
    %1564 = vmatprep.mubr.bf16.mxu0 %v1048
    %1565 = vmatmul.mubr.bf16.gmra.mrb[0].mxu0 %v727
    %v1566 = vpop.f32.mrb[0].mxu0
    %v1567 = vadd.f32 0.0, %v1566
    %v1568 = vpop.f32.mrb[0].mxu0
    %v1569 = vpop.f32.mrb[0].mxu0
    %v1570 = vadd.f32 0.0, %v1569
    %v1571 = vpop.f32.mrb[0].mxu0
    %1572 = vmatprep.mubr.bf16.mxu0 %v1051
    %1573 = vmatmul.mubr.bf16.gmra.mrb[0].mxu0 %v729
    %v1574 = vpop.f32.mrb[0].mxu0
    %v1575 = vadd.f32 0.0, %v1574
    %v1576 = vpop.f32.mrb[0].mxu0
    %v1577 = vpop.f32.mrb[0].mxu0
    %v1578 = vadd.f32 0.0, %v1577
    %v1579 = vpop.f32.mrb[0].mxu0
    %1580 = vmatprep.mubr.bf16.mxu0 %v1054
    %1581 = vmatmul.mubr.bf16.gmra.mrb[0].mxu0 %v731
    %v1582 = vpop.f32.mrb[0].mxu0
    %v1583 = vadd.f32 0.0, %v1582
    %v1584 = vpop.f32.mrb[0].mxu0
    %v1585 = vpop.f32.mrb[0].mxu0
    %v1586 = vadd.f32 0.0, %v1585
    %v1587 = vpop.f32.mrb[0].mxu0
    %1588 = vmatprep.mubr.bf16.mxu0 %v1057
    %1589 = vmatmul.mubr.bf16.gmra.mrb[0].mxu0 %v733
    %v1590 = vpop.f32.mrb[0].mxu0
    %v1591 = vadd.f32 0.0, %v1590
    %v1592 = vpop.f32.mrb[0].mxu0
    %v1593 = vpop.f32.mrb[0].mxu0
    %v1594 = vadd.f32 0.0, %v1593
    %v1595 = vpop.f32.mrb[0].mxu0
    %1596 = vmatprep.mubr.bf16.mxu0 %v1060
    %1597 = vmatmul.mubr.bf16.gmra.mrb[0].mxu0 %v735
    %v1598 = vpop.f32.mrb[0].mxu0
    %v1599 = vadd.f32 0.0, %v1598
    %v1600 = vpop.f32.mrb[0].mxu0
    %v1601 = vpop.f32.mrb[0].mxu0
    %v1602 = vadd.f32 0.0, %v1601
    %v1603 = vpop.f32.mrb[0].mxu0
    %1604 = vmatprep.mubr.bf16.mxu0 %v1063
    %1605 = vmatmul.mubr.bf16.gmra.mrb[0].mxu0 %v737
    %v1606 = vpop.f32.mrb[0].mxu0
    %v1607 = vadd.f32 0.0, %v1606
    %v1608 = vpop.f32.mrb[0].mxu0
    %v1609 = vpop.f32.mrb[0].mxu0
    %v1610 = vadd.f32 0.0, %v1609
    %v1611 = vpop.f32.mrb[0].mxu0
    %1612 = vmatprep.mubr.bf16.mxu0 %v1066
    %1613 = vmatmul.mubr.bf16.gmra.mrb[0].mxu0 %v739
    %v1614 = vpop.f32.mrb[0].mxu0
    %v1615 = vadd.f32 0.0, %v1614
    %v1616 = vpop.f32.mrb[0].mxu0
    %v1617 = vpop.f32.mrb[0].mxu0
    %v1618 = vadd.f32 0.0, %v1617
    %v1619 = vpop.f32.mrb[0].mxu0
    %1620 = vmatprep.mubr.bf16.mxu0 %v1069
    %1621 = vmatmul.mubr.bf16.gmra.mrb[0].mxu0 %v741
    %v1622 = vpop.f32.mrb[0].mxu0
    %v1623 = vadd.f32 0.0, %v1622
    %v1624 = vpop.f32.mrb[0].mxu0
    %v1625 = vpop.f32.mrb[0].mxu0
    %v1626 = vadd.f32 0.0, %v1625
    %v1627 = vpop.f32.mrb[0].mxu0
    %1628 = vmatprep.mubr.bf16.mxu0 %v1072
    %1629 = vmatmul.mubr.bf16.gmra.mrb[0].mxu0 %v743
    %v1630 = vpop.f32.mrb[0].mxu0
    %v1631 = vadd.f32 0.0, %v1630
    %v1632 = vpop.f32.mrb[0].mxu0
    %v1633 = vpop.f32.mrb[0].mxu0
    %v1634 = vadd.f32 0.0, %v1633
    %v1635 = vpop.f32.mrb[0].mxu0
    %1636 = vmatprep.mubr.bf16.mxu0 %v1075
    %1637 = vmatmul.mubr.bf16.gmra.mrb[0].mxu0 %v745
    %v1638 = vpop.f32.mrb[0].mxu0
    %v1639 = vadd.f32 0.0, %v1638
    %v1640 = vpop.f32.mrb[0].mxu0
    %v1641 = vpop.f32.mrb[0].mxu0
    %v1642 = vadd.f32 0.0, %v1641
    %v1643 = vpop.f32.mrb[0].mxu0
    %1644 = vmatprep.mubr.bf16.mxu0 %v1078
    %1645 = vmatmul.mubr.bf16.gmra.mrb[0].mxu0 %v747
    %v1646 = vpop.f32.mrb[0].mxu0
    %v1647 = vadd.f32 0.0, %v1646
    %v1648 = vpop.f32.mrb[0].mxu0
    %v1649 = vpop.f32.mrb[0].mxu0
    %v1650 = vadd.f32 0.0, %v1649
    %v1651 = vpop.f32.mrb[0].mxu0
    %1652 = vmatprep.mubr.bf16.mxu0 %v1081
    %1653 = vmatmul.mubr.bf16.gmra.mrb[0].mxu0 %v749
    %v1654 = vpop.f32.mrb[0].mxu0
    %v1655 = vadd.f32 0.0, %v1654
    %v1656 = vpop.f32.mrb[0].mxu0
    %v1657 = vpop.f32.mrb[0].mxu0
    %v1658 = vadd.f32 0.0, %v1657
    %v1659 = vpop.f32.mrb[0].mxu0
    %1660 = vmatprep.mubr.bf16.mxu0 %v1084
    %1661 = vmatmul.mubr.bf16.gmra.mrb[0].mxu0 %v751
    %v1662 = vpop.f32.mrb[0].mxu0
    %v1663 = vadd.f32 0.0, %v1662
    %v1664 = vpop.f32.mrb[0].mxu0
    %v1665 = vpop.f32.mrb[0].mxu0
    %v1666 = vadd.f32 0.0, %v1665
    %v1667 = vpop.f32.mrb[0].mxu0
    %1668 = vmatprep.mubr.bf16.mxu0 %v1087
    %1669 = vmatmul.mubr.bf16.gmra.mrb[0].mxu0 %v753
    %v1670 = vpop.f32.mrb[0].mxu0
    %v1671 = vadd.f32 0.0, %v1670
    %v1672 = vpop.f32.mrb[0].mxu0
    %v1673 = vpop.f32.mrb[0].mxu0
    %v1674 = vadd.f32 0.0, %v1673
    %v1675 = vpop.f32.mrb[0].mxu0
    %1676 = vmatprep.mubr.bf16.mxu0 %v1090
    %1677 = vmatmul.mubr.bf16.gmra.mrb[0].mxu0 %v755
    %v1678 = vpop.f32.mrb[0].mxu0
    %v1679 = vadd.f32 0.0, %v1678
    %v1680 = vpop.f32.mrb[0].mxu0
    %v1681 = vpop.f32.mrb[0].mxu0
    %v1682 = vadd.f32 0.0, %v1681
    %v1683 = vpop.f32.mrb[0].mxu0
    %1684 = vdwg.mxu0
    %v1685 = vpack.c.bf16 %v1130, %v1127
    %v1686 = vpack.c.bf16 %v1138, %v1135
    %v1687 = vpack.c.bf16 %v1146, %v1143
    %v1688 = vpack.c.bf16 %v1154, %v1151
    %v1689 = vpack.c.bf16 %v1162, %v1159
    %v1690 = vpack.c.bf16 %v1170, %v1167
    %v1691 = vpack.c.bf16 %v1178, %v1175
    %v1692 = vpack.c.bf16 %v1186, %v1183
    %v1693 = vpack.c.bf16 %v1194, %v1191
    %v1694 = vpack.c.bf16 %v1202, %v1199
    %v1695 = vpack.c.bf16 %v1210, %v1207
    %v1696 = vpack.c.bf16 %v1218, %v1215
    %v1697 = vpack.c.bf16 %v1226, %v1223
    %v1698 = vpack.c.bf16 %v1234, %v1231
    %v1699 = vpack.c.bf16 %v1242, %v1239
    %v1700 = vpack.c.bf16 %v1250, %v1247
    %v1701 = vpack.c.bf16 %v1258, %v1255
    %v1702 = vpack.c.bf16 %v1266, %v1263
    %v1703 = vpack.c.bf16 %v1274, %v1271
    %v1704 = vpack.c.bf16 %v1282, %v1279
    %v1705 = vpack.c.bf16 %v1290, %v1287
    %v1706 = vpack.c.bf16 %v1298, %v1295
    %v1707 = vpack.c.bf16 %v1306, %v1303
    %v1708 = vpack.c.bf16 %v1314, %v1311
    %v1709 = vpack.c.bf16 %v1322, %v1319
    %v1710 = vpack.c.bf16 %v1330, %v1327
    %v1711 = vpack.c.bf16 %v1338, %v1335
    %v1712 = vpack.c.bf16 %v1346, %v1343
    %v1713 = vpack.c.bf16 %v1354, %v1351
    %v1714 = vpack.c.bf16 %v1362, %v1359
    %v1715 = vpack.c.bf16 %v1370, %v1367
    %v1716 = vpack.c.bf16 %v1378, %v1375
    %v1717 = vpack.c.bf16 %v1386, %v1383
    %v1718 = vpack.c.bf16 %v1394, %v1391
    %v1719 = vpack.c.bf16 %v1402, %v1399
    %v1720 = vpack.c.bf16 %v1410, %v1407
    %v1721 = vpack.c.bf16 %v1418, %v1415
    %v1722 = vpack.c.bf16 %v1426, %v1423
    %v1723 = vpack.c.bf16 %v1434, %v1431
    %v1724 = vpack.c.bf16 %v1442, %v1439
    %v1725 = vpack.c.bf16 %v1450, %v1447
    %v1726 = vpack.c.bf16 %v1458, %v1455
    %v1727 = vpack.c.bf16 %v1466, %v1463
    %v1728 = vpack.c.bf16 %v1474, %v1471
    %v1729 = vpack.c.bf16 %v1482, %v1479
    %v1730 = vpack.c.bf16 %v1490, %v1487
    %v1731 = vpack.c.bf16 %v1498, %v1495
    %v1732 = vpack.c.bf16 %v1506, %v1503
    %v1733 = vpack.c.bf16 %v1514, %v1511
    %v1734 = vpack.c.bf16 %v1522, %v1519
    %v1735 = vpack.c.bf16 %v1530, %v1527
    %v1736 = vpack.c.bf16 %v1538, %v1535
    %v1737 = vpack.c.bf16 %v1546, %v1543
    %v1738 = vpack.c.bf16 %v1554, %v1551
    %v1739 = vpack.c.bf16 %v1562, %v1559
    %v1740 = vpack.c.bf16 %v1570, %v1567
    %v1741 = vpack.c.bf16 %v1578, %v1575
    %v1742 = vpack.c.bf16 %v1586, %v1583
    %v1743 = vpack.c.bf16 %v1594, %v1591
    %v1744 = vpack.c.bf16 %v1602, %v1599
    %v1745 = vpack.c.bf16 %v1610, %v1607
    %v1746 = vpack.c.bf16 %v1618, %v1615
    %v1747 = vpack.c.bf16 %v1626, %v1623
    %v1748 = vpack.c.bf16 %v1634, %v1631
    %v1749 = vpack.c.bf16 %v1642, %v1639
    %v1750 = vpack.c.bf16 %v1650, %v1647
    %v1751 = vpack.c.bf16 %v1658, %v1655
    %v1752 = vpack.c.bf16 %v1666, %v1663
    %v1753 = vpack.c.bf16 %v1674, %v1671
    %v1754 = vpack.c.bf16 %v1682, %v1679
    %v1755 = vld [vmem:[%s2] sm:$0xf]
    %v1756 = vld [vmem:[%s2 + $0x4] sm:$0xf]
    %v1757 = vld [vmem:[%s2 + $0x8] sm:$0xf]
    %v1758 = vld [vmem:[%s2 + $0xc] sm:$0xf]
    %v1759 = vld [vmem:[%s2 + $0x10] sm:$0xf]
    %v1760 = vld [vmem:[%s2 + $0x14] sm:$0xf]
    %v1761 = vld [vmem:[%s2 + $0x18] sm:$0xf]
    %v1762 = vld [vmem:[%s2 + $0x1c] sm:$0xf]
    %v1763 = vld [vmem:[%s2 + $0x20] sm:$0xf]
    %v1764 = vld [vmem:[%s2 + $0x24] sm:$0xf]
    %v1765 = vld [vmem:[%s2 + $0x28] sm:$0xf]
    %v1766 = vld [vmem:[%s2 + $0x2c] sm:$0xf]
    %s1767 = scalar_lea.vmem %s2, 48
    %v1768 = vld [vmem:[%s1767] sm:$0xf]
    %v1769 = vld [vmem:[%s1767 + $0x4] sm:$0xf]
    %v1770 = vld [vmem:[%s1767 + $0x8] sm:$0xf]
    %v1771 = vld [vmem:[%s1767 + $0xc] sm:$0xf]
    %v1772 = vld [vmem:[%s1767 + $0x10] sm:$0xf]
    %v1773 = vld [vmem:[%s1767 + $0x14] sm:$0xf]
    %v1774 = vld [vmem:[%s1767 + $0x18] sm:$0xf]
    %v1775 = vld [vmem:[%s1767 + $0x1c] sm:$0xf]
    %v1776 = vld [vmem:[%s1767 + $0x20] sm:$0xf]
    %v1777 = vld [vmem:[%s1767 + $0x24] sm:$0xf]
    %v1778 = vld [vmem:[%s1767 + $0x28] sm:$0xf]
    %v1779 = vld [vmem:[%s1767 + $0x2c] sm:$0xf]
    %v1792 = vunpack.c.l.b16 %v1768
    %v1793 = vunpack.c.l.b16 %v1769
    %v1794 = vunpack.c.l.b16 %v1770
    %v1795 = vunpack.c.l.b16 %v1771
    %v1796 = vunpack.c.l.b16 %v1772
    %v1797 = vunpack.c.l.b16 %v1773
    %v1798 = vunpack.c.l.b16 %v1774
    %v1799 = vunpack.c.l.b16 %v1775
    %v1800 = vunpack.c.l.b16 %v1776
    %v1801 = vunpack.c.l.b16 %v1777
    %v1802 = vunpack.c.l.b16 %v1778
    %v1803 = vunpack.c.l.b16 %v1779
    %v1804 = vpack.c.b16 %v1793, %v1792
    %v1805 = vpack.c.b16 %v1795, %v1794
    %v1806 = vpack.c.b16 %v1797, %v1796
    %v1807 = vpack.c.b16 %v1799, %v1798
    %v1808 = vpack.c.b16 %v1801, %v1800
    %v1809 = vpack.c.b16 %v1803, %v1802
    %vm1816 = vcmask 785408
    %v1818 = vsel %vm1816, %v1699, 0
    %v1821 = vsel %vm1816, %v1700, 0
    %v1824 = vsel %vm1816, %v1701, 0
    %v1827 = vsel %vm1816, %v1702, 0
    %v1830 = vsel %vm1816, %v1703, 0
    %v1833 = vsel %vm1816, %v1704, 0
    %v1836 = vsel %vm1816, %v1705, 0
    %v1839 = vsel %vm1816, %v1706, 0
    %v1842 = vsel %vm1816, %v1707, 0
    %v1845 = vsel %vm1816, %v1708, 0
    %v1848 = vsel %vm1816, %v1709, 0
    %v1851 = vsel %vm1816, %v1710, 0
    %v1854 = vsel %vm1816, %v1711, 0
    %v1857 = vsel %vm1816, %v1712, 0
    %1859 = vmatprep.subr.bf16.mxu0 0
    %1860 = vmatpush1.bf16.msra.mxu0 %v1804
    %1861 = vmatprep.subr.bf16.mxu0 0
    %1862 = vmatpush1.bf16.msra.mxu0 %v1805
    %1863 = vmatprep.subr.bf16.mxu0 0
    %1864 = vmatpush1.bf16.msra.mxu0 %v1806
    %1865 = vmatprep.subr.bf16.mxu0 0
    %1866 = vmatpush1.bf16.msra.mxu0 %v1807
    %1867 = vmatprep.subr.bf16.mxu0 0
    %1868 = vmatpush1.bf16.msra.mxu0 %v1808
    %1869 = vmatprep.subr.bf16.mxu0 0
    %1870 = vmatpush1.bf16.msra.mxu0 %v1809
    %1871 = vmatprep.subr.bf16.mxu0 0
    %1872 = vmatpush1.bf16.msra.mxu0 0
    %1873 = vmatprep.subr.bf16.mxu0 0
    %1874 = vmatpush1.bf16.msra.mxu0 0
    %1875 = vmatprep.subr.bf16.mxu0 0
    %1876 = vmatpush1.bf16.msra.mxu0 0
    %1877 = vmatprep.subr.bf16.mxu0 0
    %1878 = vmatpush1.bf16.msra.mxu0 0
    %1879 = vmatprep.subr.bf16.mxu0 0
    %1880 = vmatpush1.bf16.msra.mxu0 0
    %1881 = vmatprep.subr.bf16.mxu0 0
    %1882 = vmatpush1.bf16.msra.mxu0 0
    %1883 = vmatprep.subr.bf16.mxu0 0
    %1884 = vmatpush1.bf16.msra.mxu0 0
    %1885 = vmatprep.subr.bf16.mxu0 0
    %1886 = vmatpush1.bf16.msra.mxu0 0
    %1887 = vmatprep.subr.bf16.mxu0 0
    %1888 = vmatpush1.bf16.msra.mxu0 0
    %1889 = vmatprep.subr.bf16.mxu0 0
    %1890 = vmatpush1.bf16.msra.mxu0 0
    %1891 = vmatprep.mubr.bf16.mxu0 0
    %1892 = vmatmul.mubr.bf16.gmra.mrb[0].mxu0 %v1818
    %v1893 = vpop.f32.mrb[0].mxu0
    %v1894 = vadd.f32 0.0, %v1893
    %v1895 = vpop.f32.mrb[0].mxu0
    %v1896 = vpop.f32.mrb[0].mxu0
    %v1897 = vadd.f32 0.0, %v1896
    %v1898 = vpop.f32.mrb[0].mxu0
    %1899 = vmatprep.mubr.bf16.mxu0 0
    %1900 = vmatmul.mubr.bf16.gmra.mrb[0].mxu0 %v1821
    %v1901 = vpop.f32.mrb[0].mxu0
    %v1902 = vadd.f32 0.0, %v1901
    %v1903 = vpop.f32.mrb[0].mxu0
    %v1904 = vpop.f32.mrb[0].mxu0
    %v1905 = vadd.f32 0.0, %v1904
    %v1906 = vpop.f32.mrb[0].mxu0
    %1907 = vmatprep.mubr.bf16.mxu0 0
    %1908 = vmatmul.mubr.bf16.gmra.mrb[0].mxu0 %v1824
    %v1909 = vpop.f32.mrb[0].mxu0
    %v1910 = vadd.f32 0.0, %v1909
    %v1911 = vpop.f32.mrb[0].mxu0
    %v1912 = vpop.f32.mrb[0].mxu0
    %v1913 = vadd.f32 0.0, %v1912
    %v1914 = vpop.f32.mrb[0].mxu0
    %1915 = vmatprep.mubr.bf16.mxu0 0
    %1916 = vmatmul.mubr.bf16.gmra.mrb[0].mxu0 %v1827
    %v1917 = vpop.f32.mrb[0].mxu0
    %v1918 = vadd.f32 0.0, %v1917
    %v1919 = vpop.f32.mrb[0].mxu0
    %v1920 = vpop.f32.mrb[0].mxu0
    %v1921 = vadd.f32 0.0, %v1920
    %v1922 = vpop.f32.mrb[0].mxu0
    %1923 = vmatprep.mubr.bf16.mxu0 0
    %1924 = vmatmul.mubr.bf16.gmra.mrb[0].mxu0 %v1830
    %v1925 = vpop.f32.mrb[0].mxu0
    %v1926 = vadd.f32 0.0, %v1925
    %v1927 = vpop.f32.mrb[0].mxu0
    %v1928 = vpop.f32.mrb[0].mxu0
    %v1929 = vadd.f32 0.0, %v1928
    %v1930 = vpop.f32.mrb[0].mxu0
    %1931 = vmatprep.mubr.bf16.mxu0 0
    %1932 = vmatmul.mubr.bf16.gmra.mrb[0].mxu0 %v1833
    %v1933 = vpop.f32.mrb[0].mxu0
    %v1934 = vadd.f32 0.0, %v1933
    %v1935 = vpop.f32.mrb[0].mxu0
    %v1936 = vpop.f32.mrb[0].mxu0
    %v1937 = vadd.f32 0.0, %v1936
    %v1938 = vpop.f32.mrb[0].mxu0
    %1939 = vmatprep.mubr.bf16.mxu0 0
    %1940 = vmatmul.mubr.bf16.gmra.mrb[0].mxu0 %v1836
    %v1941 = vpop.f32.mrb[0].mxu0
    %v1942 = vadd.f32 0.0, %v1941
    %v1943 = vpop.f32.mrb[0].mxu0
    %v1944 = vpop.f32.mrb[0].mxu0
    %v1945 = vadd.f32 0.0, %v1944
    %v1946 = vpop.f32.mrb[0].mxu0
    %1947 = vmatprep.mubr.bf16.mxu0 0
    %1948 = vmatmul.mubr.bf16.gmra.mrb[0].mxu0 %v1839
    %v1949 = vpop.f32.mrb[0].mxu0
    %v1950 = vadd.f32 0.0, %v1949
    %v1951 = vpop.f32.mrb[0].mxu0
    %v1952 = vpop.f32.mrb[0].mxu0
    %v1953 = vadd.f32 0.0, %v1952
    %v1954 = vpop.f32.mrb[0].mxu0
    %1955 = vmatprep.mubr.bf16.mxu0 0
    %1956 = vmatmul.mubr.bf16.gmra.mrb[0].mxu0 %v1842
    %v1957 = vpop.f32.mrb[0].mxu0
    %v1958 = vadd.f32 0.0, %v1957
    %v1959 = vpop.f32.mrb[0].mxu0
    %v1960 = vpop.f32.mrb[0].mxu0
    %v1961 = vadd.f32 0.0, %v1960
    %v1962 = vpop.f32.mrb[0].mxu0
    %1963 = vmatprep.mubr.bf16.mxu0 0
    %1964 = vmatmul.mubr.bf16.gmra.mrb[0].mxu0 %v1845
    %v1965 = vpop.f32.mrb[0].mxu0
    %v1966 = vadd.f32 0.0, %v1965
    %v1967 = vpop.f32.mrb[0].mxu0
    %v1968 = vpop.f32.mrb[0].mxu0
    %v1969 = vadd.f32 0.0, %v1968
    %v1970 = vpop.f32.mrb[0].mxu0
    %1971 = vmatprep.mubr.bf16.mxu0 0
    %1972 = vmatmul.mubr.bf16.gmra.mrb[0].mxu0 %v1848
    %v1973 = vpop.f32.mrb[0].mxu0
    %v1974 = vadd.f32 0.0, %v1973
    %v1975 = vpop.f32.mrb[0].mxu0
    %v1976 = vpop.f32.mrb[0].mxu0
    %v1977 = vadd.f32 0.0, %v1976
    %v1978 = vpop.f32.mrb[0].mxu0
    %1979 = vmatprep.mubr.bf16.mxu0 0
    %1980 = vmatmul.mubr.bf16.gmra.mrb[0].mxu0 %v1851
    %v1981 = vpop.f32.mrb[0].mxu0
    %v1982 = vadd.f32 0.0, %v1981
    %v1983 = vpop.f32.mrb[0].mxu0
    %v1984 = vpop.f32.mrb[0].mxu0
    %v1985 = vadd.f32 0.0, %v1984
    %v1986 = vpop.f32.mrb[0].mxu0
    %1987 = vmatprep.mubr.bf16.mxu0 0
    %1988 = vmatmul.mubr.bf16.gmra.mrb[0].mxu0 %v1854
    %v1989 = vpop.f32.mrb[0].mxu0
    %v1990 = vadd.f32 0.0, %v1989
    %v1991 = vpop.f32.mrb[0].mxu0
    %v1992 = vpop.f32.mrb[0].mxu0
    %v1993 = vadd.f32 0.0, %v1992
    %v1994 = vpop.f32.mrb[0].mxu0
    %1995 = vmatprep.mubr.bf16.mxu0 0
    %1996 = vmatmul.mubr.bf16.gmra.mrb[0].mxu0 %v1857
    %v1997 = vpop.f32.mrb[0].mxu0
    %v1998 = vadd.f32 0.0, %v1997
    %v1999 = vpop.f32.mrb[0].mxu0
    %v2000 = vpop.f32.mrb[0].mxu0
    %v2001 = vadd.f32 0.0, %v2000
    %v2002 = vpop.f32.mrb[0].mxu0
    %2003 = vdwg.mxu0
    %v2016 = vunpack.c.l.b16 %v1755
    %v2017 = vunpack.c.l.b16 %v1756
    %v2018 = vunpack.c.l.b16 %v1757
    %v2019 = vunpack.c.l.b16 %v1758
    %v2020 = vunpack.c.l.b16 %v1759
    %v2021 = vunpack.c.l.b16 %v1760
    %v2022 = vunpack.c.l.b16 %v1761
    %v2023 = vunpack.c.l.b16 %v1762
    %v2024 = vunpack.c.l.b16 %v1763
    %v2025 = vunpack.c.l.b16 %v1764
    %v2026 = vunpack.c.l.b16 %v1765
    %v2027 = vunpack.c.l.b16 %v1766
    %v2028 = vpack.c.b16 %v2017, %v2016
    %v2029 = vpack.c.b16 %v2019, %v2018
    %v2030 = vpack.c.b16 %v2021, %v2020
    %v2031 = vpack.c.b16 %v2023, %v2022
    %v2032 = vpack.c.b16 %v2025, %v2024
    %v2033 = vpack.c.b16 %v2027, %v2026
    %v2041 = vsel %vm1816, %v1685, 0
    %v2044 = vsel %vm1816, %v1686, 0
    %v2047 = vsel %vm1816, %v1687, 0
    %v2050 = vsel %vm1816, %v1688, 0
    %v2053 = vsel %vm1816, %v1689, 0
    %v2056 = vsel %vm1816, %v1690, 0
    %v2059 = vsel %vm1816, %v1691, 0
    %v2062 = vsel %vm1816, %v1692, 0
    %v2065 = vsel %vm1816, %v1693, 0
    %v2068 = vsel %vm1816, %v1694, 0
    %v2071 = vsel %vm1816, %v1695, 0
    %v2074 = vsel %vm1816, %v1696, 0
    %v2077 = vsel %vm1816, %v1697, 0
    %v2080 = vsel %vm1816, %v1698, 0
    %2082 = vmatprep.subr.bf16.mxu0 0
    %2083 = vmatpush1.bf16.msra.mxu0 %v2028
    %2084 = vmatprep.subr.bf16.mxu0 0
    %2085 = vmatpush1.bf16.msra.mxu0 %v2029
    %2086 = vmatprep.subr.bf16.mxu0 0
    %2087 = vmatpush1.bf16.msra.mxu0 %v2030
    %2088 = vmatprep.subr.bf16.mxu0 0
    %2089 = vmatpush1.bf16.msra.mxu0 %v2031
    %2090 = vmatprep.subr.bf16.mxu0 0
    %2091 = vmatpush1.bf16.msra.mxu0 %v2032
    %2092 = vmatprep.subr.bf16.mxu0 0
    %2093 = vmatpush1.bf16.msra.mxu0 %v2033
    %2094 = vmatprep.subr.bf16.mxu0 0
    %2095 = vmatpush1.bf16.msra.mxu0 0
    %2096 = vmatprep.subr.bf16.mxu0 0
    %2097 = vmatpush1.bf16.msra.mxu0 0
    %2098 = vmatprep.subr.bf16.mxu0 0
    %2099 = vmatpush1.bf16.msra.mxu0 0
    %2100 = vmatprep.subr.bf16.mxu0 0
    %2101 = vmatpush1.bf16.msra.mxu0 0
    %2102 = vmatprep.subr.bf16.mxu0 0
    %2103 = vmatpush1.bf16.msra.mxu0 0
    %2104 = vmatprep.subr.bf16.mxu0 0
    %2105 = vmatpush1.bf16.msra.mxu0 0
    %2106 = vmatprep.subr.bf16.mxu0 0
    %2107 = vmatpush1.bf16.msra.mxu0 0
    %2108 = vmatprep.subr.bf16.mxu0 0
    %2109 = vmatpush1.bf16.msra.mxu0 0
    %2110 = vmatprep.subr.bf16.mxu0 0
    %2111 = vmatpush1.bf16.msra.mxu0 0
    %2112 = vmatprep.subr.bf16.mxu0 0
    %2113 = vmatpush1.bf16.msra.mxu0 0
    %2114 = vmatprep.mubr.bf16.mxu0 0
    %2115 = vmatmul.mubr.bf16.gmra.mrb[0].mxu0 %v2041
    %v2116 = vpop.f32.mrb[0].mxu0
    %v2117 = vadd.f32 %v1894, %v2116
    %v2118 = vpop.f32.mrb[0].mxu0
    %v2119 = vpop.f32.mrb[0].mxu0
    %v2120 = vadd.f32 %v1897, %v2119
    %v2121 = vpop.f32.mrb[0].mxu0
    %2122 = vmatprep.mubr.bf16.mxu0 0
    %2123 = vmatmul.mubr.bf16.gmra.mrb[0].mxu0 %v2044
    %v2124 = vpop.f32.mrb[0].mxu0
    %v2125 = vadd.f32 %v1902, %v2124
    %v2126 = vpop.f32.mrb[0].mxu0
    %v2127 = vpop.f32.mrb[0].mxu0
    %v2128 = vadd.f32 %v1905, %v2127
    %v2129 = vpop.f32.mrb[0].mxu0
    %2130 = vmatprep.mubr.bf16.mxu0 0
    %2131 = vmatmul.mubr.bf16.gmra.mrb[0].mxu0 %v2047
    %v2132 = vpop.f32.mrb[0].mxu0
    %v2133 = vadd.f32 %v1910, %v2132
    %v2134 = vpop.f32.mrb[0].mxu0
    %v2135 = vpop.f32.mrb[0].mxu0
    %v2136 = vadd.f32 %v1913, %v2135
    %v2137 = vpop.f32.mrb[0].mxu0
    %2138 = vmatprep.mubr.bf16.mxu0 0
    %2139 = vmatmul.mubr.bf16.gmra.mrb[0].mxu0 %v2050
    %v2140 = vpop.f32.mrb[0].mxu0
    %v2141 = vadd.f32 %v1918, %v2140
    %v2142 = vpop.f32.mrb[0].mxu0
    %v2143 = vpop.f32.mrb[0].mxu0
    %v2144 = vadd.f32 %v1921, %v2143
    %v2145 = vpop.f32.mrb[0].mxu0
    %2146 = vmatprep.mubr.bf16.mxu0 0
    %2147 = vmatmul.mubr.bf16.gmra.mrb[0].mxu0 %v2053
    %v2148 = vpop.f32.mrb[0].mxu0
    %v2149 = vadd.f32 %v1926, %v2148
    %v2150 = vpop.f32.mrb[0].mxu0
    %v2151 = vpop.f32.mrb[0].mxu0
    %v2152 = vadd.f32 %v1929, %v2151
    %v2153 = vpop.f32.mrb[0].mxu0
    %2154 = vmatprep.mubr.bf16.mxu0 0
    %2155 = vmatmul.mubr.bf16.gmra.mrb[0].mxu0 %v2056
    %v2156 = vpop.f32.mrb[0].mxu0
    %v2157 = vadd.f32 %v1934, %v2156
    %v2158 = vpop.f32.mrb[0].mxu0
    %v2159 = vpop.f32.mrb[0].mxu0
    %v2160 = vadd.f32 %v1937, %v2159
    %v2161 = vpop.f32.mrb[0].mxu0
    %2162 = vmatprep.mubr.bf16.mxu0 0
    %2163 = vmatmul.mubr.bf16.gmra.mrb[0].mxu0 %v2059
    %v2164 = vpop.f32.mrb[0].mxu0
    %v2165 = vadd.f32 %v1942, %v2164
    %v2166 = vpop.f32.mrb[0].mxu0
    %v2167 = vpop.f32.mrb[0].mxu0
    %v2168 = vadd.f32 %v1945, %v2167
    %v2169 = vpop.f32.mrb[0].mxu0
    %2170 = vmatprep.mubr.bf16.mxu0 0
    %2171 = vmatmul.mubr.bf16.gmra.mrb[0].mxu0 %v2062
    %v2172 = vpop.f32.mrb[0].mxu0
    %v2173 = vadd.f32 %v1950, %v2172
    %v2174 = vpop.f32.mrb[0].mxu0
    %v2175 = vpop.f32.mrb[0].mxu0
    %v2176 = vadd.f32 %v1953, %v2175
    %v2177 = vpop.f32.mrb[0].mxu0
    %2178 = vmatprep.mubr.bf16.mxu0 0
    %2179 = vmatmul.mubr.bf16.gmra.mrb[0].mxu0 %v2065
    %v2180 = vpop.f32.mrb[0].mxu0
    %v2181 = vadd.f32 %v1958, %v2180
    %v2182 = vpop.f32.mrb[0].mxu0
    %v2183 = vpop.f32.mrb[0].mxu0
    %v2184 = vadd.f32 %v1961, %v2183
    %v2185 = vpop.f32.mrb[0].mxu0
    %2186 = vmatprep.mubr.bf16.mxu0 0
    %2187 = vmatmul.mubr.bf16.gmra.mrb[0].mxu0 %v2068
    %v2188 = vpop.f32.mrb[0].mxu0
    %v2189 = vadd.f32 %v1966, %v2188
    %v2190 = vpop.f32.mrb[0].mxu0
    %v2191 = vpop.f32.mrb[0].mxu0
    %v2192 = vadd.f32 %v1969, %v2191
    %v2193 = vpop.f32.mrb[0].mxu0
    %2194 = vmatprep.mubr.bf16.mxu0 0
    %2195 = vmatmul.mubr.bf16.gmra.mrb[0].mxu0 %v2071
    %v2196 = vpop.f32.mrb[0].mxu0
    %v2197 = vadd.f32 %v1974, %v2196
    %v2198 = vpop.f32.mrb[0].mxu0
    %v2199 = vpop.f32.mrb[0].mxu0
    %v2200 = vadd.f32 %v1977, %v2199
    %v2201 = vpop.f32.mrb[0].mxu0
    %2202 = vmatprep.mubr.bf16.mxu0 0
    %2203 = vmatmul.mubr.bf16.gmra.mrb[0].mxu0 %v2074
    %v2204 = vpop.f32.mrb[0].mxu0
    %v2205 = vadd.f32 %v1982, %v2204
    %v2206 = vpop.f32.mrb[0].mxu0
    %v2207 = vpop.f32.mrb[0].mxu0
    %v2208 = vadd.f32 %v1985, %v2207
    %v2209 = vpop.f32.mrb[0].mxu0
    %2210 = vmatprep.mubr.bf16.mxu0 0
    %2211 = vmatmul.mubr.bf16.gmra.mrb[0].mxu0 %v2077
    %v2212 = vpop.f32.mrb[0].mxu0
    %v2213 = vadd.f32 %v1990, %v2212
    %v2214 = vpop.f32.mrb[0].mxu0
    %v2215 = vpop.f32.mrb[0].mxu0
    %v2216 = vadd.f32 %v1993, %v2215
    %v2217 = vpop.f32.mrb[0].mxu0
    %2218 = vmatprep.mubr.bf16.mxu0 0
    %2219 = vmatmul.mubr.bf16.gmra.mrb[0].mxu0 %v2080
    %v2220 = vpop.f32.mrb[0].mxu0
    %v2221 = vadd.f32 %v1998, %v2220
    %v2222 = vpop.f32.mrb[0].mxu0
    %v2223 = vpop.f32.mrb[0].mxu0
    %v2224 = vadd.f32 %v2001, %v2223
    %v2225 = vpop.f32.mrb[0].mxu0
    %2226 = vdwg.mxu0
    %s2227 = scalar_lea.vmem %s2, 96
    %v2228 = vld [vmem:[%s2227] sm:$0xf]
    %v2229 = vld [vmem:[%s2227 + $0x4] sm:$0xf]
    %v2230 = vld [vmem:[%s2227 + $0x8] sm:$0xf]
    %v2231 = vld [vmem:[%s2227 + $0xc] sm:$0xf]
    %v2232 = vld [vmem:[%s2227 + $0x10] sm:$0xf]
    %v2233 = vld [vmem:[%s2227 + $0x14] sm:$0xf]
    %v2234 = vld [vmem:[%s2227 + $0x18] sm:$0xf]
    %v2235 = vld [vmem:[%s2227 + $0x1c] sm:$0xf]
    %v2236 = vld [vmem:[%s2227 + $0x20] sm:$0xf]
    %v2237 = vld [vmem:[%s2227 + $0x24] sm:$0xf]
    %v2238 = vld [vmem:[%s2227 + $0x28] sm:$0xf]
    %v2239 = vld [vmem:[%s2227 + $0x2c] sm:$0xf]
    %v2252 = vunpack.c.l.b16 %v2228
    %v2253 = vunpack.c.l.b16 %v2229
    %v2254 = vunpack.c.l.b16 %v2230
    %v2255 = vunpack.c.l.b16 %v2231
    %v2256 = vunpack.c.l.b16 %v2232
    %v2257 = vunpack.c.l.b16 %v2233
    %v2258 = vunpack.c.l.b16 %v2234
    %v2259 = vunpack.c.l.b16 %v2235
    %v2260 = vunpack.c.l.b16 %v2236
    %v2261 = vunpack.c.l.b16 %v2237
    %v2262 = vunpack.c.l.b16 %v2238
    %v2263 = vunpack.c.l.b16 %v2239
    %v2264 = vpack.c.b16 %v2253, %v2252
    %v2265 = vpack.c.b16 %v2255, %v2254
    %v2266 = vpack.c.b16 %v2257, %v2256
    %v2267 = vpack.c.b16 %v2259, %v2258
    %v2268 = vpack.c.b16 %v2261, %v2260
    %v2269 = vpack.c.b16 %v2263, %v2262
    %v2277 = vsel %vm1816, %v1713, 0
    %v2280 = vsel %vm1816, %v1714, 0
    %v2283 = vsel %vm1816, %v1715, 0
    %v2286 = vsel %vm1816, %v1716, 0
    %v2289 = vsel %vm1816, %v1717, 0
    %v2292 = vsel %vm1816, %v1718, 0
    %v2295 = vsel %vm1816, %v1719, 0
    %v2298 = vsel %vm1816, %v1720, 0
    %v2301 = vsel %vm1816, %v1721, 0
    %v2304 = vsel %vm1816, %v1722, 0
    %v2307 = vsel %vm1816, %v1723, 0
    %v2310 = vsel %vm1816, %v1724, 0
    %v2313 = vsel %vm1816, %v1725, 0
    %v2316 = vsel %vm1816, %v1726, 0
    %2318 = vmatprep.subr.bf16.mxu0 0
    %2319 = vmatpush1.bf16.msra.mxu0 %v2264
    %2320 = vmatprep.subr.bf16.mxu0 0
    %2321 = vmatpush1.bf16.msra.mxu0 %v2265
    %2322 = vmatprep.subr.bf16.mxu0 0
    %2323 = vmatpush1.bf16.msra.mxu0 %v2266
    %2324 = vmatprep.subr.bf16.mxu0 0
    %2325 = vmatpush1.bf16.msra.mxu0 %v2267
    %2326 = vmatprep.subr.bf16.mxu0 0
    %2327 = vmatpush1.bf16.msra.mxu0 %v2268
    %2328 = vmatprep.subr.bf16.mxu0 0
    %2329 = vmatpush1.bf16.msra.mxu0 %v2269
    %2330 = vmatprep.subr.bf16.mxu0 0
    %2331 = vmatpush1.bf16.msra.mxu0 0
    %2332 = vmatprep.subr.bf16.mxu0 0
    %2333 = vmatpush1.bf16.msra.mxu0 0
    %2334 = vmatprep.subr.bf16.mxu0 0
    %2335 = vmatpush1.bf16.msra.mxu0 0
    %2336 = vmatprep.subr.bf16.mxu0 0
    %2337 = vmatpush1.bf16.msra.mxu0 0
    %2338 = vmatprep.subr.bf16.mxu0 0
    %2339 = vmatpush1.bf16.msra.mxu0 0
    %2340 = vmatprep.subr.bf16.mxu0 0
    %2341 = vmatpush1.bf16.msra.mxu0 0
    %2342 = vmatprep.subr.bf16.mxu0 0
    %2343 = vmatpush1.bf16.msra.mxu0 0
    %2344 = vmatprep.subr.bf16.mxu0 0
    %2345 = vmatpush1.bf16.msra.mxu0 0
    %2346 = vmatprep.subr.bf16.mxu0 0
    %2347 = vmatpush1.bf16.msra.mxu0 0
    %2348 = vmatprep.subr.bf16.mxu0 0
    %2349 = vmatpush1.bf16.msra.mxu0 0
    %2350 = vmatprep.mubr.bf16.mxu0 0
    %2351 = vmatmul.mubr.bf16.gmra.mrb[0].mxu0 %v2277
    %v2352 = vpop.f32.mrb[0].mxu0
    %v2353 = vadd.f32 0.0, %v2352
    %v2354 = vpop.f32.mrb[0].mxu0
    %v2355 = vpop.f32.mrb[0].mxu0
    %v2356 = vadd.f32 0.0, %v2355
    %v2357 = vpop.f32.mrb[0].mxu0
    %2358 = vmatprep.mubr.bf16.mxu0 0
    %2359 = vmatmul.mubr.bf16.gmra.mrb[0].mxu0 %v2280
    %v2360 = vpop.f32.mrb[0].mxu0
    %v2361 = vadd.f32 0.0, %v2360
    %v2362 = vpop.f32.mrb[0].mxu0
    %v2363 = vpop.f32.mrb[0].mxu0
    %v2364 = vadd.f32 0.0, %v2363
    %v2365 = vpop.f32.mrb[0].mxu0
    %2366 = vmatprep.mubr.bf16.mxu0 0
    %2367 = vmatmul.mubr.bf16.gmra.mrb[0].mxu0 %v2283
    %v2368 = vpop.f32.mrb[0].mxu0
    %v2369 = vadd.f32 0.0, %v2368
    %v2370 = vpop.f32.mrb[0].mxu0
    %v2371 = vpop.f32.mrb[0].mxu0
    %v2372 = vadd.f32 0.0, %v2371
    %v2373 = vpop.f32.mrb[0].mxu0
    %2374 = vmatprep.mubr.bf16.mxu0 0
    %2375 = vmatmul.mubr.bf16.gmra.mrb[0].mxu0 %v2286
    %v2376 = vpop.f32.mrb[0].mxu0
    %v2377 = vadd.f32 0.0, %v2376
    %v2378 = vpop.f32.mrb[0].mxu0
    %v2379 = vpop.f32.mrb[0].mxu0
    %v2380 = vadd.f32 0.0, %v2379
    %v2381 = vpop.f32.mrb[0].mxu0
    %2382 = vmatprep.mubr.bf16.mxu0 0
    %2383 = vmatmul.mubr.bf16.gmra.mrb[0].mxu0 %v2289
    %v2384 = vpop.f32.mrb[0].mxu0
    %v2385 = vadd.f32 0.0, %v2384
    %v2386 = vpop.f32.mrb[0].mxu0
    %v2387 = vpop.f32.mrb[0].mxu0
    %v2388 = vadd.f32 0.0, %v2387
    %v2389 = vpop.f32.mrb[0].mxu0
    %2390 = vmatprep.mubr.bf16.mxu0 0
    %2391 = vmatmul.mubr.bf16.gmra.mrb[0].mxu0 %v2292
    %v2392 = vpop.f32.mrb[0].mxu0
    %v2393 = vadd.f32 0.0, %v2392
    %v2394 = vpop.f32.mrb[0].mxu0
    %v2395 = vpop.f32.mrb[0].mxu0
    %v2396 = vadd.f32 0.0, %v2395
    %v2397 = vpop.f32.mrb[0].mxu0
    %2398 = vmatprep.mubr.bf16.mxu0 0
    %2399 = vmatmul.mubr.bf16.gmra.mrb[0].mxu0 %v2295
    %v2400 = vpop.f32.mrb[0].mxu0
    %v2401 = vadd.f32 0.0, %v2400
    %v2402 = vpop.f32.mrb[0].mxu0
    %v2403 = vpop.f32.mrb[0].mxu0
    %v2404 = vadd.f32 0.0, %v2403
    %v2405 = vpop.f32.mrb[0].mxu0
    %2406 = vmatprep.mubr.bf16.mxu0 0
    %2407 = vmatmul.mubr.bf16.gmra.mrb[0].mxu0 %v2298
    %v2408 = vpop.f32.mrb[0].mxu0
    %v2409 = vadd.f32 0.0, %v2408
    %v2410 = vpop.f32.mrb[0].mxu0
    %v2411 = vpop.f32.mrb[0].mxu0
    %v2412 = vadd.f32 0.0, %v2411
    %v2413 = vpop.f32.mrb[0].mxu0
    %2414 = vmatprep.mubr.bf16.mxu0 0
    %2415 = vmatmul.mubr.bf16.gmra.mrb[0].mxu0 %v2301
    %v2416 = vpop.f32.mrb[0].mxu0
    %v2417 = vadd.f32 0.0, %v2416
    %v2418 = vpop.f32.mrb[0].mxu0
    %v2419 = vpop.f32.mrb[0].mxu0
    %v2420 = vadd.f32 0.0, %v2419
    %v2421 = vpop.f32.mrb[0].mxu0
    %2422 = vmatprep.mubr.bf16.mxu0 0
    %2423 = vmatmul.mubr.bf16.gmra.mrb[0].mxu0 %v2304
    %v2424 = vpop.f32.mrb[0].mxu0
    %v2425 = vadd.f32 0.0, %v2424
    %v2426 = vpop.f32.mrb[0].mxu0
    %v2427 = vpop.f32.mrb[0].mxu0
    %v2428 = vadd.f32 0.0, %v2427
    %v2429 = vpop.f32.mrb[0].mxu0
    %2430 = vmatprep.mubr.bf16.mxu0 0
    %2431 = vmatmul.mubr.bf16.gmra.mrb[0].mxu0 %v2307
    %v2432 = vpop.f32.mrb[0].mxu0
    %v2433 = vadd.f32 0.0, %v2432
    %v2434 = vpop.f32.mrb[0].mxu0
    %v2435 = vpop.f32.mrb[0].mxu0
    %v2436 = vadd.f32 0.0, %v2435
    %v2437 = vpop.f32.mrb[0].mxu0
    %2438 = vmatprep.mubr.bf16.mxu0 0
    %2439 = vmatmul.mubr.bf16.gmra.mrb[0].mxu0 %v2310
    %v2440 = vpop.f32.mrb[0].mxu0
    %v2441 = vadd.f32 0.0, %v2440
    %v2442 = vpop.f32.mrb[0].mxu0
    %v2443 = vpop.f32.mrb[0].mxu0
    %v2444 = vadd.f32 0.0, %v2443
    %v2445 = vpop.f32.mrb[0].mxu0
    %2446 = vmatprep.mubr.bf16.mxu0 0
    %2447 = vmatmul.mubr.bf16.gmra.mrb[0].mxu0 %v2313
    %v2448 = vpop.f32.mrb[0].mxu0
    %v2449 = vadd.f32 0.0, %v2448
    %v2450 = vpop.f32.mrb[0].mxu0
    %v2451 = vpop.f32.mrb[0].mxu0
    %v2452 = vadd.f32 0.0, %v2451
    %v2453 = vpop.f32.mrb[0].mxu0
    %2454 = vmatprep.mubr.bf16.mxu0 0
    %2455 = vmatmul.mubr.bf16.gmra.mrb[0].mxu0 %v2316
    %v2456 = vpop.f32.mrb[0].mxu0
    %v2457 = vadd.f32 0.0, %v2456
    %v2458 = vpop.f32.mrb[0].mxu0
    %v2459 = vpop.f32.mrb[0].mxu0
    %v2460 = vadd.f32 0.0, %v2459
    %v2461 = vpop.f32.mrb[0].mxu0
    %2462 = vdwg.mxu0
    %v2463 = vadd.f32 %v2117, %v2353
    %v2464 = vadd.f32 %v2120, %v2356
    %v2465 = vadd.f32 %v2125, %v2361
    %v2466 = vadd.f32 %v2128, %v2364
    %v2467 = vadd.f32 %v2133, %v2369
    %v2468 = vadd.f32 %v2136, %v2372
    %v2469 = vadd.f32 %v2141, %v2377
    %v2470 = vadd.f32 %v2144, %v2380
    %v2471 = vadd.f32 %v2149, %v2385
    %v2472 = vadd.f32 %v2152, %v2388
    %v2473 = vadd.f32 %v2157, %v2393
    %v2474 = vadd.f32 %v2160, %v2396
    %v2475 = vadd.f32 %v2165, %v2401
    %v2476 = vadd.f32 %v2168, %v2404
    %v2477 = vadd.f32 %v2173, %v2409
    %v2478 = vadd.f32 %v2176, %v2412
    %v2479 = vadd.f32 %v2181, %v2417
    %v2480 = vadd.f32 %v2184, %v2420
    %v2481 = vadd.f32 %v2189, %v2425
    %v2482 = vadd.f32 %v2192, %v2428
    %v2483 = vadd.f32 %v2197, %v2433
    %v2484 = vadd.f32 %v2200, %v2436
    %v2485 = vadd.f32 %v2205, %v2441
    %v2486 = vadd.f32 %v2208, %v2444
    %v2487 = vadd.f32 %v2213, %v2449
    %v2488 = vadd.f32 %v2216, %v2452
    %v2489 = vadd.f32 %v2221, %v2457
    %v2490 = vadd.f32 %v2224, %v2460
    %s2491 = scalar_lea.vmem %s2, 144
    %v2492 = vld [vmem:[%s2491] sm:$0xf]
    %v2493 = vld [vmem:[%s2491 + $0x4] sm:$0xf]
    %v2494 = vld [vmem:[%s2491 + $0x8] sm:$0xf]
    %v2495 = vld [vmem:[%s2491 + $0xc] sm:$0xf]
    %v2496 = vld [vmem:[%s2491 + $0x10] sm:$0xf]
    %v2497 = vld [vmem:[%s2491 + $0x14] sm:$0xf]
    %v2498 = vld [vmem:[%s2491 + $0x18] sm:$0xf]
    %v2499 = vld [vmem:[%s2491 + $0x1c] sm:$0xf]
    %v2500 = vld [vmem:[%s2491 + $0x20] sm:$0xf]
    %v2501 = vld [vmem:[%s2491 + $0x24] sm:$0xf]
    %v2502 = vld [vmem:[%s2491 + $0x28] sm:$0xf]
    %v2503 = vld [vmem:[%s2491 + $0x2c] sm:$0xf]
    %v2516 = vunpack.c.l.b16 %v2492
    %v2517 = vunpack.c.l.b16 %v2493
    %v2518 = vunpack.c.l.b16 %v2494
    %v2519 = vunpack.c.l.b16 %v2495
    %v2520 = vunpack.c.l.b16 %v2496
    %v2521 = vunpack.c.l.b16 %v2497
    %v2522 = vunpack.c.l.b16 %v2498
    %v2523 = vunpack.c.l.b16 %v2499
    %v2524 = vunpack.c.l.b16 %v2500
    %v2525 = vunpack.c.l.b16 %v2501
    %v2526 = vunpack.c.l.b16 %v2502
    %v2527 = vunpack.c.l.b16 %v2503
    %v2528 = vpack.c.b16 %v2517, %v2516
    %v2529 = vpack.c.b16 %v2519, %v2518
    %v2530 = vpack.c.b16 %v2521, %v2520
    %v2531 = vpack.c.b16 %v2523, %v2522
    %v2532 = vpack.c.b16 %v2525, %v2524
    %v2533 = vpack.c.b16 %v2527, %v2526
    %v2541 = vsel %vm1816, %v1727, 0
    %v2544 = vsel %vm1816, %v1728, 0
    %v2547 = vsel %vm1816, %v1729, 0
    %v2550 = vsel %vm1816, %v1730, 0
    %v2553 = vsel %vm1816, %v1731, 0
    %v2556 = vsel %vm1816, %v1732, 0
    %v2559 = vsel %vm1816, %v1733, 0
    %v2562 = vsel %vm1816, %v1734, 0
    %v2565 = vsel %vm1816, %v1735, 0
    %v2568 = vsel %vm1816, %v1736, 0
    %v2571 = vsel %vm1816, %v1737, 0
    %v2574 = vsel %vm1816, %v1738, 0
    %v2577 = vsel %vm1816, %v1739, 0
    %v2580 = vsel %vm1816, %v1740, 0
    %2582 = vmatprep.subr.bf16.mxu0 0
    %2583 = vmatpush1.bf16.msra.mxu0 %v2528
    %2584 = vmatprep.subr.bf16.mxu0 0
    %2585 = vmatpush1.bf16.msra.mxu0 %v2529
    %2586 = vmatprep.subr.bf16.mxu0 0
    %2587 = vmatpush1.bf16.msra.mxu0 %v2530
    %2588 = vmatprep.subr.bf16.mxu0 0
    %2589 = vmatpush1.bf16.msra.mxu0 %v2531
    %2590 = vmatprep.subr.bf16.mxu0 0
    %2591 = vmatpush1.bf16.msra.mxu0 %v2532
    %2592 = vmatprep.subr.bf16.mxu0 0
    %2593 = vmatpush1.bf16.msra.mxu0 %v2533
    %2594 = vmatprep.subr.bf16.mxu0 0
    %2595 = vmatpush1.bf16.msra.mxu0 0
    %2596 = vmatprep.subr.bf16.mxu0 0
    %2597 = vmatpush1.bf16.msra.mxu0 0
    %2598 = vmatprep.subr.bf16.mxu0 0
    %2599 = vmatpush1.bf16.msra.mxu0 0
    %2600 = vmatprep.subr.bf16.mxu0 0
    %2601 = vmatpush1.bf16.msra.mxu0 0
    %2602 = vmatprep.subr.bf16.mxu0 0
    %2603 = vmatpush1.bf16.msra.mxu0 0
    %2604 = vmatprep.subr.bf16.mxu0 0
    %2605 = vmatpush1.bf16.msra.mxu0 0
    %2606 = vmatprep.subr.bf16.mxu0 0
    %2607 = vmatpush1.bf16.msra.mxu0 0
    %2608 = vmatprep.subr.bf16.mxu0 0
    %2609 = vmatpush1.bf16.msra.mxu0 0
    %2610 = vmatprep.subr.bf16.mxu0 0
    %2611 = vmatpush1.bf16.msra.mxu0 0
    %2612 = vmatprep.subr.bf16.mxu0 0
    %2613 = vmatpush1.bf16.msra.mxu0 0
    %2614 = vmatprep.mubr.bf16.mxu0 0
    %2615 = vmatmul.mubr.bf16.gmra.mrb[0].mxu0 %v2541
    %v2616 = vpop.f32.mrb[0].mxu0
    %v2617 = vadd.f32 0.0, %v2616
    %v2618 = vpop.f32.mrb[0].mxu0
    %v2619 = vpop.f32.mrb[0].mxu0
    %v2620 = vadd.f32 0.0, %v2619
    %v2621 = vpop.f32.mrb[0].mxu0
    %2622 = vmatprep.mubr.bf16.mxu0 0
    %2623 = vmatmul.mubr.bf16.gmra.mrb[0].mxu0 %v2544
    %v2624 = vpop.f32.mrb[0].mxu0
    %v2625 = vadd.f32 0.0, %v2624
    %v2626 = vpop.f32.mrb[0].mxu0
    %v2627 = vpop.f32.mrb[0].mxu0
    %v2628 = vadd.f32 0.0, %v2627
    %v2629 = vpop.f32.mrb[0].mxu0
    %2630 = vmatprep.mubr.bf16.mxu0 0
    %2631 = vmatmul.mubr.bf16.gmra.mrb[0].mxu0 %v2547
    %v2632 = vpop.f32.mrb[0].mxu0
    %v2633 = vadd.f32 0.0, %v2632
    %v2634 = vpop.f32.mrb[0].mxu0
    %v2635 = vpop.f32.mrb[0].mxu0
    %v2636 = vadd.f32 0.0, %v2635
    %v2637 = vpop.f32.mrb[0].mxu0
    %2638 = vmatprep.mubr.bf16.mxu0 0
    %2639 = vmatmul.mubr.bf16.gmra.mrb[0].mxu0 %v2550
    %v2640 = vpop.f32.mrb[0].mxu0
    %v2641 = vadd.f32 0.0, %v2640
    %v2642 = vpop.f32.mrb[0].mxu0
    %v2643 = vpop.f32.mrb[0].mxu0
    %v2644 = vadd.f32 0.0, %v2643
    %v2645 = vpop.f32.mrb[0].mxu0
    %2646 = vmatprep.mubr.bf16.mxu0 0
    %2647 = vmatmul.mubr.bf16.gmra.mrb[0].mxu0 %v2553
    %v2648 = vpop.f32.mrb[0].mxu0
    %v2649 = vadd.f32 0.0, %v2648
    %v2650 = vpop.f32.mrb[0].mxu0
    %v2651 = vpop.f32.mrb[0].mxu0
    %v2652 = vadd.f32 0.0, %v2651
    %v2653 = vpop.f32.mrb[0].mxu0
    %2654 = vmatprep.mubr.bf16.mxu0 0
    %2655 = vmatmul.mubr.bf16.gmra.mrb[0].mxu0 %v2556
    %v2656 = vpop.f32.mrb[0].mxu0
    %v2657 = vadd.f32 0.0, %v2656
    %v2658 = vpop.f32.mrb[0].mxu0
    %v2659 = vpop.f32.mrb[0].mxu0
    %v2660 = vadd.f32 0.0, %v2659
    %v2661 = vpop.f32.mrb[0].mxu0
    %2662 = vmatprep.mubr.bf16.mxu0 0
    %2663 = vmatmul.mubr.bf16.gmra.mrb[0].mxu0 %v2559
    %v2664 = vpop.f32.mrb[0].mxu0
    %v2665 = vadd.f32 0.0, %v2664
    %v2666 = vpop.f32.mrb[0].mxu0
    %v2667 = vpop.f32.mrb[0].mxu0
    %v2668 = vadd.f32 0.0, %v2667
    %v2669 = vpop.f32.mrb[0].mxu0
    %2670 = vmatprep.mubr.bf16.mxu0 0
    %2671 = vmatmul.mubr.bf16.gmra.mrb[0].mxu0 %v2562
    %v2672 = vpop.f32.mrb[0].mxu0
    %v2673 = vadd.f32 0.0, %v2672
    %v2674 = vpop.f32.mrb[0].mxu0
    %v2675 = vpop.f32.mrb[0].mxu0
    %v2676 = vadd.f32 0.0, %v2675
    %v2677 = vpop.f32.mrb[0].mxu0
    %2678 = vmatprep.mubr.bf16.mxu0 0
    %2679 = vmatmul.mubr.bf16.gmra.mrb[0].mxu0 %v2565
    %v2680 = vpop.f32.mrb[0].mxu0
    %v2681 = vadd.f32 0.0, %v2680
    %v2682 = vpop.f32.mrb[0].mxu0
    %v2683 = vpop.f32.mrb[0].mxu0
    %v2684 = vadd.f32 0.0, %v2683
    %v2685 = vpop.f32.mrb[0].mxu0
    %2686 = vmatprep.mubr.bf16.mxu0 0
    %2687 = vmatmul.mubr.bf16.gmra.mrb[0].mxu0 %v2568
    %v2688 = vpop.f32.mrb[0].mxu0
    %v2689 = vadd.f32 0.0, %v2688
    %v2690 = vpop.f32.mrb[0].mxu0
    %v2691 = vpop.f32.mrb[0].mxu0
    %v2692 = vadd.f32 0.0, %v2691
    %v2693 = vpop.f32.mrb[0].mxu0
    %2694 = vmatprep.mubr.bf16.mxu0 0
    %2695 = vmatmul.mubr.bf16.gmra.mrb[0].mxu0 %v2571
    %v2696 = vpop.f32.mrb[0].mxu0
    %v2697 = vadd.f32 0.0, %v2696
    %v2698 = vpop.f32.mrb[0].mxu0
    %v2699 = vpop.f32.mrb[0].mxu0
    %v2700 = vadd.f32 0.0, %v2699
    %v2701 = vpop.f32.mrb[0].mxu0
    %2702 = vmatprep.mubr.bf16.mxu0 0
    %2703 = vmatmul.mubr.bf16.gmra.mrb[0].mxu0 %v2574
    %v2704 = vpop.f32.mrb[0].mxu0
    %v2705 = vadd.f32 0.0, %v2704
    %v2706 = vpop.f32.mrb[0].mxu0
    %v2707 = vpop.f32.mrb[0].mxu0
    %v2708 = vadd.f32 0.0, %v2707
    %v2709 = vpop.f32.mrb[0].mxu0
    %2710 = vmatprep.mubr.bf16.mxu0 0
    %2711 = vmatmul.mubr.bf16.gmra.mrb[0].mxu0 %v2577
    %v2712 = vpop.f32.mrb[0].mxu0
    %v2713 = vadd.f32 0.0, %v2712
    %v2714 = vpop.f32.mrb[0].mxu0
    %v2715 = vpop.f32.mrb[0].mxu0
    %v2716 = vadd.f32 0.0, %v2715
    %v2717 = vpop.f32.mrb[0].mxu0
    %2718 = vmatprep.mubr.bf16.mxu0 0
    %2719 = vmatmul.mubr.bf16.gmra.mrb[0].mxu0 %v2580
    %v2720 = vpop.f32.mrb[0].mxu0
    %v2721 = vadd.f32 0.0, %v2720
    %v2722 = vpop.f32.mrb[0].mxu0
    %v2723 = vpop.f32.mrb[0].mxu0
    %v2724 = vadd.f32 0.0, %v2723
    %v2725 = vpop.f32.mrb[0].mxu0
    %2726 = vdwg.mxu0
    %v2727 = vadd.f32 %v2463, %v2617
    %v2728 = vadd.f32 %v2464, %v2620
    %v2729 = vadd.f32 %v2465, %v2625
    %v2730 = vadd.f32 %v2466, %v2628
    %v2731 = vadd.f32 %v2467, %v2633
    %v2732 = vadd.f32 %v2468, %v2636
    %v2733 = vadd.f32 %v2469, %v2641
    %v2734 = vadd.f32 %v2470, %v2644
    %v2735 = vadd.f32 %v2471, %v2649
    %v2736 = vadd.f32 %v2472, %v2652
    %v2737 = vadd.f32 %v2473, %v2657
    %v2738 = vadd.f32 %v2474, %v2660
    %v2739 = vadd.f32 %v2475, %v2665
    %v2740 = vadd.f32 %v2476, %v2668
    %v2741 = vadd.f32 %v2477, %v2673
    %v2742 = vadd.f32 %v2478, %v2676
    %v2743 = vadd.f32 %v2479, %v2681
    %v2744 = vadd.f32 %v2480, %v2684
    %v2745 = vadd.f32 %v2481, %v2689
    %v2746 = vadd.f32 %v2482, %v2692
    %v2747 = vadd.f32 %v2483, %v2697
    %v2748 = vadd.f32 %v2484, %v2700
    %v2749 = vadd.f32 %v2485, %v2705
    %v2750 = vadd.f32 %v2486, %v2708
    %v2751 = vadd.f32 %v2487, %v2713
    %v2752 = vadd.f32 %v2488, %v2716
    %v2753 = vadd.f32 %v2489, %v2721
    %v2754 = vadd.f32 %v2490, %v2724
    %s2755 = scalar_lea.vmem %s2, 192
    %v2756 = vld [vmem:[%s2755] sm:$0xf]
    %v2757 = vld [vmem:[%s2755 + $0x4] sm:$0xf]
    %v2758 = vld [vmem:[%s2755 + $0x8] sm:$0xf]
    %v2759 = vld [vmem:[%s2755 + $0xc] sm:$0xf]
    %v2760 = vld [vmem:[%s2755 + $0x10] sm:$0xf]
    %v2761 = vld [vmem:[%s2755 + $0x14] sm:$0xf]
    %v2762 = vld [vmem:[%s2755 + $0x18] sm:$0xf]
    %v2763 = vld [vmem:[%s2755 + $0x1c] sm:$0xf]
    %v2764 = vld [vmem:[%s2755 + $0x20] sm:$0xf]
    %v2765 = vld [vmem:[%s2755 + $0x24] sm:$0xf]
    %v2766 = vld [vmem:[%s2755 + $0x28] sm:$0xf]
    %v2767 = vld [vmem:[%s2755 + $0x2c] sm:$0xf]
    %v2780 = vunpack.c.l.b16 %v2756
    %v2781 = vunpack.c.l.b16 %v2757
    %v2782 = vunpack.c.l.b16 %v2758
    %v2783 = vunpack.c.l.b16 %v2759
    %v2784 = vunpack.c.l.b16 %v2760
    %v2785 = vunpack.c.l.b16 %v2761
    %v2786 = vunpack.c.l.b16 %v2762
    %v2787 = vunpack.c.l.b16 %v2763
    %v2788 = vunpack.c.l.b16 %v2764
    %v2789 = vunpack.c.l.b16 %v2765
    %v2790 = vunpack.c.l.b16 %v2766
    %v2791 = vunpack.c.l.b16 %v2767
    %v2792 = vpack.c.b16 %v2781, %v2780
    %v2793 = vpack.c.b16 %v2783, %v2782
    %v2794 = vpack.c.b16 %v2785, %v2784
    %v2795 = vpack.c.b16 %v2787, %v2786
    %v2796 = vpack.c.b16 %v2789, %v2788
    %v2797 = vpack.c.b16 %v2791, %v2790
    %v2805 = vsel %vm1816, %v1741, 0
    %v2808 = vsel %vm1816, %v1742, 0
    %v2811 = vsel %vm1816, %v1743, 0
    %v2814 = vsel %vm1816, %v1744, 0
    %v2817 = vsel %vm1816, %v1745, 0
    %v2820 = vsel %vm1816, %v1746, 0
    %v2823 = vsel %vm1816, %v1747, 0
    %v2826 = vsel %vm1816, %v1748, 0
    %v2829 = vsel %vm1816, %v1749, 0
    %v2832 = vsel %vm1816, %v1750, 0
    %v2835 = vsel %vm1816, %v1751, 0
    %v2838 = vsel %vm1816, %v1752, 0
    %v2841 = vsel %vm1816, %v1753, 0
    %v2844 = vsel %vm1816, %v1754, 0
    %2846 = vmatprep.subr.bf16.mxu0 0
    %2847 = vmatpush1.bf16.msra.mxu0 %v2792
    %2848 = vmatprep.subr.bf16.mxu0 0
    %2849 = vmatpush1.bf16.msra.mxu0 %v2793
    %2850 = vmatprep.subr.bf16.mxu0 0
    %2851 = vmatpush1.bf16.msra.mxu0 %v2794
    %2852 = vmatprep.subr.bf16.mxu0 0
    %2853 = vmatpush1.bf16.msra.mxu0 %v2795
    %2854 = vmatprep.subr.bf16.mxu0 0
    %2855 = vmatpush1.bf16.msra.mxu0 %v2796
    %2856 = vmatprep.subr.bf16.mxu0 0
    %2857 = vmatpush1.bf16.msra.mxu0 %v2797
    %2858 = vmatprep.subr.bf16.mxu0 0
    %2859 = vmatpush1.bf16.msra.mxu0 0
    %2860 = vmatprep.subr.bf16.mxu0 0
    %2861 = vmatpush1.bf16.msra.mxu0 0
    %2862 = vmatprep.subr.bf16.mxu0 0
    %2863 = vmatpush1.bf16.msra.mxu0 0
    %2864 = vmatprep.subr.bf16.mxu0 0
    %2865 = vmatpush1.bf16.msra.mxu0 0
    %2866 = vmatprep.subr.bf16.mxu0 0
    %2867 = vmatpush1.bf16.msra.mxu0 0
    %2868 = vmatprep.subr.bf16.mxu0 0
    %2869 = vmatpush1.bf16.msra.mxu0 0
    %2870 = vmatprep.subr.bf16.mxu0 0
    %2871 = vmatpush1.bf16.msra.mxu0 0
    %2872 = vmatprep.subr.bf16.mxu0 0
    %2873 = vmatpush1.bf16.msra.mxu0 0
    %2874 = vmatprep.subr.bf16.mxu0 0
    %2875 = vmatpush1.bf16.msra.mxu0 0
    %2876 = vmatprep.subr.bf16.mxu0 0
    %2877 = vmatpush1.bf16.msra.mxu0 0
    %2878 = vmatprep.mubr.bf16.mxu0 0
    %2879 = vmatmul.mubr.bf16.gmra.mrb[0].mxu0 %v2805
    %v2880 = vpop.f32.mrb[0].mxu0
    %v2881 = vadd.f32 0.0, %v2880
    %v2882 = vpop.f32.mrb[0].mxu0
    %v2883 = vpop.f32.mrb[0].mxu0
    %v2884 = vadd.f32 0.0, %v2883
    %v2885 = vpop.f32.mrb[0].mxu0
    %2886 = vmatprep.mubr.bf16.mxu0 0
    %2887 = vmatmul.mubr.bf16.gmra.mrb[0].mxu0 %v2808
    %v2888 = vpop.f32.mrb[0].mxu0
    %v2889 = vadd.f32 0.0, %v2888
    %v2890 = vpop.f32.mrb[0].mxu0
    %v2891 = vpop.f32.mrb[0].mxu0
    %v2892 = vadd.f32 0.0, %v2891
    %v2893 = vpop.f32.mrb[0].mxu0
    %2894 = vmatprep.mubr.bf16.mxu0 0
    %2895 = vmatmul.mubr.bf16.gmra.mrb[0].mxu0 %v2811
    %v2896 = vpop.f32.mrb[0].mxu0
    %v2897 = vadd.f32 0.0, %v2896
    %v2898 = vpop.f32.mrb[0].mxu0
    %v2899 = vpop.f32.mrb[0].mxu0
    %v2900 = vadd.f32 0.0, %v2899
    %v2901 = vpop.f32.mrb[0].mxu0
    %2902 = vmatprep.mubr.bf16.mxu0 0
    %2903 = vmatmul.mubr.bf16.gmra.mrb[0].mxu0 %v2814
    %v2904 = vpop.f32.mrb[0].mxu0
    %v2905 = vadd.f32 0.0, %v2904
    %v2906 = vpop.f32.mrb[0].mxu0
    %v2907 = vpop.f32.mrb[0].mxu0
    %v2908 = vadd.f32 0.0, %v2907
    %v2909 = vpop.f32.mrb[0].mxu0
    %2910 = vmatprep.mubr.bf16.mxu0 0
    %2911 = vmatmul.mubr.bf16.gmra.mrb[0].mxu0 %v2817
    %v2912 = vpop.f32.mrb[0].mxu0
    %v2913 = vadd.f32 0.0, %v2912
    %v2914 = vpop.f32.mrb[0].mxu0
    %v2915 = vpop.f32.mrb[0].mxu0
    %v2916 = vadd.f32 0.0, %v2915
    %v2917 = vpop.f32.mrb[0].mxu0
    %2918 = vmatprep.mubr.bf16.mxu0 0
    %2919 = vmatmul.mubr.bf16.gmra.mrb[0].mxu0 %v2820
    %v2920 = vpop.f32.mrb[0].mxu0
    %v2921 = vadd.f32 0.0, %v2920
    %v2922 = vpop.f32.mrb[0].mxu0
    %v2923 = vpop.f32.mrb[0].mxu0
    %v2924 = vadd.f32 0.0, %v2923
    %v2925 = vpop.f32.mrb[0].mxu0
    %2926 = vmatprep.mubr.bf16.mxu0 0
    %2927 = vmatmul.mubr.bf16.gmra.mrb[0].mxu0 %v2823
    %v2928 = vpop.f32.mrb[0].mxu0
    %v2929 = vadd.f32 0.0, %v2928
    %v2930 = vpop.f32.mrb[0].mxu0
    %v2931 = vpop.f32.mrb[0].mxu0
    %v2932 = vadd.f32 0.0, %v2931
    %v2933 = vpop.f32.mrb[0].mxu0
    %2934 = vmatprep.mubr.bf16.mxu0 0
    %2935 = vmatmul.mubr.bf16.gmra.mrb[0].mxu0 %v2826
    %v2936 = vpop.f32.mrb[0].mxu0
    %v2937 = vadd.f32 0.0, %v2936
    %v2938 = vpop.f32.mrb[0].mxu0
    %v2939 = vpop.f32.mrb[0].mxu0
    %v2940 = vadd.f32 0.0, %v2939
    %v2941 = vpop.f32.mrb[0].mxu0
    %2942 = vmatprep.mubr.bf16.mxu0 0
    %2943 = vmatmul.mubr.bf16.gmra.mrb[0].mxu0 %v2829
    %v2944 = vpop.f32.mrb[0].mxu0
    %v2945 = vadd.f32 0.0, %v2944
    %v2946 = vpop.f32.mrb[0].mxu0
    %v2947 = vpop.f32.mrb[0].mxu0
    %v2948 = vadd.f32 0.0, %v2947
    %v2949 = vpop.f32.mrb[0].mxu0
    %2950 = vmatprep.mubr.bf16.mxu0 0
    %2951 = vmatmul.mubr.bf16.gmra.mrb[0].mxu0 %v2832
    %v2952 = vpop.f32.mrb[0].mxu0
    %v2953 = vadd.f32 0.0, %v2952
    %v2954 = vpop.f32.mrb[0].mxu0
    %v2955 = vpop.f32.mrb[0].mxu0
    %v2956 = vadd.f32 0.0, %v2955
    %v2957 = vpop.f32.mrb[0].mxu0
    %2958 = vmatprep.mubr.bf16.mxu0 0
    %2959 = vmatmul.mubr.bf16.gmra.mrb[0].mxu0 %v2835
    %v2960 = vpop.f32.mrb[0].mxu0
    %v2961 = vadd.f32 0.0, %v2960
    %v2962 = vpop.f32.mrb[0].mxu0
    %v2963 = vpop.f32.mrb[0].mxu0
    %v2964 = vadd.f32 0.0, %v2963
    %v2965 = vpop.f32.mrb[0].mxu0
    %2966 = vmatprep.mubr.bf16.mxu0 0
    %2967 = vmatmul.mubr.bf16.gmra.mrb[0].mxu0 %v2838
    %v2968 = vpop.f32.mrb[0].mxu0
    %v2969 = vadd.f32 0.0, %v2968
    %v2970 = vpop.f32.mrb[0].mxu0
    %v2971 = vpop.f32.mrb[0].mxu0
    %v2972 = vadd.f32 0.0, %v2971
    %v2973 = vpop.f32.mrb[0].mxu0
    %2974 = vmatprep.mubr.bf16.mxu0 0
    %2975 = vmatmul.mubr.bf16.gmra.mrb[0].mxu0 %v2841
    %v2976 = vpop.f32.mrb[0].mxu0
    %v2977 = vadd.f32 0.0, %v2976
    %v2978 = vpop.f32.mrb[0].mxu0
    %v2979 = vpop.f32.mrb[0].mxu0
    %v2980 = vadd.f32 0.0, %v2979
    %v2981 = vpop.f32.mrb[0].mxu0
    %2982 = vmatprep.mubr.bf16.mxu0 0
    %2983 = vmatmul.mubr.bf16.gmra.mrb[0].mxu0 %v2844
    %v2984 = vpop.f32.mrb[0].mxu0
    %v2985 = vadd.f32 0.0, %v2984
    %v2986 = vpop.f32.mrb[0].mxu0
    %v2987 = vpop.f32.mrb[0].mxu0
    %v2988 = vadd.f32 0.0, %v2987
    %v2989 = vpop.f32.mrb[0].mxu0
    %2990 = vdwg.mxu0
    %v2991 = vadd.f32 %v2727, %v2881
    %v2992 = vadd.f32 %v2728, %v2884
    %v2993 = vadd.f32 %v2729, %v2889
    %v2994 = vadd.f32 %v2730, %v2892
    %v2995 = vadd.f32 %v2731, %v2897
    %v2996 = vadd.f32 %v2732, %v2900
    %v2997 = vadd.f32 %v2733, %v2905
    %v2998 = vadd.f32 %v2734, %v2908
    %v2999 = vadd.f32 %v2735, %v2913
    %v3000 = vadd.f32 %v2736, %v2916
    %v3001 = vadd.f32 %v2737, %v2921
    %v3002 = vadd.f32 %v2738, %v2924
    %v3003 = vadd.f32 %v2739, %v2929
    %v3004 = vadd.f32 %v2740, %v2932
    %v3005 = vadd.f32 %v2741, %v2937
    %v3006 = vadd.f32 %v2742, %v2940
    %v3007 = vadd.f32 %v2743, %v2945
    %v3008 = vadd.f32 %v2744, %v2948
    %v3009 = vadd.f32 %v2745, %v2953
    %v3010 = vadd.f32 %v2746, %v2956
    %v3011 = vadd.f32 %v2747, %v2961
    %v3012 = vadd.f32 %v2748, %v2964
    %v3013 = vadd.f32 %v2749, %v2969
    %v3014 = vadd.f32 %v2750, %v2972
    %v3015 = vadd.f32 %v2751, %v2977
    %v3016 = vadd.f32 %v2752, %v2980
    %v3017 = vadd.f32 %v2753, %v2985
    %v3018 = vadd.f32 %v2754, %v2988
    %v3019 = vmax.f32 %v2991, 0.0
    %v3020 = vmax.f32 %v2992, 0.0
    %v3021 = vmax.f32 %v2993, 0.0
    %v3022 = vmax.f32 %v2994, 0.0
    %v3023 = vmax.f32 %v2995, 0.0
    %v3024 = vmax.f32 %v2996, 0.0
    %v3025 = vmax.f32 %v2997, 0.0
    %v3026 = vmax.f32 %v2998, 0.0
    %v3027 = vmax.f32 %v2999, 0.0
    %v3028 = vmax.f32 %v3000, 0.0
    %v3029 = vmax.f32 %v3001, 0.0
    %v3030 = vmax.f32 %v3002, 0.0
    %v3031 = vmax.f32 %v3003, 0.0
    %v3032 = vmax.f32 %v3004, 0.0
    %v3033 = vmax.f32 %v3005, 0.0
    %v3034 = vmax.f32 %v3006, 0.0
    %v3035 = vmax.f32 %v3007, 0.0
    %v3036 = vmax.f32 %v3008, 0.0
    %v3037 = vmax.f32 %v3009, 0.0
    %v3038 = vmax.f32 %v3010, 0.0
    %v3039 = vmax.f32 %v3011, 0.0
    %v3040 = vmax.f32 %v3012, 0.0
    %v3041 = vmax.f32 %v3013, 0.0
    %v3042 = vmax.f32 %v3014, 0.0
    %v3043 = vmax.f32 %v3015, 0.0
    %v3044 = vmax.f32 %v3016, 0.0
    %v3045 = vmax.f32 %v3017, 0.0
    %v3046 = vmax.f32 %v3018, 0.0
    %v3047 = vpack.c.bf16 %v3020, %v3019
    %v3048 = vpack.c.bf16 %v3022, %v3021
    %v3049 = vpack.c.bf16 %v3024, %v3023
    %v3050 = vpack.c.bf16 %v3026, %v3025
    %v3051 = vpack.c.bf16 %v3028, %v3027
    %v3052 = vpack.c.bf16 %v3030, %v3029
    %v3053 = vpack.c.bf16 %v3032, %v3031
    %v3054 = vpack.c.bf16 %v3034, %v3033
    %v3055 = vpack.c.bf16 %v3036, %v3035
    %v3056 = vpack.c.bf16 %v3038, %v3037
    %v3057 = vpack.c.bf16 %v3040, %v3039
    %v3058 = vpack.c.bf16 %v3042, %v3041
    %v3059 = vpack.c.bf16 %v3044, %v3043
    %v3060 = vpack.c.bf16 %v3046, %v3045
    %v3061 = vld [vmem:[%s3] sm:$0xff]
    %v3062 = vld [vmem:[%s3 + $0x8] sm:$0xff]
    %v3063 = vld [vmem:[%s3 + $0x10] sm:$0xff]
    %v3064 = vld [vmem:[%s3 + $0x18] sm:$0xff]
    %v3065 = vld [vmem:[%s3 + $0x20] sm:$0xff]
    %v3066 = vld [vmem:[%s3 + $0x28] sm:$0xff]
    %v3067 = vld [vmem:[%s3 + $0x30] sm:$0xff]
    %v3068 = vld [vmem:[%s3 + $0x38] sm:$0xff]
    %v3069 = vld [vmem:[%s3 + $0x40] sm:$0xff]
    %v3070 = vld [vmem:[%s3 + $0x48] sm:$0xff]
    %v3071 = vld [vmem:[%s3 + $0x50] sm:$0xff]
    %v3072 = vld [vmem:[%s3 + $0x58] sm:$0xff]
    %v3073 = vld [vmem:[%s3 + $0x60] sm:$0xff]
    %v3074 = vld [vmem:[%s3 + $0x68] sm:$0xff]
    %v3075 = vld [vmem:[%s3 + $0x70] sm:$0xff]
    %v3076 = vld [vmem:[%s3 + $0x78] sm:$0xff]
    %v3077 = vld [vmem:[%s3 + $0x80] sm:$0xff]
    %v3078 = vld [vmem:[%s3 + $0x88] sm:$0xff]
    %v3079 = vld [vmem:[%s3 + $0x90] sm:$0xff]
    %v3080 = vld [vmem:[%s3 + $0x98] sm:$0xff]
    %v3081 = vld [vmem:[%s3 + $0xa0] sm:$0xff]
    %v3082 = vld [vmem:[%s3 + $0xa8] sm:$0xff]
    %v3083 = vld [vmem:[%s3 + $0xb0] sm:$0xff]
    %v3084 = vld [vmem:[%s3 + $0xb8] sm:$0xff]
    %v3085 = vld [vmem:[%s3 + $0xc0] sm:$0xff]
    %v3086 = vld [vmem:[%s3 + $0xc8] sm:$0xff]
    %v3087 = vld [vmem:[%s3 + $0xd0] sm:$0xff]
    %v3088 = vld [vmem:[%s3 + $0xd8] sm:$0xff]
    %v3089 = vld [vmem:[%s3 + $0xe0] sm:$0xff]
    %v3090 = vld [vmem:[%s3 + $0xe8] sm:$0xff]
    %v3091 = vld [vmem:[%s3 + $0xf0] sm:$0xff]
    %v3092 = vld [vmem:[%s3 + $0xf8] sm:$0xff]
    %v3093 = vld [vmem:[%s3 + $0x100] sm:$0xff]
    %v3094 = vld [vmem:[%s3 + $0x108] sm:$0xff]
    %v3095 = vld [vmem:[%s3 + $0x110] sm:$0xff]
    %v3096 = vld [vmem:[%s3 + $0x118] sm:$0xff]
    %v3097 = vld [vmem:[%s3 + $0x120] sm:$0xff]
    %v3098 = vld [vmem:[%s3 + $0x128] sm:$0xff]
    %v3099 = vld [vmem:[%s3 + $0x130] sm:$0xff]
    %v3100 = vld [vmem:[%s3 + $0x138] sm:$0xff]
    %v3101 = vld [vmem:[%s3 + $0x140] sm:$0xff]
    %v3102 = vld [vmem:[%s3 + $0x148] sm:$0xff]
    %v3103 = vld [vmem:[%s3 + $0x150] sm:$0xff]
    %v3104 = vld [vmem:[%s3 + $0x158] sm:$0xff]
    %v3105 = vld [vmem:[%s3 + $0x160] sm:$0xff]
    %v3106 = vld [vmem:[%s3 + $0x168] sm:$0xff]
    %v3107 = vld [vmem:[%s3 + $0x170] sm:$0xff]
    %v3108 = vld [vmem:[%s3 + $0x178] sm:$0xff]
    %v3109 = vld [vmem:[%s3 + $0x180] sm:$0xff]
    %v3110 = vld [vmem:[%s3 + $0x188] sm:$0xff]
    %v3111 = vld [vmem:[%s3 + $0x190] sm:$0xff]
    %v3112 = vld [vmem:[%s3 + $0x198] sm:$0xff]
    %v3113 = vld [vmem:[%s3 + $0x1a0] sm:$0xff]
    %v3114 = vld [vmem:[%s3 + $0x1a8] sm:$0xff]
    %v3115 = vld [vmem:[%s3 + $0x1b0] sm:$0xff]
    %v3116 = vld [vmem:[%s3 + $0x1b8] sm:$0xff]
    %v3117 = vld [vmem:[%s3 + $0x1c0] sm:$0xff]
    %v3118 = vld [vmem:[%s3 + $0x1c8] sm:$0xff]
    %v3119 = vld [vmem:[%s3 + $0x1d0] sm:$0xff]
    %v3120 = vld [vmem:[%s3 + $0x1d8] sm:$0xff]
    %v3121 = vld [vmem:[%s3 + $0x1e0] sm:$0xff]
    %v3122 = vld [vmem:[%s3 + $0x1e8] sm:$0xff]
    %v3123 = vld [vmem:[%s3 + $0x1f0] sm:$0xff]
    %v3124 = vld [vmem:[%s3 + $0x1f8] sm:$0xff]
    %v3125 = vld [vmem:[%s3 + $0x200] sm:$0xff]
    %v3126 = vld [vmem:[%s3 + $0x208] sm:$0xff]
    %v3127 = vld [vmem:[%s3 + $0x210] sm:$0xff]
    %v3128 = vld [vmem:[%s3 + $0x218] sm:$0xff]
    %v3129 = vld [vmem:[%s3 + $0x220] sm:$0xff]
    %v3130 = vld [vmem:[%s3 + $0x228] sm:$0xff]
    %v3131 = vld [vmem:[%s3 + $0x230] sm:$0xff]
    %v3132 = vld [vmem:[%s3 + $0x238] sm:$0xff]
    %v3133 = vld [vmem:[%s3 + $0x240] sm:$0xff]
    %v3134 = vld [vmem:[%s3 + $0x248] sm:$0xff]
    %v3135 = vld [vmem:[%s3 + $0x250] sm:$0xff]
    %v3136 = vld [vmem:[%s3 + $0x258] sm:$0xff]
    %v3137 = vld [vmem:[%s3 + $0x260] sm:$0xff]
    %v3138 = vld [vmem:[%s3 + $0x268] sm:$0xff]
    %v3139 = vld [vmem:[%s3 + $0x270] sm:$0xff]
    %v3140 = vld [vmem:[%s3 + $0x278] sm:$0xff]
    %v3141 = vld [vmem:[%s3 + $0x280] sm:$0xff]
    %v3142 = vld [vmem:[%s3 + $0x288] sm:$0xff]
    %v3143 = vld [vmem:[%s3 + $0x290] sm:$0xff]
    %v3144 = vld [vmem:[%s3 + $0x298] sm:$0xff]
    %v3145 = vld [vmem:[%s3 + $0x2a0] sm:$0xff]
    %v3146 = vld [vmem:[%s3 + $0x2a8] sm:$0xff]
    %v3147 = vld [vmem:[%s3 + $0x2b0] sm:$0xff]
    %v3148 = vld [vmem:[%s3 + $0x2b8] sm:$0xff]
    %v3149 = vld [vmem:[%s3 + $0x2c0] sm:$0xff]
    %v3150 = vld [vmem:[%s3 + $0x2c8] sm:$0xff]
    %v3151 = vld [vmem:[%s3 + $0x2d0] sm:$0xff]
    %v3152 = vld [vmem:[%s3 + $0x2d8] sm:$0xff]
    %v3153 = vld [vmem:[%s3 + $0x2e0] sm:$0xff]
    %v3154 = vld [vmem:[%s3 + $0x2e8] sm:$0xff]
    %v3155 = vld [vmem:[%s3 + $0x2f0] sm:$0xff]
    %v3156 = vld [vmem:[%s3 + $0x2f8] sm:$0xff]
    %v3157 = vld [vmem:[%s3 + $0x300] sm:$0xff]
    %v3158 = vld [vmem:[%s3 + $0x308] sm:$0xff]
    %v3159 = vld [vmem:[%s3 + $0x310] sm:$0xff]
    %v3160 = vld [vmem:[%s3 + $0x318] sm:$0xff]
    %v3261 = vunpack.c.l.b16 %v3061
    %v3262 = vunpack.c.h.b16 %v3061
    %v3263 = vunpack.c.l.b16 %v3062
    %v3264 = vunpack.c.h.b16 %v3062
    %v3265 = vunpack.c.l.b16 %v3063
    %v3266 = vunpack.c.h.b16 %v3063
    %v3267 = vunpack.c.l.b16 %v3064
    %v3268 = vunpack.c.h.b16 %v3064
    %v3269 = vunpack.c.l.b16 %v3065
    %v3270 = vunpack.c.h.b16 %v3065
    %v3271 = vunpack.c.l.b16 %v3066
    %v3272 = vunpack.c.h.b16 %v3066
    %v3273 = vunpack.c.l.b16 %v3067
    %v3274 = vunpack.c.h.b16 %v3067
    %v3275 = vunpack.c.l.b16 %v3068
    %v3276 = vunpack.c.h.b16 %v3068
    %v3277 = vunpack.c.l.b16 %v3069
    %v3278 = vunpack.c.h.b16 %v3069
    %v3279 = vunpack.c.l.b16 %v3070
    %v3280 = vunpack.c.h.b16 %v3070
    %v3281 = vunpack.c.l.b16 %v3071
    %v3282 = vunpack.c.h.b16 %v3071
    %v3283 = vunpack.c.l.b16 %v3072
    %v3284 = vunpack.c.h.b16 %v3072
    %v3285 = vunpack.c.l.b16 %v3073
    %v3286 = vunpack.c.h.b16 %v3073
    %v3287 = vunpack.c.l.b16 %v3074
    %v3288 = vunpack.c.h.b16 %v3074
    %v3289 = vunpack.c.l.b16 %v3075
    %v3290 = vunpack.c.h.b16 %v3075
    %v3291 = vunpack.c.l.b16 %v3076
    %v3292 = vunpack.c.h.b16 %v3076
    %v3293 = vunpack.c.l.b16 %v3077
    %v3294 = vunpack.c.h.b16 %v3077
    %v3295 = vunpack.c.l.b16 %v3078
    %v3296 = vunpack.c.h.b16 %v3078
    %v3297 = vunpack.c.l.b16 %v3079
    %v3298 = vunpack.c.h.b16 %v3079
    %v3299 = vunpack.c.l.b16 %v3080
    %v3300 = vunpack.c.h.b16 %v3080
    %v3301 = vunpack.c.l.b16 %v3081
    %v3302 = vunpack.c.h.b16 %v3081
    %v3303 = vunpack.c.l.b16 %v3082
    %v3304 = vunpack.c.h.b16 %v3082
    %v3305 = vunpack.c.l.b16 %v3083
    %v3306 = vunpack.c.h.b16 %v3083
    %v3307 = vunpack.c.l.b16 %v3084
    %v3308 = vunpack.c.h.b16 %v3084
    %v3309 = vunpack.c.l.b16 %v3085
    %v3310 = vunpack.c.h.b16 %v3085
    %v3311 = vunpack.c.l.b16 %v3086
    %v3312 = vunpack.c.h.b16 %v3086
    %v3313 = vunpack.c.l.b16 %v3087
    %v3314 = vunpack.c.h.b16 %v3087
    %v3315 = vunpack.c.l.b16 %v3088
    %v3316 = vunpack.c.h.b16 %v3088
    %v3317 = vunpack.c.l.b16 %v3089
    %v3318 = vunpack.c.h.b16 %v3089
    %v3319 = vunpack.c.l.b16 %v3090
    %v3320 = vunpack.c.h.b16 %v3090
    %v3321 = vunpack.c.l.b16 %v3091
    %v3322 = vunpack.c.h.b16 %v3091
    %v3323 = vunpack.c.l.b16 %v3092
    %v3324 = vunpack.c.h.b16 %v3092
    %v3325 = vunpack.c.l.b16 %v3093
    %v3326 = vunpack.c.h.b16 %v3093
    %v3327 = vunpack.c.l.b16 %v3094
    %v3328 = vunpack.c.h.b16 %v3094
    %v3329 = vunpack.c.l.b16 %v3095
    %v3330 = vunpack.c.h.b16 %v3095
    %v3331 = vunpack.c.l.b16 %v3096
    %v3332 = vunpack.c.h.b16 %v3096
    %v3333 = vunpack.c.l.b16 %v3097
    %v3334 = vunpack.c.h.b16 %v3097
    %v3335 = vunpack.c.l.b16 %v3098
    %v3336 = vunpack.c.h.b16 %v3098
    %v3337 = vunpack.c.l.b16 %v3099
    %v3338 = vunpack.c.h.b16 %v3099
    %v3339 = vunpack.c.l.b16 %v3100
    %v3340 = vunpack.c.h.b16 %v3100
    %v3341 = vunpack.c.l.b16 %v3101
    %v3342 = vunpack.c.h.b16 %v3101
    %v3343 = vunpack.c.l.b16 %v3102
    %v3344 = vunpack.c.h.b16 %v3102
    %v3345 = vunpack.c.l.b16 %v3103
    %v3346 = vunpack.c.h.b16 %v3103
    %v3347 = vunpack.c.l.b16 %v3104
    %v3348 = vunpack.c.h.b16 %v3104
    %v3349 = vunpack.c.l.b16 %v3105
    %v3350 = vunpack.c.h.b16 %v3105
    %v3351 = vunpack.c.l.b16 %v3106
    %v3352 = vunpack.c.h.b16 %v3106
    %v3353 = vunpack.c.l.b16 %v3107
    %v3354 = vunpack.c.h.b16 %v3107
    %v3355 = vunpack.c.l.b16 %v3108
    %v3356 = vunpack.c.h.b16 %v3108
    %v3357 = vunpack.c.l.b16 %v3109
    %v3358 = vunpack.c.h.b16 %v3109
    %v3359 = vunpack.c.l.b16 %v3110
    %v3360 = vunpack.c.h.b16 %v3110
    %v3361 = vunpack.c.l.b16 %v3111
    %v3362 = vunpack.c.h.b16 %v3111
    %v3363 = vunpack.c.l.b16 %v3112
    %v3364 = vunpack.c.h.b16 %v3112
    %v3365 = vunpack.c.l.b16 %v3113
    %v3366 = vunpack.c.h.b16 %v3113
    %v3367 = vunpack.c.l.b16 %v3114
    %v3368 = vunpack.c.h.b16 %v3114
    %v3369 = vunpack.c.l.b16 %v3115
    %v3370 = vunpack.c.h.b16 %v3115
    %v3371 = vunpack.c.l.b16 %v3116
    %v3372 = vunpack.c.h.b16 %v3116
    %v3373 = vunpack.c.l.b16 %v3117
    %v3374 = vunpack.c.h.b16 %v3117
    %v3375 = vunpack.c.l.b16 %v3118
    %v3376 = vunpack.c.h.b16 %v3118
    %v3377 = vunpack.c.l.b16 %v3119
    %v3378 = vunpack.c.h.b16 %v3119
    %v3379 = vunpack.c.l.b16 %v3120
    %v3380 = vunpack.c.h.b16 %v3120
    %v3381 = vunpack.c.l.b16 %v3121
    %v3382 = vunpack.c.h.b16 %v3121
    %v3383 = vunpack.c.l.b16 %v3122
    %v3384 = vunpack.c.h.b16 %v3122
    %v3385 = vunpack.c.l.b16 %v3123
    %v3386 = vunpack.c.h.b16 %v3123
    %v3387 = vunpack.c.l.b16 %v3124
    %v3388 = vunpack.c.h.b16 %v3124
    %v3389 = vunpack.c.l.b16 %v3125
    %v3390 = vunpack.c.h.b16 %v3125
    %v3391 = vunpack.c.l.b16 %v3126
    %v3392 = vunpack.c.h.b16 %v3126
    %v3393 = vunpack.c.l.b16 %v3127
    %v3394 = vunpack.c.h.b16 %v3127
    %v3395 = vunpack.c.l.b16 %v3128
    %v3396 = vunpack.c.h.b16 %v3128
    %v3397 = vunpack.c.l.b16 %v3129
    %v3398 = vunpack.c.h.b16 %v3129
    %v3399 = vunpack.c.l.b16 %v3130
    %v3400 = vunpack.c.h.b16 %v3130
    %v3401 = vunpack.c.l.b16 %v3131
    %v3402 = vunpack.c.h.b16 %v3131
    %v3403 = vunpack.c.l.b16 %v3132
    %v3404 = vunpack.c.h.b16 %v3132
    %v3405 = vunpack.c.l.b16 %v3133
    %v3406 = vunpack.c.h.b16 %v3133
    %v3407 = vunpack.c.l.b16 %v3134
    %v3408 = vunpack.c.h.b16 %v3134
    %v3409 = vunpack.c.l.b16 %v3135
    %v3410 = vunpack.c.h.b16 %v3135
    %v3411 = vunpack.c.l.b16 %v3136
    %v3412 = vunpack.c.h.b16 %v3136
    %v3413 = vunpack.c.l.b16 %v3137
    %v3414 = vunpack.c.h.b16 %v3137
    %v3415 = vunpack.c.l.b16 %v3138
    %v3416 = vunpack.c.h.b16 %v3138
    %v3417 = vunpack.c.l.b16 %v3139
    %v3418 = vunpack.c.h.b16 %v3139
    %v3419 = vunpack.c.l.b16 %v3140
    %v3420 = vunpack.c.h.b16 %v3140
    %v3421 = vunpack.c.l.b16 %v3141
    %v3422 = vunpack.c.h.b16 %v3141
    %v3423 = vunpack.c.l.b16 %v3142
    %v3424 = vunpack.c.h.b16 %v3142
    %v3425 = vunpack.c.l.b16 %v3143
    %v3426 = vunpack.c.h.b16 %v3143
    %v3427 = vunpack.c.l.b16 %v3144
    %v3428 = vunpack.c.h.b16 %v3144
    %v3429 = vunpack.c.l.b16 %v3145
    %v3430 = vunpack.c.h.b16 %v3145
    %v3431 = vunpack.c.l.b16 %v3146
    %v3432 = vunpack.c.h.b16 %v3146
    %v3433 = vunpack.c.l.b16 %v3147
    %v3434 = vunpack.c.h.b16 %v3147
    %v3435 = vunpack.c.l.b16 %v3148
    %v3436 = vunpack.c.h.b16 %v3148
    %v3437 = vunpack.c.l.b16 %v3149
    %v3438 = vunpack.c.h.b16 %v3149
    %v3439 = vunpack.c.l.b16 %v3150
    %v3440 = vunpack.c.h.b16 %v3150
    %v3441 = vunpack.c.l.b16 %v3151
    %v3442 = vunpack.c.h.b16 %v3151
    %v3443 = vunpack.c.l.b16 %v3152
    %v3444 = vunpack.c.h.b16 %v3152
    %v3445 = vunpack.c.l.b16 %v3153
    %v3446 = vunpack.c.h.b16 %v3153
    %v3447 = vunpack.c.l.b16 %v3154
    %v3448 = vunpack.c.h.b16 %v3154
    %v3449 = vunpack.c.l.b16 %v3155
    %v3450 = vunpack.c.h.b16 %v3155
    %v3451 = vunpack.c.l.b16 %v3156
    %v3452 = vunpack.c.h.b16 %v3156
    %v3453 = vunpack.c.l.b16 %v3157
    %v3454 = vunpack.c.h.b16 %v3157
    %v3455 = vunpack.c.l.b16 %v3158
    %v3456 = vunpack.c.h.b16 %v3158
    %v3457 = vunpack.c.l.b16 %v3159
    %v3458 = vunpack.c.h.b16 %v3159
    %v3459 = vunpack.c.l.b16 %v3160
    %v3460 = vunpack.c.h.b16 %v3160
    %v3461 = vpack.c.b16 %v3263, %v3261
    %v3462 = vpack.c.b16 %v3264, %v3262
    %v3463 = vpack.c.b16 %v3267, %v3265
    %v3464 = vpack.c.b16 %v3268, %v3266
    %v3465 = vpack.c.b16 %v3271, %v3269
    %v3466 = vpack.c.b16 %v3272, %v3270
    %v3467 = vpack.c.b16 %v3275, %v3273
    %v3468 = vpack.c.b16 %v3276, %v3274
    %v3469 = vpack.c.b16 %v3279, %v3277
    %v3470 = vpack.c.b16 %v3280, %v3278
    %v3471 = vpack.c.b16 %v3283, %v3281
    %v3472 = vpack.c.b16 %v3284, %v3282
    %v3473 = vpack.c.b16 %v3287, %v3285
    %v3474 = vpack.c.b16 %v3288, %v3286
    %v3475 = vpack.c.b16 %v3291, %v3289
    %v3476 = vpack.c.b16 %v3292, %v3290
    %v3477 = vpack.c.b16 %v3295, %v3293
    %v3478 = vpack.c.b16 %v3296, %v3294
    %v3479 = vpack.c.b16 %v3299, %v3297
    %v3480 = vpack.c.b16 %v3300, %v3298
    %v3481 = vpack.c.b16 %v3303, %v3301
    %v3482 = vpack.c.b16 %v3304, %v3302
    %v3483 = vpack.c.b16 %v3307, %v3305
    %v3484 = vpack.c.b16 %v3308, %v3306
    %v3485 = vpack.c.b16 %v3311, %v3309
    %v3486 = vpack.c.b16 %v3312, %v3310
    %v3487 = vpack.c.b16 %v3315, %v3313
    %v3488 = vpack.c.b16 %v3316, %v3314
    %v3489 = vpack.c.b16 %v3319, %v3317
    %v3490 = vpack.c.b16 %v3320, %v3318
    %v3491 = vpack.c.b16 %v3323, %v3321
    %v3492 = vpack.c.b16 %v3324, %v3322
    %v3493 = vpack.c.b16 %v3327, %v3325
    %v3494 = vpack.c.b16 %v3328, %v3326
    %v3495 = vpack.c.b16 %v3331, %v3329
    %v3496 = vpack.c.b16 %v3332, %v3330
    %v3497 = vpack.c.b16 %v3335, %v3333
    %v3498 = vpack.c.b16 %v3336, %v3334
    %v3499 = vpack.c.b16 %v3339, %v3337
    %v3500 = vpack.c.b16 %v3340, %v3338
    %v3501 = vpack.c.b16 %v3343, %v3341
    %v3502 = vpack.c.b16 %v3344, %v3342
    %v3503 = vpack.c.b16 %v3347, %v3345
    %v3504 = vpack.c.b16 %v3348, %v3346
    %v3505 = vpack.c.b16 %v3351, %v3349
    %v3506 = vpack.c.b16 %v3352, %v3350
    %v3507 = vpack.c.b16 %v3355, %v3353
    %v3508 = vpack.c.b16 %v3356, %v3354
    %v3509 = vpack.c.b16 %v3359, %v3357
    %v3510 = vpack.c.b16 %v3360, %v3358
    %v3511 = vpack.c.b16 %v3363, %v3361
    %v3512 = vpack.c.b16 %v3364, %v3362
    %v3513 = vpack.c.b16 %v3367, %v3365
    %v3514 = vpack.c.b16 %v3368, %v3366
    %v3515 = vpack.c.b16 %v3371, %v3369
    %v3516 = vpack.c.b16 %v3372, %v3370
    %v3517 = vpack.c.b16 %v3375, %v3373
    %v3518 = vpack.c.b16 %v3376, %v3374
    %v3519 = vpack.c.b16 %v3379, %v3377
    %v3520 = vpack.c.b16 %v3380, %v3378
    %v3521 = vpack.c.b16 %v3383, %v3381
    %v3522 = vpack.c.b16 %v3384, %v3382
    %v3523 = vpack.c.b16 %v3387, %v3385
    %v3524 = vpack.c.b16 %v3388, %v3386
    %v3525 = vpack.c.b16 %v3391, %v3389
    %v3526 = vpack.c.b16 %v3392, %v3390
    %v3527 = vpack.c.b16 %v3395, %v3393
    %v3528 = vpack.c.b16 %v3396, %v3394
    %v3529 = vpack.c.b16 %v3399, %v3397
    %v3530 = vpack.c.b16 %v3400, %v3398
    %v3531 = vpack.c.b16 %v3403, %v3401
    %v3532 = vpack.c.b16 %v3404, %v3402
    %v3533 = vpack.c.b16 %v3407, %v3405
    %v3534 = vpack.c.b16 %v3408, %v3406
    %v3535 = vpack.c.b16 %v3411, %v3409
    %v3536 = vpack.c.b16 %v3412, %v3410
    %v3537 = vpack.c.b16 %v3415, %v3413
    %v3538 = vpack.c.b16 %v3416, %v3414
    %v3539 = vpack.c.b16 %v3419, %v3417
    %v3540 = vpack.c.b16 %v3420, %v3418
    %v3541 = vpack.c.b16 %v3423, %v3421
    %v3542 = vpack.c.b16 %v3424, %v3422
    %v3543 = vpack.c.b16 %v3427, %v3425
    %v3544 = vpack.c.b16 %v3428, %v3426
    %v3545 = vpack.c.b16 %v3431, %v3429
    %v3546 = vpack.c.b16 %v3432, %v3430
    %v3547 = vpack.c.b16 %v3435, %v3433
    %v3548 = vpack.c.b16 %v3436, %v3434
    %v3549 = vpack.c.b16 %v3439, %v3437
    %v3550 = vpack.c.b16 %v3440, %v3438
    %v3551 = vpack.c.b16 %v3443, %v3441
    %v3552 = vpack.c.b16 %v3444, %v3442
    %v3553 = vpack.c.b16 %v3447, %v3445
    %v3554 = vpack.c.b16 %v3448, %v3446
    %v3555 = vpack.c.b16 %v3451, %v3449
    %v3556 = vpack.c.b16 %v3452, %v3450
    %v3557 = vpack.c.b16 %v3455, %v3453
    %v3558 = vpack.c.b16 %v3456, %v3454
    %v3559 = vpack.c.b16 %v3459, %v3457
    %v3560 = vpack.c.b16 %v3460, %v3458
    %v3612 = vsel %vm1816, %v3462, 0
    %v3615 = vsel %vm1816, %v3464, 0
    %v3618 = vsel %vm1816, %v3466, 0
    %v3621 = vsel %vm1816, %v3468, 0
    %v3624 = vsel %vm1816, %v3470, 0
    %v3627 = vsel %vm1816, %v3472, 0
    %v3630 = vsel %vm1816, %v3474, 0
    %v3633 = vsel %vm1816, %v3476, 0
    %v3636 = vsel %vm1816, %v3478, 0
    %v3639 = vsel %vm1816, %v3480, 0
    %v3642 = vsel %vm1816, %v3482, 0
    %v3645 = vsel %vm1816, %v3484, 0
    %v3648 = vsel %vm1816, %v3486, 0
    %v3651 = vsel %vm1816, %v3488, 0
    %v3654 = vsel %vm1816, %v3490, 0
    %v3657 = vsel %vm1816, %v3492, 0
    %v3660 = vsel %vm1816, %v3494, 0
    %v3663 = vsel %vm1816, %v3496, 0
    %v3666 = vsel %vm1816, %v3498, 0
    %v3669 = vsel %vm1816, %v3500, 0
    %v3672 = vsel %vm1816, %v3502, 0
    %v3675 = vsel %vm1816, %v3504, 0
    %v3678 = vsel %vm1816, %v3506, 0
    %v3681 = vsel %vm1816, %v3508, 0
    %v3684 = vsel %vm1816, %v3510, 0
    %v3687 = vsel %vm1816, %v3512, 0
    %v3690 = vsel %vm1816, %v3514, 0
    %v3693 = vsel %vm1816, %v3516, 0
    %v3696 = vsel %vm1816, %v3518, 0
    %v3699 = vsel %vm1816, %v3520, 0
    %v3702 = vsel %vm1816, %v3522, 0
    %v3705 = vsel %vm1816, %v3524, 0
    %v3708 = vsel %vm1816, %v3526, 0
    %v3711 = vsel %vm1816, %v3528, 0
    %v3714 = vsel %vm1816, %v3530, 0
    %v3717 = vsel %vm1816, %v3532, 0
    %v3720 = vsel %vm1816, %v3534, 0
    %v3723 = vsel %vm1816, %v3536, 0
    %v3726 = vsel %vm1816, %v3538, 0
    %v3729 = vsel %vm1816, %v3540, 0
    %v3732 = vsel %vm1816, %v3542, 0
    %v3735 = vsel %vm1816, %v3544, 0
    %v3738 = vsel %vm1816, %v3546, 0
    %v3741 = vsel %vm1816, %v3548, 0
    %v3744 = vsel %vm1816, %v3550, 0
    %v3747 = vsel %vm1816, %v3552, 0
    %v3750 = vsel %vm1816, %v3554, 0
    %v3753 = vsel %vm1816, %v3556, 0
    %v3756 = vsel %vm1816, %v3558, 0
    %v3759 = vsel %vm1816, %v3560, 0
    %3761 = vmatprep.subr.bf16.mxu0 0
    %3762 = vmatpush1.bf16.msra.mxu0 %v3047
    %3763 = vmatprep.subr.bf16.mxu0 0
    %3764 = vmatpush1.bf16.msra.mxu0 %v3048
    %3765 = vmatprep.subr.bf16.mxu0 0
    %3766 = vmatpush1.bf16.msra.mxu0 %v3049
    %3767 = vmatprep.subr.bf16.mxu0 0
    %3768 = vmatpush1.bf16.msra.mxu0 %v3050
    %3769 = vmatprep.subr.bf16.mxu0 0
    %3770 = vmatpush1.bf16.msra.mxu0 %v3051
    %3771 = vmatprep.subr.bf16.mxu0 0
    %3772 = vmatpush1.bf16.msra.mxu0 %v3052
    %3773 = vmatprep.subr.bf16.mxu0 0
    %3774 = vmatpush1.bf16.msra.mxu0 %v3053
    %3775 = vmatprep.subr.bf16.mxu0 0
    %3776 = vmatpush1.bf16.msra.mxu0 %v3054
    %3777 = vmatprep.subr.bf16.mxu0 0
    %3778 = vmatpush1.bf16.msra.mxu0 %v3055
    %3779 = vmatprep.subr.bf16.mxu0 0
    %3780 = vmatpush1.bf16.msra.mxu0 %v3056
    %3781 = vmatprep.subr.bf16.mxu0 0
    %3782 = vmatpush1.bf16.msra.mxu0 %v3057
    %3783 = vmatprep.subr.bf16.mxu0 0
    %3784 = vmatpush1.bf16.msra.mxu0 %v3058
    %3785 = vmatprep.subr.bf16.mxu0 0
    %3786 = vmatpush1.bf16.msra.mxu0 %v3059
    %3787 = vmatprep.subr.bf16.mxu0 0
    %3788 = vmatpush1.bf16.msra.mxu0 %v3060
    %3789 = vmatprep.subr.bf16.mxu0 0
    %3790 = vmatpush1.bf16.msra.mxu0 0
    %3791 = vmatprep.subr.bf16.mxu0 0
    %3792 = vmatpush1.bf16.msra.mxu0 0
    %3793 = vmatprep.mubr.bf16.mxu0 %v3612
    %3794 = vmatmul.mubr.bf16.gmra.mrb[0].mxu0 %v3461
    %v3795 = vpop.f32.mrb[0].mxu0
    %v3796 = vadd.f32 0.0, %v3795
    %v3797 = vpop.f32.mrb[0].mxu0
    %v3798 = vpop.f32.mrb[0].mxu0
    %v3799 = vadd.f32 0.0, %v3798
    %v3800 = vpop.f32.mrb[0].mxu0
    %3801 = vmatprep.mubr.bf16.mxu0 %v3615
    %3802 = vmatmul.mubr.bf16.gmra.mrb[0].mxu0 %v3463
    %v3803 = vpop.f32.mrb[0].mxu0
    %v3804 = vadd.f32 0.0, %v3803
    %v3805 = vpop.f32.mrb[0].mxu0
    %v3806 = vpop.f32.mrb[0].mxu0
    %v3807 = vadd.f32 0.0, %v3806
    %v3808 = vpop.f32.mrb[0].mxu0
    %3809 = vmatprep.mubr.bf16.mxu0 %v3618
    %3810 = vmatmul.mubr.bf16.gmra.mrb[0].mxu0 %v3465
    %v3811 = vpop.f32.mrb[0].mxu0
    %v3812 = vadd.f32 0.0, %v3811
    %v3813 = vpop.f32.mrb[0].mxu0
    %v3814 = vpop.f32.mrb[0].mxu0
    %v3815 = vadd.f32 0.0, %v3814
    %v3816 = vpop.f32.mrb[0].mxu0
    %3817 = vmatprep.mubr.bf16.mxu0 %v3621
    %3818 = vmatmul.mubr.bf16.gmra.mrb[0].mxu0 %v3467
    %v3819 = vpop.f32.mrb[0].mxu0
    %v3820 = vadd.f32 0.0, %v3819
    %v3821 = vpop.f32.mrb[0].mxu0
    %v3822 = vpop.f32.mrb[0].mxu0
    %v3823 = vadd.f32 0.0, %v3822
    %v3824 = vpop.f32.mrb[0].mxu0
    %3825 = vmatprep.mubr.bf16.mxu0 %v3624
    %3826 = vmatmul.mubr.bf16.gmra.mrb[0].mxu0 %v3469
    %v3827 = vpop.f32.mrb[0].mxu0
    %v3828 = vadd.f32 0.0, %v3827
    %v3829 = vpop.f32.mrb[0].mxu0
    %v3830 = vpop.f32.mrb[0].mxu0
    %v3831 = vadd.f32 0.0, %v3830
    %v3832 = vpop.f32.mrb[0].mxu0
    %3833 = vmatprep.mubr.bf16.mxu0 %v3627
    %3834 = vmatmul.mubr.bf16.gmra.mrb[0].mxu0 %v3471
    %v3835 = vpop.f32.mrb[0].mxu0
    %v3836 = vadd.f32 0.0, %v3835
    %v3837 = vpop.f32.mrb[0].mxu0
    %v3838 = vpop.f32.mrb[0].mxu0
    %v3839 = vadd.f32 0.0, %v3838
    %v3840 = vpop.f32.mrb[0].mxu0
    %3841 = vmatprep.mubr.bf16.mxu0 %v3630
    %3842 = vmatmul.mubr.bf16.gmra.mrb[0].mxu0 %v3473
    %v3843 = vpop.f32.mrb[0].mxu0
    %v3844 = vadd.f32 0.0, %v3843
    %v3845 = vpop.f32.mrb[0].mxu0
    %v3846 = vpop.f32.mrb[0].mxu0
    %v3847 = vadd.f32 0.0, %v3846
    %v3848 = vpop.f32.mrb[0].mxu0
    %3849 = vmatprep.mubr.bf16.mxu0 %v3633
    %3850 = vmatmul.mubr.bf16.gmra.mrb[0].mxu0 %v3475
    %v3851 = vpop.f32.mrb[0].mxu0
    %v3852 = vadd.f32 0.0, %v3851
    %v3853 = vpop.f32.mrb[0].mxu0
    %v3854 = vpop.f32.mrb[0].mxu0
    %v3855 = vadd.f32 0.0, %v3854
    %v3856 = vpop.f32.mrb[0].mxu0
    %3857 = vmatprep.mubr.bf16.mxu0 %v3636
    %3858 = vmatmul.mubr.bf16.gmra.mrb[0].mxu0 %v3477
    %v3859 = vpop.f32.mrb[0].mxu0
    %v3860 = vadd.f32 0.0, %v3859
    %v3861 = vpop.f32.mrb[0].mxu0
    %v3862 = vpop.f32.mrb[0].mxu0
    %v3863 = vadd.f32 0.0, %v3862
    %v3864 = vpop.f32.mrb[0].mxu0
    %3865 = vmatprep.mubr.bf16.mxu0 %v3639
    %3866 = vmatmul.mubr.bf16.gmra.mrb[0].mxu0 %v3479
    %v3867 = vpop.f32.mrb[0].mxu0
    %v3868 = vadd.f32 0.0, %v3867
    %v3869 = vpop.f32.mrb[0].mxu0
    %v3870 = vpop.f32.mrb[0].mxu0
    %v3871 = vadd.f32 0.0, %v3870
    %v3872 = vpop.f32.mrb[0].mxu0
    %3873 = vmatprep.mubr.bf16.mxu0 %v3642
    %3874 = vmatmul.mubr.bf16.gmra.mrb[0].mxu0 %v3481
    %v3875 = vpop.f32.mrb[0].mxu0
    %v3876 = vadd.f32 0.0, %v3875
    %v3877 = vpop.f32.mrb[0].mxu0
    %v3878 = vpop.f32.mrb[0].mxu0
    %v3879 = vadd.f32 0.0, %v3878
    %v3880 = vpop.f32.mrb[0].mxu0
    %3881 = vmatprep.mubr.bf16.mxu0 %v3645
    %3882 = vmatmul.mubr.bf16.gmra.mrb[0].mxu0 %v3483
    %v3883 = vpop.f32.mrb[0].mxu0
    %v3884 = vadd.f32 0.0, %v3883
    %v3885 = vpop.f32.mrb[0].mxu0
    %v3886 = vpop.f32.mrb[0].mxu0
    %v3887 = vadd.f32 0.0, %v3886
    %v3888 = vpop.f32.mrb[0].mxu0
    %3889 = vmatprep.mubr.bf16.mxu0 %v3648
    %3890 = vmatmul.mubr.bf16.gmra.mrb[0].mxu0 %v3485
    %v3891 = vpop.f32.mrb[0].mxu0
    %v3892 = vadd.f32 0.0, %v3891
    %v3893 = vpop.f32.mrb[0].mxu0
    %v3894 = vpop.f32.mrb[0].mxu0
    %v3895 = vadd.f32 0.0, %v3894
    %v3896 = vpop.f32.mrb[0].mxu0
    %3897 = vmatprep.mubr.bf16.mxu0 %v3651
    %3898 = vmatmul.mubr.bf16.gmra.mrb[0].mxu0 %v3487
    %v3899 = vpop.f32.mrb[0].mxu0
    %v3900 = vadd.f32 0.0, %v3899
    %v3901 = vpop.f32.mrb[0].mxu0
    %v3902 = vpop.f32.mrb[0].mxu0
    %v3903 = vadd.f32 0.0, %v3902
    %v3904 = vpop.f32.mrb[0].mxu0
    %3905 = vmatprep.mubr.bf16.mxu0 %v3654
    %3906 = vmatmul.mubr.bf16.gmra.mrb[0].mxu0 %v3489
    %v3907 = vpop.f32.mrb[0].mxu0
    %v3908 = vadd.f32 0.0, %v3907
    %v3909 = vpop.f32.mrb[0].mxu0
    %v3910 = vpop.f32.mrb[0].mxu0
    %v3911 = vadd.f32 0.0, %v3910
    %v3912 = vpop.f32.mrb[0].mxu0
    %3913 = vmatprep.mubr.bf16.mxu0 %v3657
    %3914 = vmatmul.mubr.bf16.gmra.mrb[0].mxu0 %v3491
    %v3915 = vpop.f32.mrb[0].mxu0
    %v3916 = vadd.f32 0.0, %v3915
    %v3917 = vpop.f32.mrb[0].mxu0
    %v3918 = vpop.f32.mrb[0].mxu0
    %v3919 = vadd.f32 0.0, %v3918
    %v3920 = vpop.f32.mrb[0].mxu0
    %3921 = vmatprep.mubr.bf16.mxu0 %v3660
    %3922 = vmatmul.mubr.bf16.gmra.mrb[0].mxu0 %v3493
    %v3923 = vpop.f32.mrb[0].mxu0
    %v3924 = vadd.f32 0.0, %v3923
    %v3925 = vpop.f32.mrb[0].mxu0
    %v3926 = vpop.f32.mrb[0].mxu0
    %v3927 = vadd.f32 0.0, %v3926
    %v3928 = vpop.f32.mrb[0].mxu0
    %3929 = vmatprep.mubr.bf16.mxu0 %v3663
    %3930 = vmatmul.mubr.bf16.gmra.mrb[0].mxu0 %v3495
    %v3931 = vpop.f32.mrb[0].mxu0
    %v3932 = vadd.f32 0.0, %v3931
    %v3933 = vpop.f32.mrb[0].mxu0
    %v3934 = vpop.f32.mrb[0].mxu0
    %v3935 = vadd.f32 0.0, %v3934
    %v3936 = vpop.f32.mrb[0].mxu0
    %3937 = vmatprep.mubr.bf16.mxu0 %v3666
    %3938 = vmatmul.mubr.bf16.gmra.mrb[0].mxu0 %v3497
    %v3939 = vpop.f32.mrb[0].mxu0
    %v3940 = vadd.f32 0.0, %v3939
    %v3941 = vpop.f32.mrb[0].mxu0
    %v3942 = vpop.f32.mrb[0].mxu0
    %v3943 = vadd.f32 0.0, %v3942
    %v3944 = vpop.f32.mrb[0].mxu0
    %3945 = vmatprep.mubr.bf16.mxu0 %v3669
    %3946 = vmatmul.mubr.bf16.gmra.mrb[0].mxu0 %v3499
    %v3947 = vpop.f32.mrb[0].mxu0
    %v3948 = vadd.f32 0.0, %v3947
    %v3949 = vpop.f32.mrb[0].mxu0
    %v3950 = vpop.f32.mrb[0].mxu0
    %v3951 = vadd.f32 0.0, %v3950
    %v3952 = vpop.f32.mrb[0].mxu0
    %3953 = vmatprep.mubr.bf16.mxu0 %v3672
    %3954 = vmatmul.mubr.bf16.gmra.mrb[0].mxu0 %v3501
    %v3955 = vpop.f32.mrb[0].mxu0
    %v3956 = vadd.f32 0.0, %v3955
    %v3957 = vpop.f32.mrb[0].mxu0
    %v3958 = vpop.f32.mrb[0].mxu0
    %v3959 = vadd.f32 0.0, %v3958
    %v3960 = vpop.f32.mrb[0].mxu0
    %3961 = vmatprep.mubr.bf16.mxu0 %v3675
    %3962 = vmatmul.mubr.bf16.gmra.mrb[0].mxu0 %v3503
    %v3963 = vpop.f32.mrb[0].mxu0
    %v3964 = vadd.f32 0.0, %v3963
    %v3965 = vpop.f32.mrb[0].mxu0
    %v3966 = vpop.f32.mrb[0].mxu0
    %v3967 = vadd.f32 0.0, %v3966
    %v3968 = vpop.f32.mrb[0].mxu0
    %3969 = vmatprep.mubr.bf16.mxu0 %v3678
    %3970 = vmatmul.mubr.bf16.gmra.mrb[0].mxu0 %v3505
    %v3971 = vpop.f32.mrb[0].mxu0
    %v3972 = vadd.f32 0.0, %v3971
    %v3973 = vpop.f32.mrb[0].mxu0
    %v3974 = vpop.f32.mrb[0].mxu0
    %v3975 = vadd.f32 0.0, %v3974
    %v3976 = vpop.f32.mrb[0].mxu0
    %3977 = vmatprep.mubr.bf16.mxu0 %v3681
    %3978 = vmatmul.mubr.bf16.gmra.mrb[0].mxu0 %v3507
    %v3979 = vpop.f32.mrb[0].mxu0
    %v3980 = vadd.f32 0.0, %v3979
    %v3981 = vpop.f32.mrb[0].mxu0
    %v3982 = vpop.f32.mrb[0].mxu0
    %v3983 = vadd.f32 0.0, %v3982
    %v3984 = vpop.f32.mrb[0].mxu0
    %3985 = vmatprep.mubr.bf16.mxu0 %v3684
    %3986 = vmatmul.mubr.bf16.gmra.mrb[0].mxu0 %v3509
    %v3987 = vpop.f32.mrb[0].mxu0
    %v3988 = vadd.f32 0.0, %v3987
    %v3989 = vpop.f32.mrb[0].mxu0
    %v3990 = vpop.f32.mrb[0].mxu0
    %v3991 = vadd.f32 0.0, %v3990
    %v3992 = vpop.f32.mrb[0].mxu0
    %3993 = vmatprep.mubr.bf16.mxu0 %v3687
    %3994 = vmatmul.mubr.bf16.gmra.mrb[0].mxu0 %v3511
    %v3995 = vpop.f32.mrb[0].mxu0
    %v3996 = vadd.f32 0.0, %v3995
    %v3997 = vpop.f32.mrb[0].mxu0
    %v3998 = vpop.f32.mrb[0].mxu0
    %v3999 = vadd.f32 0.0, %v3998
    %v4000 = vpop.f32.mrb[0].mxu0
    %4001 = vmatprep.mubr.bf16.mxu0 %v3690
    %4002 = vmatmul.mubr.bf16.gmra.mrb[0].mxu0 %v3513
    %v4003 = vpop.f32.mrb[0].mxu0
    %v4004 = vadd.f32 0.0, %v4003
    %v4005 = vpop.f32.mrb[0].mxu0
    %v4006 = vpop.f32.mrb[0].mxu0
    %v4007 = vadd.f32 0.0, %v4006
    %v4008 = vpop.f32.mrb[0].mxu0
    %4009 = vmatprep.mubr.bf16.mxu0 %v3693
    %4010 = vmatmul.mubr.bf16.gmra.mrb[0].mxu0 %v3515
    %v4011 = vpop.f32.mrb[0].mxu0
    %v4012 = vadd.f32 0.0, %v4011
    %v4013 = vpop.f32.mrb[0].mxu0
    %v4014 = vpop.f32.mrb[0].mxu0
    %v4015 = vadd.f32 0.0, %v4014
    %v4016 = vpop.f32.mrb[0].mxu0
    %4017 = vmatprep.mubr.bf16.mxu0 %v3696
    %4018 = vmatmul.mubr.bf16.gmra.mrb[0].mxu0 %v3517
    %v4019 = vpop.f32.mrb[0].mxu0
    %v4020 = vadd.f32 0.0, %v4019
    %v4021 = vpop.f32.mrb[0].mxu0
    %v4022 = vpop.f32.mrb[0].mxu0
    %v4023 = vadd.f32 0.0, %v4022
    %v4024 = vpop.f32.mrb[0].mxu0
    %4025 = vmatprep.mubr.bf16.mxu0 %v3699
    %4026 = vmatmul.mubr.bf16.gmra.mrb[0].mxu0 %v3519
    %v4027 = vpop.f32.mrb[0].mxu0
    %v4028 = vadd.f32 0.0, %v4027
    %v4029 = vpop.f32.mrb[0].mxu0
    %v4030 = vpop.f32.mrb[0].mxu0
    %v4031 = vadd.f32 0.0, %v4030
    %v4032 = vpop.f32.mrb[0].mxu0
    %4033 = vmatprep.mubr.bf16.mxu0 %v3702
    %4034 = vmatmul.mubr.bf16.gmra.mrb[0].mxu0 %v3521
    %v4035 = vpop.f32.mrb[0].mxu0
    %v4036 = vadd.f32 0.0, %v4035
    %v4037 = vpop.f32.mrb[0].mxu0
    %v4038 = vpop.f32.mrb[0].mxu0
    %v4039 = vadd.f32 0.0, %v4038
    %v4040 = vpop.f32.mrb[0].mxu0
    %4041 = vmatprep.mubr.bf16.mxu0 %v3705
    %4042 = vmatmul.mubr.bf16.gmra.mrb[0].mxu0 %v3523
    %v4043 = vpop.f32.mrb[0].mxu0
    %v4044 = vadd.f32 0.0, %v4043
    %v4045 = vpop.f32.mrb[0].mxu0
    %v4046 = vpop.f32.mrb[0].mxu0
    %v4047 = vadd.f32 0.0, %v4046
    %v4048 = vpop.f32.mrb[0].mxu0
    %4049 = vmatprep.mubr.bf16.mxu0 %v3708
    %4050 = vmatmul.mubr.bf16.gmra.mrb[0].mxu0 %v3525
    %v4051 = vpop.f32.mrb[0].mxu0
    %v4052 = vadd.f32 0.0, %v4051
    %v4053 = vpop.f32.mrb[0].mxu0
    %v4054 = vpop.f32.mrb[0].mxu0
    %v4055 = vadd.f32 0.0, %v4054
    %v4056 = vpop.f32.mrb[0].mxu0
    %4057 = vmatprep.mubr.bf16.mxu0 %v3711
    %4058 = vmatmul.mubr.bf16.gmra.mrb[0].mxu0 %v3527
    %v4059 = vpop.f32.mrb[0].mxu0
    %v4060 = vadd.f32 0.0, %v4059
    %v4061 = vpop.f32.mrb[0].mxu0
    %v4062 = vpop.f32.mrb[0].mxu0
    %v4063 = vadd.f32 0.0, %v4062
    %v4064 = vpop.f32.mrb[0].mxu0
    %4065 = vmatprep.mubr.bf16.mxu0 %v3714
    %4066 = vmatmul.mubr.bf16.gmra.mrb[0].mxu0 %v3529
    %v4067 = vpop.f32.mrb[0].mxu0
    %v4068 = vadd.f32 0.0, %v4067
    %v4069 = vpop.f32.mrb[0].mxu0
    %v4070 = vpop.f32.mrb[0].mxu0
    %v4071 = vadd.f32 0.0, %v4070
    %v4072 = vpop.f32.mrb[0].mxu0
    %4073 = vmatprep.mubr.bf16.mxu0 %v3717
    %4074 = vmatmul.mubr.bf16.gmra.mrb[0].mxu0 %v3531
    %v4075 = vpop.f32.mrb[0].mxu0
    %v4076 = vadd.f32 0.0, %v4075
    %v4077 = vpop.f32.mrb[0].mxu0
    %v4078 = vpop.f32.mrb[0].mxu0
    %v4079 = vadd.f32 0.0, %v4078
    %v4080 = vpop.f32.mrb[0].mxu0
    %4081 = vmatprep.mubr.bf16.mxu0 %v3720
    %4082 = vmatmul.mubr.bf16.gmra.mrb[0].mxu0 %v3533
    %v4083 = vpop.f32.mrb[0].mxu0
    %v4084 = vadd.f32 0.0, %v4083
    %v4085 = vpop.f32.mrb[0].mxu0
    %v4086 = vpop.f32.mrb[0].mxu0
    %v4087 = vadd.f32 0.0, %v4086
    %v4088 = vpop.f32.mrb[0].mxu0
    %4089 = vmatprep.mubr.bf16.mxu0 %v3723
    %4090 = vmatmul.mubr.bf16.gmra.mrb[0].mxu0 %v3535
    %v4091 = vpop.f32.mrb[0].mxu0
    %v4092 = vadd.f32 0.0, %v4091
    %v4093 = vpop.f32.mrb[0].mxu0
    %v4094 = vpop.f32.mrb[0].mxu0
    %v4095 = vadd.f32 0.0, %v4094
    %v4096 = vpop.f32.mrb[0].mxu0
    %4097 = vmatprep.mubr.bf16.mxu0 %v3726
    %4098 = vmatmul.mubr.bf16.gmra.mrb[0].mxu0 %v3537
    %v4099 = vpop.f32.mrb[0].mxu0
    %v4100 = vadd.f32 0.0, %v4099
    %v4101 = vpop.f32.mrb[0].mxu0
    %v4102 = vpop.f32.mrb[0].mxu0
    %v4103 = vadd.f32 0.0, %v4102
    %v4104 = vpop.f32.mrb[0].mxu0
    %4105 = vmatprep.mubr.bf16.mxu0 %v3729
    %4106 = vmatmul.mubr.bf16.gmra.mrb[0].mxu0 %v3539
    %v4107 = vpop.f32.mrb[0].mxu0
    %v4108 = vadd.f32 0.0, %v4107
    %v4109 = vpop.f32.mrb[0].mxu0
    %v4110 = vpop.f32.mrb[0].mxu0
    %v4111 = vadd.f32 0.0, %v4110
    %v4112 = vpop.f32.mrb[0].mxu0
    %4113 = vmatprep.mubr.bf16.mxu0 %v3732
    %4114 = vmatmul.mubr.bf16.gmra.mrb[0].mxu0 %v3541
    %v4115 = vpop.f32.mrb[0].mxu0
    %v4116 = vadd.f32 0.0, %v4115
    %v4117 = vpop.f32.mrb[0].mxu0
    %v4118 = vpop.f32.mrb[0].mxu0
    %v4119 = vadd.f32 0.0, %v4118
    %v4120 = vpop.f32.mrb[0].mxu0
    %4121 = vmatprep.mubr.bf16.mxu0 %v3735
    %4122 = vmatmul.mubr.bf16.gmra.mrb[0].mxu0 %v3543
    %v4123 = vpop.f32.mrb[0].mxu0
    %v4124 = vadd.f32 0.0, %v4123
    %v4125 = vpop.f32.mrb[0].mxu0
    %v4126 = vpop.f32.mrb[0].mxu0
    %v4127 = vadd.f32 0.0, %v4126
    %v4128 = vpop.f32.mrb[0].mxu0
    %4129 = vmatprep.mubr.bf16.mxu0 %v3738
    %4130 = vmatmul.mubr.bf16.gmra.mrb[0].mxu0 %v3545
    %v4131 = vpop.f32.mrb[0].mxu0
    %v4132 = vadd.f32 0.0, %v4131
    %v4133 = vpop.f32.mrb[0].mxu0
    %v4134 = vpop.f32.mrb[0].mxu0
    %v4135 = vadd.f32 0.0, %v4134
    %v4136 = vpop.f32.mrb[0].mxu0
    %4137 = vmatprep.mubr.bf16.mxu0 %v3741
    %4138 = vmatmul.mubr.bf16.gmra.mrb[0].mxu0 %v3547
    %v4139 = vpop.f32.mrb[0].mxu0
    %v4140 = vadd.f32 0.0, %v4139
    %v4141 = vpop.f32.mrb[0].mxu0
    %v4142 = vpop.f32.mrb[0].mxu0
    %v4143 = vadd.f32 0.0, %v4142
    %v4144 = vpop.f32.mrb[0].mxu0
    %4145 = vmatprep.mubr.bf16.mxu0 %v3744
    %4146 = vmatmul.mubr.bf16.gmra.mrb[0].mxu0 %v3549
    %v4147 = vpop.f32.mrb[0].mxu0
    %v4148 = vadd.f32 0.0, %v4147
    %v4149 = vpop.f32.mrb[0].mxu0
    %v4150 = vpop.f32.mrb[0].mxu0
    %v4151 = vadd.f32 0.0, %v4150
    %v4152 = vpop.f32.mrb[0].mxu0
    %4153 = vmatprep.mubr.bf16.mxu0 %v3747
    %4154 = vmatmul.mubr.bf16.gmra.mrb[0].mxu0 %v3551
    %v4155 = vpop.f32.mrb[0].mxu0
    %v4156 = vadd.f32 0.0, %v4155
    %v4157 = vpop.f32.mrb[0].mxu0
    %v4158 = vpop.f32.mrb[0].mxu0
    %v4159 = vadd.f32 0.0, %v4158
    %v4160 = vpop.f32.mrb[0].mxu0
    %4161 = vmatprep.mubr.bf16.mxu0 %v3750
    %4162 = vmatmul.mubr.bf16.gmra.mrb[0].mxu0 %v3553
    %v4163 = vpop.f32.mrb[0].mxu0
    %v4164 = vadd.f32 0.0, %v4163
    %v4165 = vpop.f32.mrb[0].mxu0
    %v4166 = vpop.f32.mrb[0].mxu0
    %v4167 = vadd.f32 0.0, %v4166
    %v4168 = vpop.f32.mrb[0].mxu0
    %4169 = vmatprep.mubr.bf16.mxu0 %v3753
    %4170 = vmatmul.mubr.bf16.gmra.mrb[0].mxu0 %v3555
    %v4171 = vpop.f32.mrb[0].mxu0
    %v4172 = vadd.f32 0.0, %v4171
    %v4173 = vpop.f32.mrb[0].mxu0
    %v4174 = vpop.f32.mrb[0].mxu0
    %v4175 = vadd.f32 0.0, %v4174
    %v4176 = vpop.f32.mrb[0].mxu0
    %4177 = vmatprep.mubr.bf16.mxu0 %v3756
    %4178 = vmatmul.mubr.bf16.gmra.mrb[0].mxu0 %v3557
    %v4179 = vpop.f32.mrb[0].mxu0
    %v4180 = vadd.f32 0.0, %v4179
    %v4181 = vpop.f32.mrb[0].mxu0
    %v4182 = vpop.f32.mrb[0].mxu0
    %v4183 = vadd.f32 0.0, %v4182
    %v4184 = vpop.f32.mrb[0].mxu0
    %4185 = vmatprep.mubr.bf16.mxu0 %v3759
    %4186 = vmatmul.mubr.bf16.gmra.mrb[0].mxu0 %v3559
    %v4187 = vpop.f32.mrb[0].mxu0
    %v4188 = vadd.f32 0.0, %v4187
    %v4189 = vpop.f32.mrb[0].mxu0
    %v4190 = vpop.f32.mrb[0].mxu0
    %v4191 = vadd.f32 0.0, %v4190
    %v4192 = vpop.f32.mrb[0].mxu0
    %4193 = vdwg.mxu0
    %v4194 = vpack.c.bf16 %v3799, %v3796
    %v4195 = vpack.c.bf16 %v3807, %v3804
    %v4196 = vpack.c.bf16 %v3815, %v3812
    %v4197 = vpack.c.bf16 %v3823, %v3820
    %v4198 = vpack.c.bf16 %v3831, %v3828
    %v4199 = vpack.c.bf16 %v3839, %v3836
    %v4200 = vpack.c.bf16 %v3847, %v3844
    %v4201 = vpack.c.bf16 %v3855, %v3852
    %v4202 = vpack.c.bf16 %v3863, %v3860
    %v4203 = vpack.c.bf16 %v3871, %v3868
    %v4204 = vpack.c.bf16 %v3879, %v3876
    %v4205 = vpack.c.bf16 %v3887, %v3884
    %v4206 = vpack.c.bf16 %v3895, %v3892
    %v4207 = vpack.c.bf16 %v3903, %v3900
    %v4208 = vpack.c.bf16 %v3911, %v3908
    %v4209 = vpack.c.bf16 %v3919, %v3916
    %v4210 = vpack.c.bf16 %v3927, %v3924
    %v4211 = vpack.c.bf16 %v3935, %v3932
    %v4212 = vpack.c.bf16 %v3943, %v3940
    %v4213 = vpack.c.bf16 %v3951, %v3948
    %v4214 = vpack.c.bf16 %v3959, %v3956
    %v4215 = vpack.c.bf16 %v3967, %v3964
    %v4216 = vpack.c.bf16 %v3975, %v3972
    %v4217 = vpack.c.bf16 %v3983, %v3980
    %v4218 = vpack.c.bf16 %v3991, %v3988
    %v4219 = vpack.c.bf16 %v3999, %v3996
    %v4220 = vpack.c.bf16 %v4007, %v4004
    %v4221 = vpack.c.bf16 %v4015, %v4012
    %v4222 = vpack.c.bf16 %v4023, %v4020
    %v4223 = vpack.c.bf16 %v4031, %v4028
    %v4224 = vpack.c.bf16 %v4039, %v4036
    %v4225 = vpack.c.bf16 %v4047, %v4044
    %v4226 = vpack.c.bf16 %v4055, %v4052
    %v4227 = vpack.c.bf16 %v4063, %v4060
    %v4228 = vpack.c.bf16 %v4071, %v4068
    %v4229 = vpack.c.bf16 %v4079, %v4076
    %v4230 = vpack.c.bf16 %v4087, %v4084
    %v4231 = vpack.c.bf16 %v4095, %v4092
    %v4232 = vpack.c.bf16 %v4103, %v4100
    %v4233 = vpack.c.bf16 %v4111, %v4108
    %v4234 = vpack.c.bf16 %v4119, %v4116
    %v4235 = vpack.c.bf16 %v4127, %v4124
    %v4236 = vpack.c.bf16 %v4135, %v4132
    %v4237 = vpack.c.bf16 %v4143, %v4140
    %v4238 = vpack.c.bf16 %v4151, %v4148
    %v4239 = vpack.c.bf16 %v4159, %v4156
    %v4240 = vpack.c.bf16 %v4167, %v4164
    %v4241 = vpack.c.bf16 %v4175, %v4172
    %v4242 = vpack.c.bf16 %v4183, %v4180
    %v4243 = vpack.c.bf16 %v4191, %v4188
    %v4244 = vld [vmem:[%s4] sm:$0xf]
    %v4245 = vld [vmem:[%s4 + $0x4] sm:$0xf]
    %v4246 = vld [vmem:[%s4 + $0x8] sm:$0xf]
    %v4247 = vld [vmem:[%s4 + $0xc] sm:$0xf]
    %v4248 = vld [vmem:[%s4 + $0x10] sm:$0xf]
    %v4249 = vld [vmem:[%s4 + $0x14] sm:$0x3]
    %s4250 = scalar_lea.vmem %s4, 24
    %v4251 = vld [vmem:[%s4250] sm:$0xf]
    %v4252 = vld [vmem:[%s4250 + $0x4] sm:$0xf]
    %v4253 = vld [vmem:[%s4250 + $0x8] sm:$0xf]
    %v4254 = vld [vmem:[%s4250 + $0xc] sm:$0xf]
    %v4255 = vld [vmem:[%s4250 + $0x10] sm:$0xf]
    %v4256 = vld [vmem:[%s4250 + $0x14] sm:$0x3]
    %v4263 = vunpack.c.l.b16 %v4251
    %v4264 = vunpack.c.l.b16 %v4252
    %v4265 = vunpack.c.l.b16 %v4253
    %v4266 = vunpack.c.l.b16 %v4254
    %v4267 = vunpack.c.l.b16 %v4255
    %v4268 = vunpack.c.l.b16 %v4256
    %v4269 = vpack.c.b16 %v4264, %v4263
    %v4270 = vpack.c.b16 %v4266, %v4265
    %v4271 = vpack.c.b16 %v4268, %v4267
    %vm4274 = vcmask 359424
    %v4276 = vsel %vm4274, %v4204, 0
    %v4279 = vsel %vm4274, %v4205, 0
    %v4282 = vsel %vm4274, %v4206, 0
    %v4285 = vsel %vm4274, %v4207, 0
    %v4288 = vsel %vm4274, %v4208, 0
    %v4291 = vsel %vm4274, %v4209, 0
    %v4294 = vsel %vm4274, %v4210, 0
    %v4297 = vsel %vm4274, %v4211, 0
    %v4300 = vsel %vm4274, %v4212, 0
    %v4303 = vsel %vm4274, %v4213, 0
    %vm4305 = vcmask 1045504
    %v4307 = vsel %vm4305, %v4271, 0
    %4309 = vmatprep.subr.bf16.mxu0 0
    %4310 = vmatpush1.bf16.msra.mxu0 %v4269
    %4311 = vmatprep.subr.bf16.mxu0 0
    %4312 = vmatpush1.bf16.msra.mxu0 %v4270
    %4313 = vmatprep.subr.bf16.mxu0 0
    %4314 = vmatpush1.bf16.msra.mxu0 %v4307
    %4315 = vmatprep.subr.bf16.mxu0 0
    %4316 = vmatpush1.bf16.msra.mxu0 0
    %4317 = vmatprep.subr.bf16.mxu0 0
    %4318 = vmatpush1.bf16.msra.mxu0 0
    %4319 = vmatprep.subr.bf16.mxu0 0
    %4320 = vmatpush1.bf16.msra.mxu0 0
    %4321 = vmatprep.subr.bf16.mxu0 0
    %4322 = vmatpush1.bf16.msra.mxu0 0
    %4323 = vmatprep.subr.bf16.mxu0 0
    %4324 = vmatpush1.bf16.msra.mxu0 0
    %4325 = vmatprep.subr.bf16.mxu0 0
    %4326 = vmatpush1.bf16.msra.mxu0 0
    %4327 = vmatprep.subr.bf16.mxu0 0
    %4328 = vmatpush1.bf16.msra.mxu0 0
    %4329 = vmatprep.subr.bf16.mxu0 0
    %4330 = vmatpush1.bf16.msra.mxu0 0
    %4331 = vmatprep.subr.bf16.mxu0 0
    %4332 = vmatpush1.bf16.msra.mxu0 0
    %4333 = vmatprep.subr.bf16.mxu0 0
    %4334 = vmatpush1.bf16.msra.mxu0 0
    %4335 = vmatprep.subr.bf16.mxu0 0
    %4336 = vmatpush1.bf16.msra.mxu0 0
    %4337 = vmatprep.subr.bf16.mxu0 0
    %4338 = vmatpush1.bf16.msra.mxu0 0
    %4339 = vmatprep.subr.bf16.mxu0 0
    %4340 = vmatpush1.bf16.msra.mxu0 0
    %4341 = vmatprep.mubr.bf16.mxu0 0
    %4342 = vmatmul.mubr.bf16.gmra.mrb[0].mxu0 %v4276
    %v4343 = vpop.f32.mrb[0].mxu0
    %v4344 = vadd.f32 0.0, %v4343
    %v4345 = vpop.f32.mrb[0].mxu0
    %v4346 = vpop.f32.mrb[0].mxu0
    %v4347 = vadd.f32 0.0, %v4346
    %v4348 = vpop.f32.mrb[0].mxu0
    %4349 = vmatprep.mubr.bf16.mxu0 0
    %4350 = vmatmul.mubr.bf16.gmra.mrb[0].mxu0 %v4279
    %v4351 = vpop.f32.mrb[0].mxu0
    %v4352 = vadd.f32 0.0, %v4351
    %v4353 = vpop.f32.mrb[0].mxu0
    %v4354 = vpop.f32.mrb[0].mxu0
    %v4355 = vadd.f32 0.0, %v4354
    %v4356 = vpop.f32.mrb[0].mxu0
    %4357 = vmatprep.mubr.bf16.mxu0 0
    %4358 = vmatmul.mubr.bf16.gmra.mrb[0].mxu0 %v4282
    %v4359 = vpop.f32.mrb[0].mxu0
    %v4360 = vadd.f32 0.0, %v4359
    %v4361 = vpop.f32.mrb[0].mxu0
    %v4362 = vpop.f32.mrb[0].mxu0
    %v4363 = vadd.f32 0.0, %v4362
    %v4364 = vpop.f32.mrb[0].mxu0
    %4365 = vmatprep.mubr.bf16.mxu0 0
    %4366 = vmatmul.mubr.bf16.gmra.mrb[0].mxu0 %v4285
    %v4367 = vpop.f32.mrb[0].mxu0
    %v4368 = vadd.f32 0.0, %v4367
    %v4369 = vpop.f32.mrb[0].mxu0
    %v4370 = vpop.f32.mrb[0].mxu0
    %v4371 = vadd.f32 0.0, %v4370
    %v4372 = vpop.f32.mrb[0].mxu0
    %4373 = vmatprep.mubr.bf16.mxu0 0
    %4374 = vmatmul.mubr.bf16.gmra.mrb[0].mxu0 %v4288
    %v4375 = vpop.f32.mrb[0].mxu0
    %v4376 = vadd.f32 0.0, %v4375
    %v4377 = vpop.f32.mrb[0].mxu0
    %v4378 = vpop.f32.mrb[0].mxu0
    %v4379 = vadd.f32 0.0, %v4378
    %v4380 = vpop.f32.mrb[0].mxu0
    %4381 = vmatprep.mubr.bf16.mxu0 0
    %4382 = vmatmul.mubr.bf16.gmra.mrb[0].mxu0 %v4291
    %v4383 = vpop.f32.mrb[0].mxu0
    %v4384 = vadd.f32 0.0, %v4383
    %v4385 = vpop.f32.mrb[0].mxu0
    %v4386 = vpop.f32.mrb[0].mxu0
    %v4387 = vadd.f32 0.0, %v4386
    %v4388 = vpop.f32.mrb[0].mxu0
    %4389 = vmatprep.mubr.bf16.mxu0 0
    %4390 = vmatmul.mubr.bf16.gmra.mrb[0].mxu0 %v4294
    %v4391 = vpop.f32.mrb[0].mxu0
    %v4392 = vadd.f32 0.0, %v4391
    %v4393 = vpop.f32.mrb[0].mxu0
    %v4394 = vpop.f32.mrb[0].mxu0
    %v4395 = vadd.f32 0.0, %v4394
    %v4396 = vpop.f32.mrb[0].mxu0
    %4397 = vmatprep.mubr.bf16.mxu0 0
    %4398 = vmatmul.mubr.bf16.gmra.mrb[0].mxu0 %v4297
    %v4399 = vpop.f32.mrb[0].mxu0
    %v4400 = vadd.f32 0.0, %v4399
    %v4401 = vpop.f32.mrb[0].mxu0
    %v4402 = vpop.f32.mrb[0].mxu0
    %v4403 = vadd.f32 0.0, %v4402
    %v4404 = vpop.f32.mrb[0].mxu0
    %4405 = vmatprep.mubr.bf16.mxu0 0
    %4406 = vmatmul.mubr.bf16.gmra.mrb[0].mxu0 %v4300
    %v4407 = vpop.f32.mrb[0].mxu0
    %v4408 = vadd.f32 0.0, %v4407
    %v4409 = vpop.f32.mrb[0].mxu0
    %v4410 = vpop.f32.mrb[0].mxu0
    %v4411 = vadd.f32 0.0, %v4410
    %v4412 = vpop.f32.mrb[0].mxu0
    %4413 = vmatprep.mubr.bf16.mxu0 0
    %4414 = vmatmul.mubr.bf16.gmra.mrb[0].mxu0 %v4303
    %v4415 = vpop.f32.mrb[0].mxu0
    %v4416 = vadd.f32 0.0, %v4415
    %v4417 = vpop.f32.mrb[0].mxu0
    %v4418 = vpop.f32.mrb[0].mxu0
    %v4419 = vadd.f32 0.0, %v4418
    %v4420 = vpop.f32.mrb[0].mxu0
    %4421 = vdwg.mxu0
    %v4428 = vunpack.c.l.b16 %v4244
    %v4429 = vunpack.c.l.b16 %v4245
    %v4430 = vunpack.c.l.b16 %v4246
    %v4431 = vunpack.c.l.b16 %v4247
    %v4432 = vunpack.c.l.b16 %v4248
    %v4433 = vunpack.c.l.b16 %v4249
    %v4434 = vpack.c.b16 %v4429, %v4428
    %v4435 = vpack.c.b16 %v4431, %v4430
    %v4436 = vpack.c.b16 %v4433, %v4432
    %v4440 = vsel %vm4274, %v4194, 0
    %v4443 = vsel %vm4274, %v4195, 0
    %v4446 = vsel %vm4274, %v4196, 0
    %v4449 = vsel %vm4274, %v4197, 0
    %v4452 = vsel %vm4274, %v4198, 0
    %v4455 = vsel %vm4274, %v4199, 0
    %v4458 = vsel %vm4274, %v4200, 0
    %v4461 = vsel %vm4274, %v4201, 0
    %v4464 = vsel %vm4274, %v4202, 0
    %v4467 = vsel %vm4274, %v4203, 0
    %v4470 = vsel %vm4305, %v4436, 0
    %4472 = vmatprep.subr.bf16.mxu0 0
    %4473 = vmatpush1.bf16.msra.mxu0 %v4434
    %4474 = vmatprep.subr.bf16.mxu0 0
    %4475 = vmatpush1.bf16.msra.mxu0 %v4435
    %4476 = vmatprep.subr.bf16.mxu0 0
    %4477 = vmatpush1.bf16.msra.mxu0 %v4470
    %4478 = vmatprep.subr.bf16.mxu0 0
    %4479 = vmatpush1.bf16.msra.mxu0 0
    %4480 = vmatprep.subr.bf16.mxu0 0
    %4481 = vmatpush1.bf16.msra.mxu0 0
    %4482 = vmatprep.subr.bf16.mxu0 0
    %4483 = vmatpush1.bf16.msra.mxu0 0
    %4484 = vmatprep.subr.bf16.mxu0 0
    %4485 = vmatpush1.bf16.msra.mxu0 0
    %4486 = vmatprep.subr.bf16.mxu0 0
    %4487 = vmatpush1.bf16.msra.mxu0 0
    %4488 = vmatprep.subr.bf16.mxu0 0
    %4489 = vmatpush1.bf16.msra.mxu0 0
    %4490 = vmatprep.subr.bf16.mxu0 0
    %4491 = vmatpush1.bf16.msra.mxu0 0
    %4492 = vmatprep.subr.bf16.mxu0 0
    %4493 = vmatpush1.bf16.msra.mxu0 0
    %4494 = vmatprep.subr.bf16.mxu0 0
    %4495 = vmatpush1.bf16.msra.mxu0 0
    %4496 = vmatprep.subr.bf16.mxu0 0
    %4497 = vmatpush1.bf16.msra.mxu0 0
    %4498 = vmatprep.subr.bf16.mxu0 0
    %4499 = vmatpush1.bf16.msra.mxu0 0
    %4500 = vmatprep.subr.bf16.mxu0 0
    %4501 = vmatpush1.bf16.msra.mxu0 0
    %4502 = vmatprep.subr.bf16.mxu0 0
    %4503 = vmatpush1.bf16.msra.mxu0 0
    %4504 = vmatprep.mubr.bf16.mxu0 0
    %4505 = vmatmul.mubr.bf16.gmra.mrb[0].mxu0 %v4440
    %v4506 = vpop.f32.mrb[0].mxu0
    %v4507 = vadd.f32 %v4344, %v4506
    %v4508 = vpop.f32.mrb[0].mxu0
    %v4509 = vpop.f32.mrb[0].mxu0
    %v4510 = vadd.f32 %v4347, %v4509
    %v4511 = vpop.f32.mrb[0].mxu0
    %4512 = vmatprep.mubr.bf16.mxu0 0
    %4513 = vmatmul.mubr.bf16.gmra.mrb[0].mxu0 %v4443
    %v4514 = vpop.f32.mrb[0].mxu0
    %v4515 = vadd.f32 %v4352, %v4514
    %v4516 = vpop.f32.mrb[0].mxu0
    %v4517 = vpop.f32.mrb[0].mxu0
    %v4518 = vadd.f32 %v4355, %v4517
    %v4519 = vpop.f32.mrb[0].mxu0
    %4520 = vmatprep.mubr.bf16.mxu0 0
    %4521 = vmatmul.mubr.bf16.gmra.mrb[0].mxu0 %v4446
    %v4522 = vpop.f32.mrb[0].mxu0
    %v4523 = vadd.f32 %v4360, %v4522
    %v4524 = vpop.f32.mrb[0].mxu0
    %v4525 = vpop.f32.mrb[0].mxu0
    %v4526 = vadd.f32 %v4363, %v4525
    %v4527 = vpop.f32.mrb[0].mxu0
    %4528 = vmatprep.mubr.bf16.mxu0 0
    %4529 = vmatmul.mubr.bf16.gmra.mrb[0].mxu0 %v4449
    %v4530 = vpop.f32.mrb[0].mxu0
    %v4531 = vadd.f32 %v4368, %v4530
    %v4532 = vpop.f32.mrb[0].mxu0
    %v4533 = vpop.f32.mrb[0].mxu0
    %v4534 = vadd.f32 %v4371, %v4533
    %v4535 = vpop.f32.mrb[0].mxu0
    %4536 = vmatprep.mubr.bf16.mxu0 0
    %4537 = vmatmul.mubr.bf16.gmra.mrb[0].mxu0 %v4452
    %v4538 = vpop.f32.mrb[0].mxu0
    %v4539 = vadd.f32 %v4376, %v4538
    %v4540 = vpop.f32.mrb[0].mxu0
    %v4541 = vpop.f32.mrb[0].mxu0
    %v4542 = vadd.f32 %v4379, %v4541
    %v4543 = vpop.f32.mrb[0].mxu0
    %4544 = vmatprep.mubr.bf16.mxu0 0
    %4545 = vmatmul.mubr.bf16.gmra.mrb[0].mxu0 %v4455
    %v4546 = vpop.f32.mrb[0].mxu0
    %v4547 = vadd.f32 %v4384, %v4546
    %v4548 = vpop.f32.mrb[0].mxu0
    %v4549 = vpop.f32.mrb[0].mxu0
    %v4550 = vadd.f32 %v4387, %v4549
    %v4551 = vpop.f32.mrb[0].mxu0
    %4552 = vmatprep.mubr.bf16.mxu0 0
    %4553 = vmatmul.mubr.bf16.gmra.mrb[0].mxu0 %v4458
    %v4554 = vpop.f32.mrb[0].mxu0
    %v4555 = vadd.f32 %v4392, %v4554
    %v4556 = vpop.f32.mrb[0].mxu0
    %v4557 = vpop.f32.mrb[0].mxu0
    %v4558 = vadd.f32 %v4395, %v4557
    %v4559 = vpop.f32.mrb[0].mxu0
    %4560 = vmatprep.mubr.bf16.mxu0 0
    %4561 = vmatmul.mubr.bf16.gmra.mrb[0].mxu0 %v4461
    %v4562 = vpop.f32.mrb[0].mxu0
    %v4563 = vadd.f32 %v4400, %v4562
    %v4564 = vpop.f32.mrb[0].mxu0
    %v4565 = vpop.f32.mrb[0].mxu0
    %v4566 = vadd.f32 %v4403, %v4565
    %v4567 = vpop.f32.mrb[0].mxu0
    %4568 = vmatprep.mubr.bf16.mxu0 0
    %4569 = vmatmul.mubr.bf16.gmra.mrb[0].mxu0 %v4464
    %v4570 = vpop.f32.mrb[0].mxu0
    %v4571 = vadd.f32 %v4408, %v4570
    %v4572 = vpop.f32.mrb[0].mxu0
    %v4573 = vpop.f32.mrb[0].mxu0
    %v4574 = vadd.f32 %v4411, %v4573
    %v4575 = vpop.f32.mrb[0].mxu0
    %4576 = vmatprep.mubr.bf16.mxu0 0
    %4577 = vmatmul.mubr.bf16.gmra.mrb[0].mxu0 %v4467
    %v4578 = vpop.f32.mrb[0].mxu0
    %v4579 = vadd.f32 %v4416, %v4578
    %v4580 = vpop.f32.mrb[0].mxu0
    %v4581 = vpop.f32.mrb[0].mxu0
    %v4582 = vadd.f32 %v4419, %v4581
    %v4583 = vpop.f32.mrb[0].mxu0
    %4584 = vdwg.mxu0
    %s4585 = scalar_lea.vmem %s4, 48
    %v4586 = vld [vmem:[%s4585] sm:$0xf]
    %v4587 = vld [vmem:[%s4585 + $0x4] sm:$0xf]
    %v4588 = vld [vmem:[%s4585 + $0x8] sm:$0xf]
    %v4589 = vld [vmem:[%s4585 + $0xc] sm:$0xf]
    %v4590 = vld [vmem:[%s4585 + $0x10] sm:$0xf]
    %v4591 = vld [vmem:[%s4585 + $0x14] sm:$0x3]
    %v4598 = vunpack.c.l.b16 %v4586
    %v4599 = vunpack.c.l.b16 %v4587
    %v4600 = vunpack.c.l.b16 %v4588
    %v4601 = vunpack.c.l.b16 %v4589
    %v4602 = vunpack.c.l.b16 %v4590
    %v4603 = vunpack.c.l.b16 %v4591
    %v4604 = vpack.c.b16 %v4599, %v4598
    %v4605 = vpack.c.b16 %v4601, %v4600
    %v4606 = vpack.c.b16 %v4603, %v4602
    %v4610 = vsel %vm4274, %v4214, 0
    %v4613 = vsel %vm4274, %v4215, 0
    %v4616 = vsel %vm4274, %v4216, 0
    %v4619 = vsel %vm4274, %v4217, 0
    %v4622 = vsel %vm4274, %v4218, 0
    %v4625 = vsel %vm4274, %v4219, 0
    %v4628 = vsel %vm4274, %v4220, 0
    %v4631 = vsel %vm4274, %v4221, 0
    %v4634 = vsel %vm4274, %v4222, 0
    %v4637 = vsel %vm4274, %v4223, 0
    %v4640 = vsel %vm4305, %v4606, 0
    %4642 = vmatprep.subr.bf16.mxu0 0
    %4643 = vmatpush1.bf16.msra.mxu0 %v4604
    %4644 = vmatprep.subr.bf16.mxu0 0
    %4645 = vmatpush1.bf16.msra.mxu0 %v4605
    %4646 = vmatprep.subr.bf16.mxu0 0
    %4647 = vmatpush1.bf16.msra.mxu0 %v4640
    %4648 = vmatprep.subr.bf16.mxu0 0
    %4649 = vmatpush1.bf16.msra.mxu0 0
    %4650 = vmatprep.subr.bf16.mxu0 0
    %4651 = vmatpush1.bf16.msra.mxu0 0
    %4652 = vmatprep.subr.bf16.mxu0 0
    %4653 = vmatpush1.bf16.msra.mxu0 0
    %4654 = vmatprep.subr.bf16.mxu0 0
    %4655 = vmatpush1.bf16.msra.mxu0 0
    %4656 = vmatprep.subr.bf16.mxu0 0
    %4657 = vmatpush1.bf16.msra.mxu0 0
    %4658 = vmatprep.subr.bf16.mxu0 0
    %4659 = vmatpush1.bf16.msra.mxu0 0
    %4660 = vmatprep.subr.bf16.mxu0 0
    %4661 = vmatpush1.bf16.msra.mxu0 0
    %4662 = vmatprep.subr.bf16.mxu0 0
    %4663 = vmatpush1.bf16.msra.mxu0 0
    %4664 = vmatprep.subr.bf16.mxu0 0
    %4665 = vmatpush1.bf16.msra.mxu0 0
    %4666 = vmatprep.subr.bf16.mxu0 0
    %4667 = vmatpush1.bf16.msra.mxu0 0
    %4668 = vmatprep.subr.bf16.mxu0 0
    %4669 = vmatpush1.bf16.msra.mxu0 0
    %4670 = vmatprep.subr.bf16.mxu0 0
    %4671 = vmatpush1.bf16.msra.mxu0 0
    %4672 = vmatprep.subr.bf16.mxu0 0
    %4673 = vmatpush1.bf16.msra.mxu0 0
    %4674 = vmatprep.mubr.bf16.mxu0 0
    %4675 = vmatmul.mubr.bf16.gmra.mrb[0].mxu0 %v4610
    %v4676 = vpop.f32.mrb[0].mxu0
    %v4677 = vadd.f32 0.0, %v4676
    %v4678 = vpop.f32.mrb[0].mxu0
    %v4679 = vpop.f32.mrb[0].mxu0
    %v4680 = vadd.f32 0.0, %v4679
    %v4681 = vpop.f32.mrb[0].mxu0
    %4682 = vmatprep.mubr.bf16.mxu0 0
    %4683 = vmatmul.mubr.bf16.gmra.mrb[0].mxu0 %v4613
    %v4684 = vpop.f32.mrb[0].mxu0
    %v4685 = vadd.f32 0.0, %v4684
    %v4686 = vpop.f32.mrb[0].mxu0
    %v4687 = vpop.f32.mrb[0].mxu0
    %v4688 = vadd.f32 0.0, %v4687
    %v4689 = vpop.f32.mrb[0].mxu0
    %4690 = vmatprep.mubr.bf16.mxu0 0
    %4691 = vmatmul.mubr.bf16.gmra.mrb[0].mxu0 %v4616
    %v4692 = vpop.f32.mrb[0].mxu0
    %v4693 = vadd.f32 0.0, %v4692
    %v4694 = vpop.f32.mrb[0].mxu0
    %v4695 = vpop.f32.mrb[0].mxu0
    %v4696 = vadd.f32 0.0, %v4695
    %v4697 = vpop.f32.mrb[0].mxu0
    %4698 = vmatprep.mubr.bf16.mxu0 0
    %4699 = vmatmul.mubr.bf16.gmra.mrb[0].mxu0 %v4619
    %v4700 = vpop.f32.mrb[0].mxu0
    %v4701 = vadd.f32 0.0, %v4700
    %v4702 = vpop.f32.mrb[0].mxu0
    %v4703 = vpop.f32.mrb[0].mxu0
    %v4704 = vadd.f32 0.0, %v4703
    %v4705 = vpop.f32.mrb[0].mxu0
    %4706 = vmatprep.mubr.bf16.mxu0 0
    %4707 = vmatmul.mubr.bf16.gmra.mrb[0].mxu0 %v4622
    %v4708 = vpop.f32.mrb[0].mxu0
    %v4709 = vadd.f32 0.0, %v4708
    %v4710 = vpop.f32.mrb[0].mxu0
    %v4711 = vpop.f32.mrb[0].mxu0
    %v4712 = vadd.f32 0.0, %v4711
    %v4713 = vpop.f32.mrb[0].mxu0
    %4714 = vmatprep.mubr.bf16.mxu0 0
    %4715 = vmatmul.mubr.bf16.gmra.mrb[0].mxu0 %v4625
    %v4716 = vpop.f32.mrb[0].mxu0
    %v4717 = vadd.f32 0.0, %v4716
    %v4718 = vpop.f32.mrb[0].mxu0
    %v4719 = vpop.f32.mrb[0].mxu0
    %v4720 = vadd.f32 0.0, %v4719
    %v4721 = vpop.f32.mrb[0].mxu0
    %4722 = vmatprep.mubr.bf16.mxu0 0
    %4723 = vmatmul.mubr.bf16.gmra.mrb[0].mxu0 %v4628
    %v4724 = vpop.f32.mrb[0].mxu0
    %v4725 = vadd.f32 0.0, %v4724
    %v4726 = vpop.f32.mrb[0].mxu0
    %v4727 = vpop.f32.mrb[0].mxu0
    %v4728 = vadd.f32 0.0, %v4727
    %v4729 = vpop.f32.mrb[0].mxu0
    %4730 = vmatprep.mubr.bf16.mxu0 0
    %4731 = vmatmul.mubr.bf16.gmra.mrb[0].mxu0 %v4631
    %v4732 = vpop.f32.mrb[0].mxu0
    %v4733 = vadd.f32 0.0, %v4732
    %v4734 = vpop.f32.mrb[0].mxu0
    %v4735 = vpop.f32.mrb[0].mxu0
    %v4736 = vadd.f32 0.0, %v4735
    %v4737 = vpop.f32.mrb[0].mxu0
    %4738 = vmatprep.mubr.bf16.mxu0 0
    %4739 = vmatmul.mubr.bf16.gmra.mrb[0].mxu0 %v4634
    %v4740 = vpop.f32.mrb[0].mxu0
    %v4741 = vadd.f32 0.0, %v4740
    %v4742 = vpop.f32.mrb[0].mxu0
    %v4743 = vpop.f32.mrb[0].mxu0
    %v4744 = vadd.f32 0.0, %v4743
    %v4745 = vpop.f32.mrb[0].mxu0
    %4746 = vmatprep.mubr.bf16.mxu0 0
    %4747 = vmatmul.mubr.bf16.gmra.mrb[0].mxu0 %v4637
    %v4748 = vpop.f32.mrb[0].mxu0
    %v4749 = vadd.f32 0.0, %v4748
    %v4750 = vpop.f32.mrb[0].mxu0
    %v4751 = vpop.f32.mrb[0].mxu0
    %v4752 = vadd.f32 0.0, %v4751
    %v4753 = vpop.f32.mrb[0].mxu0
    %4754 = vdwg.mxu0
    %v4755 = vadd.f32 %v4507, %v4677
    %v4756 = vadd.f32 %v4510, %v4680
    %v4757 = vadd.f32 %v4515, %v4685
    %v4758 = vadd.f32 %v4518, %v4688
    %v4759 = vadd.f32 %v4523, %v4693
    %v4760 = vadd.f32 %v4526, %v4696
    %v4761 = vadd.f32 %v4531, %v4701
    %v4762 = vadd.f32 %v4534, %v4704
    %v4763 = vadd.f32 %v4539, %v4709
    %v4764 = vadd.f32 %v4542, %v4712
    %v4765 = vadd.f32 %v4547, %v4717
    %v4766 = vadd.f32 %v4550, %v4720
    %v4767 = vadd.f32 %v4555, %v4725
    %v4768 = vadd.f32 %v4558, %v4728
    %v4769 = vadd.f32 %v4563, %v4733
    %v4770 = vadd.f32 %v4566, %v4736
    %v4771 = vadd.f32 %v4571, %v4741
    %v4772 = vadd.f32 %v4574, %v4744
    %v4773 = vadd.f32 %v4579, %v4749
    %v4774 = vadd.f32 %v4582, %v4752
    %s4775 = scalar_lea.vmem %s4, 72
    %v4776 = vld [vmem:[%s4775] sm:$0xf]
    %v4777 = vld [vmem:[%s4775 + $0x4] sm:$0xf]
    %v4778 = vld [vmem:[%s4775 + $0x8] sm:$0xf]
    %v4779 = vld [vmem:[%s4775 + $0xc] sm:$0xf]
    %v4780 = vld [vmem:[%s4775 + $0x10] sm:$0xf]
    %v4781 = vld [vmem:[%s4775 + $0x14] sm:$0x3]
    %v4788 = vunpack.c.l.b16 %v4776
    %v4789 = vunpack.c.l.b16 %v4777
    %v4790 = vunpack.c.l.b16 %v4778
    %v4791 = vunpack.c.l.b16 %v4779
    %v4792 = vunpack.c.l.b16 %v4780
    %v4793 = vunpack.c.l.b16 %v4781
    %v4794 = vpack.c.b16 %v4789, %v4788
    %v4795 = vpack.c.b16 %v4791, %v4790
    %v4796 = vpack.c.b16 %v4793, %v4792
    %v4800 = vsel %vm4274, %v4224, 0
    %v4803 = vsel %vm4274, %v4225, 0
    %v4806 = vsel %vm4274, %v4226, 0
    %v4809 = vsel %vm4274, %v4227, 0
    %v4812 = vsel %vm4274, %v4228, 0
    %v4815 = vsel %vm4274, %v4229, 0
    %v4818 = vsel %vm4274, %v4230, 0
    %v4821 = vsel %vm4274, %v4231, 0
    %v4824 = vsel %vm4274, %v4232, 0
    %v4827 = vsel %vm4274, %v4233, 0
    %v4830 = vsel %vm4305, %v4796, 0
    %4832 = vmatprep.subr.bf16.mxu0 0
    %4833 = vmatpush1.bf16.msra.mxu0 %v4794
    %4834 = vmatprep.subr.bf16.mxu0 0
    %4835 = vmatpush1.bf16.msra.mxu0 %v4795
    %4836 = vmatprep.subr.bf16.mxu0 0
    %4837 = vmatpush1.bf16.msra.mxu0 %v4830
    %4838 = vmatprep.subr.bf16.mxu0 0
    %4839 = vmatpush1.bf16.msra.mxu0 0
    %4840 = vmatprep.subr.bf16.mxu0 0
    %4841 = vmatpush1.bf16.msra.mxu0 0
    %4842 = vmatprep.subr.bf16.mxu0 0
    %4843 = vmatpush1.bf16.msra.mxu0 0
    %4844 = vmatprep.subr.bf16.mxu0 0
    %4845 = vmatpush1.bf16.msra.mxu0 0
    %4846 = vmatprep.subr.bf16.mxu0 0
    %4847 = vmatpush1.bf16.msra.mxu0 0
    %4848 = vmatprep.subr.bf16.mxu0 0
    %4849 = vmatpush1.bf16.msra.mxu0 0
    %4850 = vmatprep.subr.bf16.mxu0 0
    %4851 = vmatpush1.bf16.msra.mxu0 0
    %4852 = vmatprep.subr.bf16.mxu0 0
    %4853 = vmatpush1.bf16.msra.mxu0 0
    %4854 = vmatprep.subr.bf16.mxu0 0
    %4855 = vmatpush1.bf16.msra.mxu0 0
    %4856 = vmatprep.subr.bf16.mxu0 0
    %4857 = vmatpush1.bf16.msra.mxu0 0
    %4858 = vmatprep.subr.bf16.mxu0 0
    %4859 = vmatpush1.bf16.msra.mxu0 0
    %4860 = vmatprep.subr.bf16.mxu0 0
    %4861 = vmatpush1.bf16.msra.mxu0 0
    %4862 = vmatprep.subr.bf16.mxu0 0
    %4863 = vmatpush1.bf16.msra.mxu0 0
    %4864 = vmatprep.mubr.bf16.mxu0 0
    %4865 = vmatmul.mubr.bf16.gmra.mrb[0].mxu0 %v4800
    %v4866 = vpop.f32.mrb[0].mxu0
    %v4867 = vadd.f32 0.0, %v4866
    %v4868 = vpop.f32.mrb[0].mxu0
    %v4869 = vpop.f32.mrb[0].mxu0
    %v4870 = vadd.f32 0.0, %v4869
    %v4871 = vpop.f32.mrb[0].mxu0
    %4872 = vmatprep.mubr.bf16.mxu0 0
    %4873 = vmatmul.mubr.bf16.gmra.mrb[0].mxu0 %v4803
    %v4874 = vpop.f32.mrb[0].mxu0
    %v4875 = vadd.f32 0.0, %v4874
    %v4876 = vpop.f32.mrb[0].mxu0
    %v4877 = vpop.f32.mrb[0].mxu0
    %v4878 = vadd.f32 0.0, %v4877
    %v4879 = vpop.f32.mrb[0].mxu0
    %4880 = vmatprep.mubr.bf16.mxu0 0
    %4881 = vmatmul.mubr.bf16.gmra.mrb[0].mxu0 %v4806
    %v4882 = vpop.f32.mrb[0].mxu0
    %v4883 = vadd.f32 0.0, %v4882
    %v4884 = vpop.f32.mrb[0].mxu0
    %v4885 = vpop.f32.mrb[0].mxu0
    %v4886 = vadd.f32 0.0, %v4885
    %v4887 = vpop.f32.mrb[0].mxu0
    %4888 = vmatprep.mubr.bf16.mxu0 0
    %4889 = vmatmul.mubr.bf16.gmra.mrb[0].mxu0 %v4809
    %v4890 = vpop.f32.mrb[0].mxu0
    %v4891 = vadd.f32 0.0, %v4890
    %v4892 = vpop.f32.mrb[0].mxu0
    %v4893 = vpop.f32.mrb[0].mxu0
    %v4894 = vadd.f32 0.0, %v4893
    %v4895 = vpop.f32.mrb[0].mxu0
    %4896 = vmatprep.mubr.bf16.mxu0 0
    %4897 = vmatmul.mubr.bf16.gmra.mrb[0].mxu0 %v4812
    %v4898 = vpop.f32.mrb[0].mxu0
    %v4899 = vadd.f32 0.0, %v4898
    %v4900 = vpop.f32.mrb[0].mxu0
    %v4901 = vpop.f32.mrb[0].mxu0
    %v4902 = vadd.f32 0.0, %v4901
    %v4903 = vpop.f32.mrb[0].mxu0
    %4904 = vmatprep.mubr.bf16.mxu0 0
    %4905 = vmatmul.mubr.bf16.gmra.mrb[0].mxu0 %v4815
    %v4906 = vpop.f32.mrb[0].mxu0
    %v4907 = vadd.f32 0.0, %v4906
    %v4908 = vpop.f32.mrb[0].mxu0
    %v4909 = vpop.f32.mrb[0].mxu0
    %v4910 = vadd.f32 0.0, %v4909
    %v4911 = vpop.f32.mrb[0].mxu0
    %4912 = vmatprep.mubr.bf16.mxu0 0
    %4913 = vmatmul.mubr.bf16.gmra.mrb[0].mxu0 %v4818
    %v4914 = vpop.f32.mrb[0].mxu0
    %v4915 = vadd.f32 0.0, %v4914
    %v4916 = vpop.f32.mrb[0].mxu0
    %v4917 = vpop.f32.mrb[0].mxu0
    %v4918 = vadd.f32 0.0, %v4917
    %v4919 = vpop.f32.mrb[0].mxu0
    %4920 = vmatprep.mubr.bf16.mxu0 0
    %4921 = vmatmul.mubr.bf16.gmra.mrb[0].mxu0 %v4821
    %v4922 = vpop.f32.mrb[0].mxu0
    %v4923 = vadd.f32 0.0, %v4922
    %v4924 = vpop.f32.mrb[0].mxu0
    %v4925 = vpop.f32.mrb[0].mxu0
    %v4926 = vadd.f32 0.0, %v4925
    %v4927 = vpop.f32.mrb[0].mxu0
    %4928 = vmatprep.mubr.bf16.mxu0 0
    %4929 = vmatmul.mubr.bf16.gmra.mrb[0].mxu0 %v4824
    %v4930 = vpop.f32.mrb[0].mxu0
    %v4931 = vadd.f32 0.0, %v4930
    %v4932 = vpop.f32.mrb[0].mxu0
    %v4933 = vpop.f32.mrb[0].mxu0
    %v4934 = vadd.f32 0.0, %v4933
    %v4935 = vpop.f32.mrb[0].mxu0
    %4936 = vmatprep.mubr.bf16.mxu0 0
    %4937 = vmatmul.mubr.bf16.gmra.mrb[0].mxu0 %v4827
    %v4938 = vpop.f32.mrb[0].mxu0
    %v4939 = vadd.f32 0.0, %v4938
    %v4940 = vpop.f32.mrb[0].mxu0
    %v4941 = vpop.f32.mrb[0].mxu0
    %v4942 = vadd.f32 0.0, %v4941
    %v4943 = vpop.f32.mrb[0].mxu0
    %4944 = vdwg.mxu0
    %v4945 = vadd.f32 %v4755, %v4867
    %v4946 = vadd.f32 %v4756, %v4870
    %v4947 = vadd.f32 %v4757, %v4875
    %v4948 = vadd.f32 %v4758, %v4878
    %v4949 = vadd.f32 %v4759, %v4883
    %v4950 = vadd.f32 %v4760, %v4886
    %v4951 = vadd.f32 %v4761, %v4891
    %v4952 = vadd.f32 %v4762, %v4894
    %v4953 = vadd.f32 %v4763, %v4899
    %v4954 = vadd.f32 %v4764, %v4902
    %v4955 = vadd.f32 %v4765, %v4907
    %v4956 = vadd.f32 %v4766, %v4910
    %v4957 = vadd.f32 %v4767, %v4915
    %v4958 = vadd.f32 %v4768, %v4918
    %v4959 = vadd.f32 %v4769, %v4923
    %v4960 = vadd.f32 %v4770, %v4926
    %v4961 = vadd.f32 %v4771, %v4931
    %v4962 = vadd.f32 %v4772, %v4934
    %v4963 = vadd.f32 %v4773, %v4939
    %v4964 = vadd.f32 %v4774, %v4942
    %s4965 = scalar_lea.vmem %s4, 96
    %v4966 = vld [vmem:[%s4965] sm:$0xf]
    %v4967 = vld [vmem:[%s4965 + $0x4] sm:$0xf]
    %v4968 = vld [vmem:[%s4965 + $0x8] sm:$0xf]
    %v4969 = vld [vmem:[%s4965 + $0xc] sm:$0xf]
    %v4970 = vld [vmem:[%s4965 + $0x10] sm:$0xf]
    %v4971 = vld [vmem:[%s4965 + $0x14] sm:$0x3]
    %v4978 = vunpack.c.l.b16 %v4966
    %v4979 = vunpack.c.l.b16 %v4967
    %v4980 = vunpack.c.l.b16 %v4968
    %v4981 = vunpack.c.l.b16 %v4969
    %v4982 = vunpack.c.l.b16 %v4970
    %v4983 = vunpack.c.l.b16 %v4971
    %v4984 = vpack.c.b16 %v4979, %v4978
    %v4985 = vpack.c.b16 %v4981, %v4980
    %v4986 = vpack.c.b16 %v4983, %v4982
    %v4990 = vsel %vm4274, %v4234, 0
    %v4993 = vsel %vm4274, %v4235, 0
    %v4996 = vsel %vm4274, %v4236, 0
    %v4999 = vsel %vm4274, %v4237, 0
    %v5002 = vsel %vm4274, %v4238, 0
    %v5005 = vsel %vm4274, %v4239, 0
    %v5008 = vsel %vm4274, %v4240, 0
    %v5011 = vsel %vm4274, %v4241, 0
    %v5014 = vsel %vm4274, %v4242, 0
    %v5017 = vsel %vm4274, %v4243, 0
    %v5020 = vsel %vm4305, %v4986, 0
    %5022 = vmatprep.subr.bf16.mxu0 0
    %5023 = vmatpush1.bf16.msra.mxu0 %v4984
    %5024 = vmatprep.subr.bf16.mxu0 0
    %5025 = vmatpush1.bf16.msra.mxu0 %v4985
    %5026 = vmatprep.subr.bf16.mxu0 0
    %5027 = vmatpush1.bf16.msra.mxu0 %v5020
    %5028 = vmatprep.subr.bf16.mxu0 0
    %5029 = vmatpush1.bf16.msra.mxu0 0
    %5030 = vmatprep.subr.bf16.mxu0 0
    %5031 = vmatpush1.bf16.msra.mxu0 0
    %5032 = vmatprep.subr.bf16.mxu0 0
    %5033 = vmatpush1.bf16.msra.mxu0 0
    %5034 = vmatprep.subr.bf16.mxu0 0
    %5035 = vmatpush1.bf16.msra.mxu0 0
    %5036 = vmatprep.subr.bf16.mxu0 0
    %5037 = vmatpush1.bf16.msra.mxu0 0
    %5038 = vmatprep.subr.bf16.mxu0 0
    %5039 = vmatpush1.bf16.msra.mxu0 0
    %5040 = vmatprep.subr.bf16.mxu0 0
    %5041 = vmatpush1.bf16.msra.mxu0 0
    %5042 = vmatprep.subr.bf16.mxu0 0
    %5043 = vmatpush1.bf16.msra.mxu0 0
    %5044 = vmatprep.subr.bf16.mxu0 0
    %5045 = vmatpush1.bf16.msra.mxu0 0
    %5046 = vmatprep.subr.bf16.mxu0 0
    %5047 = vmatpush1.bf16.msra.mxu0 0
    %5048 = vmatprep.subr.bf16.mxu0 0
    %5049 = vmatpush1.bf16.msra.mxu0 0
    %5050 = vmatprep.subr.bf16.mxu0 0
    %5051 = vmatpush1.bf16.msra.mxu0 0
    %5052 = vmatprep.subr.bf16.mxu0 0
    %5053 = vmatpush1.bf16.msra.mxu0 0
    %5054 = vmatprep.mubr.bf16.mxu0 0
    %5055 = vmatmul.mubr.bf16.gmra.mrb[0].mxu0 %v4990
    %v5056 = vpop.f32.mrb[0].mxu0
    %v5057 = vadd.f32 0.0, %v5056
    %v5058 = vpop.f32.mrb[0].mxu0
    %v5059 = vpop.f32.mrb[0].mxu0
    %v5060 = vadd.f32 0.0, %v5059
    %v5061 = vpop.f32.mrb[0].mxu0
    %5062 = vmatprep.mubr.bf16.mxu0 0
    %5063 = vmatmul.mubr.bf16.gmra.mrb[0].mxu0 %v4993
    %v5064 = vpop.f32.mrb[0].mxu0
    %v5065 = vadd.f32 0.0, %v5064
    %v5066 = vpop.f32.mrb[0].mxu0
    %v5067 = vpop.f32.mrb[0].mxu0
    %v5068 = vadd.f32 0.0, %v5067
    %v5069 = vpop.f32.mrb[0].mxu0
    %5070 = vmatprep.mubr.bf16.mxu0 0
    %5071 = vmatmul.mubr.bf16.gmra.mrb[0].mxu0 %v4996
    %v5072 = vpop.f32.mrb[0].mxu0
    %v5073 = vadd.f32 0.0, %v5072
    %v5074 = vpop.f32.mrb[0].mxu0
    %v5075 = vpop.f32.mrb[0].mxu0
    %v5076 = vadd.f32 0.0, %v5075
    %v5077 = vpop.f32.mrb[0].mxu0
    %5078 = vmatprep.mubr.bf16.mxu0 0
    %5079 = vmatmul.mubr.bf16.gmra.mrb[0].mxu0 %v4999
    %v5080 = vpop.f32.mrb[0].mxu0
    %v5081 = vadd.f32 0.0, %v5080
    %v5082 = vpop.f32.mrb[0].mxu0
    %v5083 = vpop.f32.mrb[0].mxu0
    %v5084 = vadd.f32 0.0, %v5083
    %v5085 = vpop.f32.mrb[0].mxu0
    %5086 = vmatprep.mubr.bf16.mxu0 0
    %5087 = vmatmul.mubr.bf16.gmra.mrb[0].mxu0 %v5002
    %v5088 = vpop.f32.mrb[0].mxu0
    %v5089 = vadd.f32 0.0, %v5088
    %v5090 = vpop.f32.mrb[0].mxu0
    %v5091 = vpop.f32.mrb[0].mxu0
    %v5092 = vadd.f32 0.0, %v5091
    %v5093 = vpop.f32.mrb[0].mxu0
    %5094 = vmatprep.mubr.bf16.mxu0 0
    %5095 = vmatmul.mubr.bf16.gmra.mrb[0].mxu0 %v5005
    %v5096 = vpop.f32.mrb[0].mxu0
    %v5097 = vadd.f32 0.0, %v5096
    %v5098 = vpop.f32.mrb[0].mxu0
    %v5099 = vpop.f32.mrb[0].mxu0
    %v5100 = vadd.f32 0.0, %v5099
    %v5101 = vpop.f32.mrb[0].mxu0
    %5102 = vmatprep.mubr.bf16.mxu0 0
    %5103 = vmatmul.mubr.bf16.gmra.mrb[0].mxu0 %v5008
    %v5104 = vpop.f32.mrb[0].mxu0
    %v5105 = vadd.f32 0.0, %v5104
    %v5106 = vpop.f32.mrb[0].mxu0
    %v5107 = vpop.f32.mrb[0].mxu0
    %v5108 = vadd.f32 0.0, %v5107
    %v5109 = vpop.f32.mrb[0].mxu0
    %5110 = vmatprep.mubr.bf16.mxu0 0
    %5111 = vmatmul.mubr.bf16.gmra.mrb[0].mxu0 %v5011
    %v5112 = vpop.f32.mrb[0].mxu0
    %v5113 = vadd.f32 0.0, %v5112
    %v5114 = vpop.f32.mrb[0].mxu0
    %v5115 = vpop.f32.mrb[0].mxu0
    %v5116 = vadd.f32 0.0, %v5115
    %v5117 = vpop.f32.mrb[0].mxu0
    %5118 = vmatprep.mubr.bf16.mxu0 0
    %5119 = vmatmul.mubr.bf16.gmra.mrb[0].mxu0 %v5014
    %v5120 = vpop.f32.mrb[0].mxu0
    %v5121 = vadd.f32 0.0, %v5120
    %v5122 = vpop.f32.mrb[0].mxu0
    %v5123 = vpop.f32.mrb[0].mxu0
    %v5124 = vadd.f32 0.0, %v5123
    %v5125 = vpop.f32.mrb[0].mxu0
    %5126 = vmatprep.mubr.bf16.mxu0 0
    %5127 = vmatmul.mubr.bf16.gmra.mrb[0].mxu0 %v5017
    %v5128 = vpop.f32.mrb[0].mxu0
    %v5129 = vadd.f32 0.0, %v5128
    %v5130 = vpop.f32.mrb[0].mxu0
    %v5131 = vpop.f32.mrb[0].mxu0
    %v5132 = vadd.f32 0.0, %v5131
    %v5133 = vpop.f32.mrb[0].mxu0
    %5134 = vdwg.mxu0
    %v5135 = vadd.f32 %v4945, %v5057
    %v5136 = vadd.f32 %v4946, %v5060
    %v5137 = vadd.f32 %v4947, %v5065
    %v5138 = vadd.f32 %v4948, %v5068
    %v5139 = vadd.f32 %v4949, %v5073
    %v5140 = vadd.f32 %v4950, %v5076
    %v5141 = vadd.f32 %v4951, %v5081
    %v5142 = vadd.f32 %v4952, %v5084
    %v5143 = vadd.f32 %v4953, %v5089
    %v5144 = vadd.f32 %v4954, %v5092
    %v5145 = vadd.f32 %v4955, %v5097
    %v5146 = vadd.f32 %v4956, %v5100
    %v5147 = vadd.f32 %v4957, %v5105
    %v5148 = vadd.f32 %v4958, %v5108
    %v5149 = vadd.f32 %v4959, %v5113
    %v5150 = vadd.f32 %v4960, %v5116
    %v5151 = vadd.f32 %v4961, %v5121
    %v5152 = vadd.f32 %v4962, %v5124
    %v5153 = vadd.f32 %v4963, %v5129
    %v5154 = vadd.f32 %v4964, %v5132
    %v5155 = vmax.f32 %v5135, 0.0
    %v5156 = vmax.f32 %v5136, 0.0
    %v5157 = vmax.f32 %v5137, 0.0
    %v5158 = vmax.f32 %v5138, 0.0
    %v5159 = vmax.f32 %v5139, 0.0
    %v5160 = vmax.f32 %v5140, 0.0
    %v5161 = vmax.f32 %v5141, 0.0
    %v5162 = vmax.f32 %v5142, 0.0
    %v5163 = vmax.f32 %v5143, 0.0
    %v5164 = vmax.f32 %v5144, 0.0
    %v5165 = vmax.f32 %v5145, 0.0
    %v5166 = vmax.f32 %v5146, 0.0
    %v5167 = vmax.f32 %v5147, 0.0
    %v5168 = vmax.f32 %v5148, 0.0
    %v5169 = vmax.f32 %v5149, 0.0
    %v5170 = vmax.f32 %v5150, 0.0
    %v5171 = vmax.f32 %v5151, 0.0
    %v5172 = vmax.f32 %v5152, 0.0
    %v5173 = vmax.f32 %v5153, 0.0
    %v5174 = vmax.f32 %v5154, 0.0
    %v5175 = vpack.c.bf16 %v5156, %v5155
    %v5176 = vpack.c.bf16 %v5158, %v5157
    %v5177 = vpack.c.bf16 %v5160, %v5159
    %v5178 = vpack.c.bf16 %v5162, %v5161
    %v5179 = vpack.c.bf16 %v5164, %v5163
    %v5180 = vpack.c.bf16 %v5166, %v5165
    %v5181 = vpack.c.bf16 %v5168, %v5167
    %v5182 = vpack.c.bf16 %v5170, %v5169
    %v5183 = vpack.c.bf16 %v5172, %v5171
    %v5184 = vpack.c.bf16 %v5174, %v5173
    %v5185 = vld [vmem:[%s7] sm:$0xff]
    %v5186 = vld [vmem:[%s7 + $0x8] sm:$0xff]
    %v5187 = vld [vmem:[%s7 + $0x10] sm:$0xff]
    %v5188 = vld [vmem:[%s7 + $0x18] sm:$0xff]
    %v5189 = vld [vmem:[%s7 + $0x20] sm:$0xff]
    %v5190 = vld [vmem:[%s7 + $0x28] sm:$0xff]
    %v5191 = vld [vmem:[%s7 + $0x30] sm:$0xff]
    %v5192 = vld [vmem:[%s7 + $0x38] sm:$0xff]
    %v5193 = vld [vmem:[%s7 + $0x40] sm:$0xff]
    %v5194 = vld [vmem:[%s7 + $0x48] sm:$0xff]
    %v5195 = vld [vmem:[%s7 + $0x50] sm:$0xff]
    %v5196 = vld [vmem:[%s7 + $0x58] sm:$0xff]
    %v5197 = vld [vmem:[%s7 + $0x60] sm:$0xf]
    %v5198 = vld [vmem:[%s6] sm:$0xf]
    %vm5199 = vcmask 64512
    %v5201 = vsel %vm5199, %v5175, 0
    %v5204 = vsel %vm5199, %v5176, 0
    %v5207 = vsel %vm5199, %v5177, 0
    %v5210 = vsel %vm5199, %v5178, 0
    %v5213 = vsel %vm5199, %v5179, 0
    %v5216 = vsel %vm5199, %v5180, 0
    %v5219 = vsel %vm5199, %v5181, 0
    %v5222 = vsel %vm5199, %v5182, 0
    %v5225 = vsel %vm5199, %v5183, 0
    %v5228 = vsel %vm5199, %v5184, 0
    %vm5230 = vcmask 1043456
    %v5232 = vsel %vm5230, %v5198, 0
    %5234 = vmatprep.subr.bf16.mxu0 0
    %5235 = vmatpush1.bf16.msra.mxu0 %v5232
    %5236 = vmatprep.subr.bf16.mxu0 0
    %5237 = vmatpush1.bf16.msra.mxu0 0
    %5238 = vmatprep.subr.bf16.mxu0 0
    %5239 = vmatpush1.bf16.msra.mxu0 0
    %5240 = vmatprep.subr.bf16.mxu0 0
    %5241 = vmatpush1.bf16.msra.mxu0 0
    %5242 = vmatprep.subr.bf16.mxu0 0
    %5243 = vmatpush1.bf16.msra.mxu0 0
    %5244 = vmatprep.subr.bf16.mxu0 0
    %5245 = vmatpush1.bf16.msra.mxu0 0
    %5246 = vmatprep.subr.bf16.mxu0 0
    %5247 = vmatpush1.bf16.msra.mxu0 0
    %5248 = vmatprep.subr.bf16.mxu0 0
    %5249 = vmatpush1.bf16.msra.mxu0 0
    %5250 = vmatprep.subr.bf16.mxu0 0
    %5251 = vmatpush1.bf16.msra.mxu0 0
    %5252 = vmatprep.subr.bf16.mxu0 0
    %5253 = vmatpush1.bf16.msra.mxu0 0
    %5254 = vmatprep.subr.bf16.mxu0 0
    %5255 = vmatpush1.bf16.msra.mxu0 0
    %5256 = vmatprep.subr.bf16.mxu0 0
    %5257 = vmatpush1.bf16.msra.mxu0 0
    %5258 = vmatprep.subr.bf16.mxu0 0
    %5259 = vmatpush1.bf16.msra.mxu0 0
    %5260 = vmatprep.subr.bf16.mxu0 0
    %5261 = vmatpush1.bf16.msra.mxu0 0
    %5262 = vmatprep.subr.bf16.mxu0 0
    %5263 = vmatpush1.bf16.msra.mxu0 0
    %5264 = vmatprep.subr.bf16.mxu0 0
    %5265 = vmatpush1.bf16.msra.mxu0 0
    %5266 = vmatprep.mubr.bf16.mxu0 0
    %5267 = vmatmul.mubr.bf16.gmra.mrb[0].mxu0 %v5201
    %v5268 = vpop.f32.mrb[0].mxu0
    %v5269 = vadd.f32 0.0, %v5268
    %v5270 = vpop.f32.mrb[0].mxu0
    %v5271 = vpop.f32.mrb[0].mxu0
    %v5272 = vadd.f32 0.0, %v5271
    %v5273 = vpop.f32.mrb[0].mxu0
    %5274 = vmatprep.mubr.bf16.mxu0 0
    %5275 = vmatmul.mubr.bf16.gmra.mrb[0].mxu0 %v5204
    %v5276 = vpop.f32.mrb[0].mxu0
    %v5277 = vadd.f32 0.0, %v5276
    %v5278 = vpop.f32.mrb[0].mxu0
    %v5279 = vpop.f32.mrb[0].mxu0
    %v5280 = vadd.f32 0.0, %v5279
    %v5281 = vpop.f32.mrb[0].mxu0
    %5282 = vmatprep.mubr.bf16.mxu0 0
    %5283 = vmatmul.mubr.bf16.gmra.mrb[0].mxu0 %v5207
    %v5284 = vpop.f32.mrb[0].mxu0
    %v5285 = vadd.f32 0.0, %v5284
    %v5286 = vpop.f32.mrb[0].mxu0
    %v5287 = vpop.f32.mrb[0].mxu0
    %v5288 = vadd.f32 0.0, %v5287
    %v5289 = vpop.f32.mrb[0].mxu0
    %5290 = vmatprep.mubr.bf16.mxu0 0
    %5291 = vmatmul.mubr.bf16.gmra.mrb[0].mxu0 %v5210
    %v5292 = vpop.f32.mrb[0].mxu0
    %v5293 = vadd.f32 0.0, %v5292
    %v5294 = vpop.f32.mrb[0].mxu0
    %v5295 = vpop.f32.mrb[0].mxu0
    %v5296 = vadd.f32 0.0, %v5295
    %v5297 = vpop.f32.mrb[0].mxu0
    %5298 = vmatprep.mubr.bf16.mxu0 0
    %5299 = vmatmul.mubr.bf16.gmra.mrb[0].mxu0 %v5213
    %v5300 = vpop.f32.mrb[0].mxu0
    %v5301 = vadd.f32 0.0, %v5300
    %v5302 = vpop.f32.mrb[0].mxu0
    %v5303 = vpop.f32.mrb[0].mxu0
    %v5304 = vadd.f32 0.0, %v5303
    %v5305 = vpop.f32.mrb[0].mxu0
    %5306 = vmatprep.mubr.bf16.mxu0 0
    %5307 = vmatmul.mubr.bf16.gmra.mrb[0].mxu0 %v5216
    %v5308 = vpop.f32.mrb[0].mxu0
    %v5309 = vadd.f32 0.0, %v5308
    %v5310 = vpop.f32.mrb[0].mxu0
    %v5311 = vpop.f32.mrb[0].mxu0
    %v5312 = vadd.f32 0.0, %v5311
    %v5313 = vpop.f32.mrb[0].mxu0
    %5314 = vmatprep.mubr.bf16.mxu0 0
    %5315 = vmatmul.mubr.bf16.gmra.mrb[0].mxu0 %v5219
    %v5316 = vpop.f32.mrb[0].mxu0
    %v5317 = vadd.f32 0.0, %v5316
    %v5318 = vpop.f32.mrb[0].mxu0
    %v5319 = vpop.f32.mrb[0].mxu0
    %v5320 = vadd.f32 0.0, %v5319
    %v5321 = vpop.f32.mrb[0].mxu0
    %5322 = vmatprep.mubr.bf16.mxu0 0
    %5323 = vmatmul.mubr.bf16.gmra.mrb[0].mxu0 %v5222
    %v5324 = vpop.f32.mrb[0].mxu0
    %v5325 = vadd.f32 0.0, %v5324
    %v5326 = vpop.f32.mrb[0].mxu0
    %v5327 = vpop.f32.mrb[0].mxu0
    %v5328 = vadd.f32 0.0, %v5327
    %v5329 = vpop.f32.mrb[0].mxu0
    %5330 = vmatprep.mubr.bf16.mxu0 0
    %5331 = vmatmul.mubr.bf16.gmra.mrb[0].mxu0 %v5225
    %v5332 = vpop.f32.mrb[0].mxu0
    %v5333 = vadd.f32 0.0, %v5332
    %v5334 = vpop.f32.mrb[0].mxu0
    %v5335 = vpop.f32.mrb[0].mxu0
    %v5336 = vadd.f32 0.0, %v5335
    %v5337 = vpop.f32.mrb[0].mxu0
    %5338 = vmatprep.mubr.bf16.mxu0 0
    %5339 = vmatmul.mubr.bf16.gmra.mrb[0].mxu0 %v5228
    %v5340 = vpop.f32.mrb[0].mxu0
    %v5341 = vadd.f32 0.0, %v5340
    %v5342 = vpop.f32.mrb[0].mxu0
    %v5343 = vpop.f32.mrb[0].mxu0
    %v5344 = vadd.f32 0.0, %v5343
    %v5345 = vpop.f32.mrb[0].mxu0
    %5346 = vdwg.mxu0
    %v5347 = vpack.c.bf16 %v5272, %v5269
    %v5348 = vpack.c.bf16 %v5280, %v5277
    %v5349 = vpack.c.bf16 %v5288, %v5285
    %v5350 = vpack.c.bf16 %v5296, %v5293
    %v5351 = vpack.c.bf16 %v5304, %v5301
    %v5352 = vpack.c.bf16 %v5312, %v5309
    %v5353 = vpack.c.bf16 %v5320, %v5317
    %v5354 = vpack.c.bf16 %v5328, %v5325
    %v5355 = vpack.c.bf16 %v5336, %v5333
    %v5356 = vpack.c.bf16 %v5344, %v5341
    %v5357 = vld [vmem:[%s5] sm:$0xff]
    %v5358 = vld [vmem:[%s5 + $0x8] sm:$0xff]
    %v5359 = vld [vmem:[%s5 + $0x10] sm:$0xff]
    %v5360 = vld [vmem:[%s5 + $0x18] sm:$0xff]
    %v5361 = vld [vmem:[%s5 + $0x20] sm:$0xff]
    %v5362 = vld [vmem:[%s5 + $0x28] sm:$0xff]
    %v5363 = vld [vmem:[%s5 + $0x30] sm:$0xff]
    %v5364 = vld [vmem:[%s5 + $0x38] sm:$0xff]
    %v5365 = vld [vmem:[%s5 + $0x40] sm:$0xff]
    %v5366 = vld [vmem:[%s5 + $0x48] sm:$0xff]
    %v5367 = vld [vmem:[%s5 + $0x50] sm:$0xff]
    %v5368 = vld [vmem:[%s5 + $0x58] sm:$0xff]
    %v5369 = vld [vmem:[%s5 + $0x60] sm:$0x33]
    %v5383 = vunpack.c.l.b16 %v5357
    %v5384 = vunpack.c.h.b16 %v5357
    %v5385 = vunpack.c.l.b16 %v5358
    %v5386 = vunpack.c.h.b16 %v5358
    %v5387 = vunpack.c.l.b16 %v5359
    %v5388 = vunpack.c.h.b16 %v5359
    %v5389 = vunpack.c.l.b16 %v5360
    %v5390 = vunpack.c.h.b16 %v5360
    %v5391 = vunpack.c.l.b16 %v5361
    %v5392 = vunpack.c.h.b16 %v5361
    %v5393 = vunpack.c.l.b16 %v5362
    %v5394 = vunpack.c.h.b16 %v5362
    %v5395 = vunpack.c.l.b16 %v5363
    %v5396 = vunpack.c.h.b16 %v5363
    %v5397 = vunpack.c.l.b16 %v5364
    %v5398 = vunpack.c.h.b16 %v5364
    %v5399 = vunpack.c.l.b16 %v5365
    %v5400 = vunpack.c.h.b16 %v5365
    %v5401 = vunpack.c.l.b16 %v5366
    %v5402 = vunpack.c.h.b16 %v5366
    %v5403 = vunpack.c.l.b16 %v5367
    %v5404 = vunpack.c.h.b16 %v5367
    %v5405 = vunpack.c.l.b16 %v5368
    %v5406 = vunpack.c.h.b16 %v5368
    %v5407 = vunpack.c.l.b16 %v5369
    %v5408 = vunpack.c.h.b16 %v5369
    %v5409 = vpack.c.b16 %v5385, %v5383
    %v5410 = vpack.c.b16 %v5386, %v5384
    %v5411 = vpack.c.b16 %v5389, %v5387
    %v5412 = vpack.c.b16 %v5390, %v5388
    %v5413 = vpack.c.b16 %v5393, %v5391
    %v5414 = vpack.c.b16 %v5394, %v5392
    %v5415 = vpack.c.b16 %v5397, %v5395
    %v5416 = vpack.c.b16 %v5398, %v5396
    %v5417 = vpack.c.b16 %v5401, %v5399
    %v5418 = vpack.c.b16 %v5402, %v5400
    %v5419 = vpack.c.b16 %v5405, %v5403
    %v5420 = vpack.c.b16 %v5406, %v5404
    %v5421 = vpack.c.b16 %v5407, %v5407
    %v5422 = vpack.c.b16 %v5408, %v5408
    %vm5430 = vcmask 261120
    %v5432 = vsel %vm5430, %v5410, 0
    %v5435 = vsel %vm5430, %v5412, 0
    %v5438 = vsel %vm5430, %v5414, 0
    %v5441 = vsel %vm5430, %v5416, 0
    %v5444 = vsel %vm5430, %v5418, 0
    %v5447 = vsel %vm5430, %v5420, 0
    %v5450 = vsel %vm5430, %v5422, 0
    %5452 = vmatprep.subr.bf16.mxu0 0
    %5453 = vmatpush1.bf16.msra.mxu0 %v5347
    %5454 = vmatprep.subr.bf16.mxu0 0
    %5455 = vmatpush1.bf16.msra.mxu0 %v5348
    %5456 = vmatprep.subr.bf16.mxu0 0
    %5457 = vmatpush1.bf16.msra.mxu0 %v5349
    %5458 = vmatprep.subr.bf16.mxu0 0
    %5459 = vmatpush1.bf16.msra.mxu0 %v5350
    %5460 = vmatprep.subr.bf16.mxu0 0
    %5461 = vmatpush1.bf16.msra.mxu0 %v5351
    %5462 = vmatprep.subr.bf16.mxu0 0
    %5463 = vmatpush1.bf16.msra.mxu0 %v5352
    %5464 = vmatprep.subr.bf16.mxu0 0
    %5465 = vmatpush1.bf16.msra.mxu0 %v5353
    %5466 = vmatprep.subr.bf16.mxu0 0
    %5467 = vmatpush1.bf16.msra.mxu0 %v5354
    %5468 = vmatprep.subr.bf16.mxu0 0
    %5469 = vmatpush1.bf16.msra.mxu0 %v5355
    %5470 = vmatprep.subr.bf16.mxu0 0
    %5471 = vmatpush1.bf16.msra.mxu0 %v5356
    %5472 = vmatprep.subr.bf16.mxu0 0
    %5473 = vmatpush1.bf16.msra.mxu0 0
    %5474 = vmatprep.subr.bf16.mxu0 0
    %5475 = vmatpush1.bf16.msra.mxu0 0
    %5476 = vmatprep.subr.bf16.mxu0 0
    %5477 = vmatpush1.bf16.msra.mxu0 0
    %5478 = vmatprep.subr.bf16.mxu0 0
    %5479 = vmatpush1.bf16.msra.mxu0 0
    %5480 = vmatprep.subr.bf16.mxu0 0
    %5481 = vmatpush1.bf16.msra.mxu0 0
    %5482 = vmatprep.subr.bf16.mxu0 0
    %5483 = vmatpush1.bf16.msra.mxu0 0
    %5484 = vmatprep.mubr.bf16.mxu0 %v5432
    %5485 = vmatmul.mubr.bf16.gmra.mrb[0].mxu0 %v5409
    %v5486 = vpop.f32.mrb[0].mxu0
    %v5487 = vadd.f32 0.0, %v5486
    %v5488 = vpop.f32.mrb[0].mxu0
    %v5489 = vpop.f32.mrb[0].mxu0
    %v5490 = vadd.f32 0.0, %v5489
    %v5491 = vpop.f32.mrb[0].mxu0
    %5492 = vmatprep.mubr.bf16.mxu0 %v5435
    %5493 = vmatmul.mubr.bf16.gmra.mrb[0].mxu0 %v5411
    %v5494 = vpop.f32.mrb[0].mxu0
    %v5495 = vadd.f32 0.0, %v5494
    %v5496 = vpop.f32.mrb[0].mxu0
    %v5497 = vpop.f32.mrb[0].mxu0
    %v5498 = vadd.f32 0.0, %v5497
    %v5499 = vpop.f32.mrb[0].mxu0
    %5500 = vmatprep.mubr.bf16.mxu0 %v5438
    %5501 = vmatmul.mubr.bf16.gmra.mrb[0].mxu0 %v5413
    %v5502 = vpop.f32.mrb[0].mxu0
    %v5503 = vadd.f32 0.0, %v5502
    %v5504 = vpop.f32.mrb[0].mxu0
    %v5505 = vpop.f32.mrb[0].mxu0
    %v5506 = vadd.f32 0.0, %v5505
    %v5507 = vpop.f32.mrb[0].mxu0
    %5508 = vmatprep.mubr.bf16.mxu0 %v5441
    %5509 = vmatmul.mubr.bf16.gmra.mrb[0].mxu0 %v5415
    %v5510 = vpop.f32.mrb[0].mxu0
    %v5511 = vadd.f32 0.0, %v5510
    %v5512 = vpop.f32.mrb[0].mxu0
    %v5513 = vpop.f32.mrb[0].mxu0
    %v5514 = vadd.f32 0.0, %v5513
    %v5515 = vpop.f32.mrb[0].mxu0
    %5516 = vmatprep.mubr.bf16.mxu0 %v5444
    %5517 = vmatmul.mubr.bf16.gmra.mrb[0].mxu0 %v5417
    %v5518 = vpop.f32.mrb[0].mxu0
    %v5519 = vadd.f32 0.0, %v5518
    %v5520 = vpop.f32.mrb[0].mxu0
    %v5521 = vpop.f32.mrb[0].mxu0
    %v5522 = vadd.f32 0.0, %v5521
    %v5523 = vpop.f32.mrb[0].mxu0
    %5524 = vmatprep.mubr.bf16.mxu0 %v5447
    %5525 = vmatmul.mubr.bf16.gmra.mrb[0].mxu0 %v5419
    %v5526 = vpop.f32.mrb[0].mxu0
    %v5527 = vadd.f32 0.0, %v5526
    %v5528 = vpop.f32.mrb[0].mxu0
    %v5529 = vpop.f32.mrb[0].mxu0
    %v5530 = vadd.f32 0.0, %v5529
    %v5531 = vpop.f32.mrb[0].mxu0
    %5532 = vmatprep.mubr.bf16.mxu0 %v5450
    %5533 = vmatmul.mubr.bf16.gmra.mrb[0].mxu0 %v5421
    %v5534 = vpop.f32.mrb[0].mxu0
    %v5535 = vadd.f32 0.0, %v5534
    %v5536 = vpop.f32.mrb[0].mxu0
    %v5537 = vpop.f32.mrb[0].mxu0
    %v5538 = vpop.f32.mrb[0].mxu0
    %5539 = vdwg.mxu0
    %5541 = vset.pattern.permute.xlu0 0
    %5542 = vperm.xlu0 %5541, %v5185
    %v5543 = vpop.permute.xlu0 %5542
    %5546 = vset.pattern.permute.xlu0 0
    %5547 = vperm.xlu0 %5546, %v5186
    %v5548 = vpop.permute.xlu0 %5547
    %5551 = vset.pattern.permute.xlu0 0
    %5552 = vperm.xlu0 %5551, %v5187
    %v5553 = vpop.permute.xlu0 %5552
    %5556 = vset.pattern.permute.xlu0 0
    %5557 = vperm.xlu0 %5556, %v5188
    %v5558 = vpop.permute.xlu0 %5557
    %5561 = vset.pattern.permute.xlu0 0
    %5562 = vperm.xlu0 %5561, %v5189
    %v5563 = vpop.permute.xlu0 %5562
    %5566 = vset.pattern.permute.xlu0 0
    %5567 = vperm.xlu0 %5566, %v5190
    %v5568 = vpop.permute.xlu0 %5567
    %5571 = vset.pattern.permute.xlu0 0
    %5572 = vperm.xlu0 %5571, %v5191
    %v5573 = vpop.permute.xlu0 %5572
    %5576 = vset.pattern.permute.xlu0 0
    %5577 = vperm.xlu0 %5576, %v5192
    %v5578 = vpop.permute.xlu0 %5577
    %5581 = vset.pattern.permute.xlu0 0
    %5582 = vperm.xlu0 %5581, %v5193
    %v5583 = vpop.permute.xlu0 %5582
    %5586 = vset.pattern.permute.xlu0 0
    %5587 = vperm.xlu0 %5586, %v5194
    %v5588 = vpop.permute.xlu0 %5587
    %5591 = vset.pattern.permute.xlu0 0
    %5592 = vperm.xlu0 %5591, %v5195
    %v5593 = vpop.permute.xlu0 %5592
    %5596 = vset.pattern.permute.xlu0 0
    %5597 = vperm.xlu0 %5596, %v5196
    %v5598 = vpop.permute.xlu0 %5597
    %5601 = vset.pattern.permute.xlu0 0
    %5602 = vperm.xlu0 %5601, %v5197
    %v5603 = vpop.permute.xlu0 %5602
    %v5605 = vadd.f32 %v5543, %v5487
    %v5606 = vadd.f32 %v5548, %v5490
    %v5607 = vadd.f32 %v5553, %v5495
    %v5608 = vadd.f32 %v5558, %v5498
    %v5609 = vadd.f32 %v5563, %v5503
    %v5610 = vadd.f32 %v5568, %v5506
    %v5611 = vadd.f32 %v5573, %v5511
    %v5612 = vadd.f32 %v5578, %v5514
    %v5613 = vadd.f32 %v5583, %v5519
    %v5614 = vadd.f32 %v5588, %v5522
    %v5615 = vadd.f32 %v5593, %v5527
    %v5616 = vadd.f32 %v5598, %v5530
    %v5617 = vadd.f32 %v5603, %v5535
    %s5618 = scalar_lea.vmem %s6, 4
    %v5619 = vld [vmem:[%s5618] sm:$0xf]
    %v5621 = vsel %vm5230, %v5619, 0
    %5623 = vmatprep.subr.bf16.mxu0 0
    %5624 = vmatpush1.bf16.msra.mxu0 %v5621
    %5625 = vmatprep.subr.bf16.mxu0 0
    %5626 = vmatpush1.bf16.msra.mxu0 0
    %5627 = vmatprep.subr.bf16.mxu0 0
    %5628 = vmatpush1.bf16.msra.mxu0 0
    %5629 = vmatprep.subr.bf16.mxu0 0
    %5630 = vmatpush1.bf16.msra.mxu0 0
    %5631 = vmatprep.subr.bf16.mxu0 0
    %5632 = vmatpush1.bf16.msra.mxu0 0
    %5633 = vmatprep.subr.bf16.mxu0 0
    %5634 = vmatpush1.bf16.msra.mxu0 0
    %5635 = vmatprep.subr.bf16.mxu0 0
    %5636 = vmatpush1.bf16.msra.mxu0 0
    %5637 = vmatprep.subr.bf16.mxu0 0
    %5638 = vmatpush1.bf16.msra.mxu0 0
    %5639 = vmatprep.subr.bf16.mxu0 0
    %5640 = vmatpush1.bf16.msra.mxu0 0
    %5641 = vmatprep.subr.bf16.mxu0 0
    %5642 = vmatpush1.bf16.msra.mxu0 0
    %5643 = vmatprep.subr.bf16.mxu0 0
    %5644 = vmatpush1.bf16.msra.mxu0 0
    %5645 = vmatprep.subr.bf16.mxu0 0
    %5646 = vmatpush1.bf16.msra.mxu0 0
    %5647 = vmatprep.subr.bf16.mxu0 0
    %5648 = vmatpush1.bf16.msra.mxu0 0
    %5649 = vmatprep.subr.bf16.mxu0 0
    %5650 = vmatpush1.bf16.msra.mxu0 0
    %5651 = vmatprep.subr.bf16.mxu0 0
    %5652 = vmatpush1.bf16.msra.mxu0 0
    %5653 = vmatprep.subr.bf16.mxu0 0
    %5654 = vmatpush1.bf16.msra.mxu0 0
    %5655 = vmatprep.mubr.bf16.mxu0 0
    %5656 = vmatmul.mubr.bf16.gmra.mrb[0].mxu0 %v5201
    %v5657 = vpop.f32.mrb[0].mxu0
    %v5658 = vadd.f32 0.0, %v5657
    %v5659 = vpop.f32.mrb[0].mxu0
    %v5660 = vpop.f32.mrb[0].mxu0
    %v5661 = vadd.f32 0.0, %v5660
    %v5662 = vpop.f32.mrb[0].mxu0
    %5663 = vmatprep.mubr.bf16.mxu0 0
    %5664 = vmatmul.mubr.bf16.gmra.mrb[0].mxu0 %v5204
    %v5665 = vpop.f32.mrb[0].mxu0
    %v5666 = vadd.f32 0.0, %v5665
    %v5667 = vpop.f32.mrb[0].mxu0
    %v5668 = vpop.f32.mrb[0].mxu0
    %v5669 = vadd.f32 0.0, %v5668
    %v5670 = vpop.f32.mrb[0].mxu0
    %5671 = vmatprep.mubr.bf16.mxu0 0
    %5672 = vmatmul.mubr.bf16.gmra.mrb[0].mxu0 %v5207
    %v5673 = vpop.f32.mrb[0].mxu0
    %v5674 = vadd.f32 0.0, %v5673
    %v5675 = vpop.f32.mrb[0].mxu0
    %v5676 = vpop.f32.mrb[0].mxu0
    %v5677 = vadd.f32 0.0, %v5676
    %v5678 = vpop.f32.mrb[0].mxu0
    %5679 = vmatprep.mubr.bf16.mxu0 0
    %5680 = vmatmul.mubr.bf16.gmra.mrb[0].mxu0 %v5210
    %v5681 = vpop.f32.mrb[0].mxu0
    %v5682 = vadd.f32 0.0, %v5681
    %v5683 = vpop.f32.mrb[0].mxu0
    %v5684 = vpop.f32.mrb[0].mxu0
    %v5685 = vadd.f32 0.0, %v5684
    %v5686 = vpop.f32.mrb[0].mxu0
    %5687 = vmatprep.mubr.bf16.mxu0 0
    %5688 = vmatmul.mubr.bf16.gmra.mrb[0].mxu0 %v5213
    %v5689 = vpop.f32.mrb[0].mxu0
    %v5690 = vadd.f32 0.0, %v5689
    %v5691 = vpop.f32.mrb[0].mxu0
    %v5692 = vpop.f32.mrb[0].mxu0
    %v5693 = vadd.f32 0.0, %v5692
    %v5694 = vpop.f32.mrb[0].mxu0
    %5695 = vmatprep.mubr.bf16.mxu0 0
    %5696 = vmatmul.mubr.bf16.gmra.mrb[0].mxu0 %v5216
    %v5697 = vpop.f32.mrb[0].mxu0
    %v5698 = vadd.f32 0.0, %v5697
    %v5699 = vpop.f32.mrb[0].mxu0
    %v5700 = vpop.f32.mrb[0].mxu0
    %v5701 = vadd.f32 0.0, %v5700
    %v5702 = vpop.f32.mrb[0].mxu0
    %5703 = vmatprep.mubr.bf16.mxu0 0
    %5704 = vmatmul.mubr.bf16.gmra.mrb[0].mxu0 %v5219
    %v5705 = vpop.f32.mrb[0].mxu0
    %v5706 = vadd.f32 0.0, %v5705
    %v5707 = vpop.f32.mrb[0].mxu0
    %v5708 = vpop.f32.mrb[0].mxu0
    %v5709 = vadd.f32 0.0, %v5708
    %v5710 = vpop.f32.mrb[0].mxu0
    %5711 = vmatprep.mubr.bf16.mxu0 0
    %5712 = vmatmul.mubr.bf16.gmra.mrb[0].mxu0 %v5222
    %v5713 = vpop.f32.mrb[0].mxu0
    %v5714 = vadd.f32 0.0, %v5713
    %v5715 = vpop.f32.mrb[0].mxu0
    %v5716 = vpop.f32.mrb[0].mxu0
    %v5717 = vadd.f32 0.0, %v5716
    %v5718 = vpop.f32.mrb[0].mxu0
    %5719 = vmatprep.mubr.bf16.mxu0 0
    %5720 = vmatmul.mubr.bf16.gmra.mrb[0].mxu0 %v5225
    %v5721 = vpop.f32.mrb[0].mxu0
    %v5722 = vadd.f32 0.0, %v5721
    %v5723 = vpop.f32.mrb[0].mxu0
    %v5724 = vpop.f32.mrb[0].mxu0
    %v5725 = vadd.f32 0.0, %v5724
    %v5726 = vpop.f32.mrb[0].mxu0
    %5727 = vmatprep.mubr.bf16.mxu0 0
    %5728 = vmatmul.mubr.bf16.gmra.mrb[0].mxu0 %v5228
    %v5729 = vpop.f32.mrb[0].mxu0
    %v5730 = vadd.f32 0.0, %v5729
    %v5731 = vpop.f32.mrb[0].mxu0
    %v5732 = vpop.f32.mrb[0].mxu0
    %v5733 = vadd.f32 0.0, %v5732
    %v5734 = vpop.f32.mrb[0].mxu0
    %5735 = vdwg.mxu0
    %v5736 = vpack.c.bf16 %v5661, %v5658
    %v5737 = vpack.c.bf16 %v5669, %v5666
    %v5738 = vpack.c.bf16 %v5677, %v5674
    %v5739 = vpack.c.bf16 %v5685, %v5682
    %v5740 = vpack.c.bf16 %v5693, %v5690
    %v5741 = vpack.c.bf16 %v5701, %v5698
    %v5742 = vpack.c.bf16 %v5709, %v5706
    %v5743 = vpack.c.bf16 %v5717, %v5714
    %v5744 = vpack.c.bf16 %v5725, %v5722
    %v5745 = vpack.c.bf16 %v5733, %v5730
    %s5746 = scalar_lea.vmem %s5, 104
    %v5747 = vld [vmem:[%s5746] sm:$0xff]
    %v5748 = vld [vmem:[%s5746 + $0x8] sm:$0xff]
    %v5749 = vld [vmem:[%s5746 + $0x10] sm:$0xff]
    %v5750 = vld [vmem:[%s5746 + $0x18] sm:$0xff]
    %v5751 = vld [vmem:[%s5746 + $0x20] sm:$0xff]
    %v5752 = vld [vmem:[%s5746 + $0x28] sm:$0xff]
    %v5753 = vld [vmem:[%s5746 + $0x30] sm:$0xff]
    %v5754 = vld [vmem:[%s5746 + $0x38] sm:$0xff]
    %v5755 = vld [vmem:[%s5746 + $0x40] sm:$0xff]
    %v5756 = vld [vmem:[%s5746 + $0x48] sm:$0xff]
    %v5757 = vld [vmem:[%s5746 + $0x50] sm:$0xff]
    %v5758 = vld [vmem:[%s5746 + $0x58] sm:$0xff]
    %v5759 = vld [vmem:[%s5746 + $0x60] sm:$0x33]
    %v5773 = vunpack.c.l.b16 %v5747
    %v5774 = vunpack.c.h.b16 %v5747
    %v5775 = vunpack.c.l.b16 %v5748
    %v5776 = vunpack.c.h.b16 %v5748
    %v5777 = vunpack.c.l.b16 %v5749
    %v5778 = vunpack.c.h.b16 %v5749
    %v5779 = vunpack.c.l.b16 %v5750
    %v5780 = vunpack.c.h.b16 %v5750
    %v5781 = vunpack.c.l.b16 %v5751
    %v5782 = vunpack.c.h.b16 %v5751
    %v5783 = vunpack.c.l.b16 %v5752
    %v5784 = vunpack.c.h.b16 %v5752
    %v5785 = vunpack.c.l.b16 %v5753
    %v5786 = vunpack.c.h.b16 %v5753
    %v5787 = vunpack.c.l.b16 %v5754
    %v5788 = vunpack.c.h.b16 %v5754
    %v5789 = vunpack.c.l.b16 %v5755
    %v5790 = vunpack.c.h.b16 %v5755
    %v5791 = vunpack.c.l.b16 %v5756
    %v5792 = vunpack.c.h.b16 %v5756
    %v5793 = vunpack.c.l.b16 %v5757
    %v5794 = vunpack.c.h.b16 %v5757
    %v5795 = vunpack.c.l.b16 %v5758
    %v5796 = vunpack.c.h.b16 %v5758
    %v5797 = vunpack.c.l.b16 %v5759
    %v5798 = vunpack.c.h.b16 %v5759
    %v5799 = vpack.c.b16 %v5775, %v5773
    %v5800 = vpack.c.b16 %v5776, %v5774
    %v5801 = vpack.c.b16 %v5779, %v5777
    %v5802 = vpack.c.b16 %v5780, %v5778
    %v5803 = vpack.c.b16 %v5783, %v5781
    %v5804 = vpack.c.b16 %v5784, %v5782
    %v5805 = vpack.c.b16 %v5787, %v5785
    %v5806 = vpack.c.b16 %v5788, %v5786
    %v5807 = vpack.c.b16 %v5791, %v5789
    %v5808 = vpack.c.b16 %v5792, %v5790
    %v5809 = vpack.c.b16 %v5795, %v5793
    %v5810 = vpack.c.b16 %v5796, %v5794
    %v5811 = vpack.c.b16 %v5797, %v5797
    %v5812 = vpack.c.b16 %v5798, %v5798
    %v5821 = vsel %vm5430, %v5800, 0
    %v5824 = vsel %vm5430, %v5802, 0
    %v5827 = vsel %vm5430, %v5804, 0
    %v5830 = vsel %vm5430, %v5806, 0
    %v5833 = vsel %vm5430, %v5808, 0
    %v5836 = vsel %vm5430, %v5810, 0
    %v5839 = vsel %vm5430, %v5812, 0
    %5841 = vmatprep.subr.bf16.mxu0 0
    %5842 = vmatpush1.bf16.msra.mxu0 %v5736
    %5843 = vmatprep.subr.bf16.mxu0 0
    %5844 = vmatpush1.bf16.msra.mxu0 %v5737
    %5845 = vmatprep.subr.bf16.mxu0 0
    %5846 = vmatpush1.bf16.msra.mxu0 %v5738
    %5847 = vmatprep.subr.bf16.mxu0 0
    %5848 = vmatpush1.bf16.msra.mxu0 %v5739
    %5849 = vmatprep.subr.bf16.mxu0 0
    %5850 = vmatpush1.bf16.msra.mxu0 %v5740
    %5851 = vmatprep.subr.bf16.mxu0 0
    %5852 = vmatpush1.bf16.msra.mxu0 %v5741
    %5853 = vmatprep.subr.bf16.mxu0 0
    %5854 = vmatpush1.bf16.msra.mxu0 %v5742
    %5855 = vmatprep.subr.bf16.mxu0 0
    %5856 = vmatpush1.bf16.msra.mxu0 %v5743
    %5857 = vmatprep.subr.bf16.mxu0 0
    %5858 = vmatpush1.bf16.msra.mxu0 %v5744
    %5859 = vmatprep.subr.bf16.mxu0 0
    %5860 = vmatpush1.bf16.msra.mxu0 %v5745
    %5861 = vmatprep.subr.bf16.mxu0 0
    %5862 = vmatpush1.bf16.msra.mxu0 0
    %5863 = vmatprep.subr.bf16.mxu0 0
    %5864 = vmatpush1.bf16.msra.mxu0 0
    %5865 = vmatprep.subr.bf16.mxu0 0
    %5866 = vmatpush1.bf16.msra.mxu0 0
    %5867 = vmatprep.subr.bf16.mxu0 0
    %5868 = vmatpush1.bf16.msra.mxu0 0
    %5869 = vmatprep.subr.bf16.mxu0 0
    %5870 = vmatpush1.bf16.msra.mxu0 0
    %5871 = vmatprep.subr.bf16.mxu0 0
    %5872 = vmatpush1.bf16.msra.mxu0 0
    %5873 = vmatprep.mubr.bf16.mxu0 %v5821
    %5874 = vmatmul.mubr.bf16.gmra.mrb[0].mxu0 %v5799
    %v5875 = vpop.f32.mrb[0].mxu0
    %v5876 = vadd.f32 0.0, %v5875
    %v5877 = vpop.f32.mrb[0].mxu0
    %v5878 = vpop.f32.mrb[0].mxu0
    %v5879 = vadd.f32 0.0, %v5878
    %v5880 = vpop.f32.mrb[0].mxu0
    %5881 = vmatprep.mubr.bf16.mxu0 %v5824
    %5882 = vmatmul.mubr.bf16.gmra.mrb[0].mxu0 %v5801
    %v5883 = vpop.f32.mrb[0].mxu0
    %v5884 = vadd.f32 0.0, %v5883
    %v5885 = vpop.f32.mrb[0].mxu0
    %v5886 = vpop.f32.mrb[0].mxu0
    %v5887 = vadd.f32 0.0, %v5886
    %v5888 = vpop.f32.mrb[0].mxu0
    %5889 = vmatprep.mubr.bf16.mxu0 %v5827
    %5890 = vmatmul.mubr.bf16.gmra.mrb[0].mxu0 %v5803
    %v5891 = vpop.f32.mrb[0].mxu0
    %v5892 = vadd.f32 0.0, %v5891
    %v5893 = vpop.f32.mrb[0].mxu0
    %v5894 = vpop.f32.mrb[0].mxu0
    %v5895 = vadd.f32 0.0, %v5894
    %v5896 = vpop.f32.mrb[0].mxu0
    %5897 = vmatprep.mubr.bf16.mxu0 %v5830
    %5898 = vmatmul.mubr.bf16.gmra.mrb[0].mxu0 %v5805
    %v5899 = vpop.f32.mrb[0].mxu0
    %v5900 = vadd.f32 0.0, %v5899
    %v5901 = vpop.f32.mrb[0].mxu0
    %v5902 = vpop.f32.mrb[0].mxu0
    %v5903 = vadd.f32 0.0, %v5902
    %v5904 = vpop.f32.mrb[0].mxu0
    %5905 = vmatprep.mubr.bf16.mxu0 %v5833
    %5906 = vmatmul.mubr.bf16.gmra.mrb[0].mxu0 %v5807
    %v5907 = vpop.f32.mrb[0].mxu0
    %v5908 = vadd.f32 0.0, %v5907
    %v5909 = vpop.f32.mrb[0].mxu0
    %v5910 = vpop.f32.mrb[0].mxu0
    %v5911 = vadd.f32 0.0, %v5910
    %v5912 = vpop.f32.mrb[0].mxu0
    %5913 = vmatprep.mubr.bf16.mxu0 %v5836
    %5914 = vmatmul.mubr.bf16.gmra.mrb[0].mxu0 %v5809
    %v5915 = vpop.f32.mrb[0].mxu0
    %v5916 = vadd.f32 0.0, %v5915
    %v5917 = vpop.f32.mrb[0].mxu0
    %v5918 = vpop.f32.mrb[0].mxu0
    %v5919 = vadd.f32 0.0, %v5918
    %v5920 = vpop.f32.mrb[0].mxu0
    %5921 = vmatprep.mubr.bf16.mxu0 %v5839
    %5922 = vmatmul.mubr.bf16.gmra.mrb[0].mxu0 %v5811
    %v5923 = vpop.f32.mrb[0].mxu0
    %v5924 = vadd.f32 0.0, %v5923
    %v5925 = vpop.f32.mrb[0].mxu0
    %v5926 = vpop.f32.mrb[0].mxu0
    %v5927 = vpop.f32.mrb[0].mxu0
    %5928 = vdwg.mxu0
    %v5929 = vadd.f32 %v5605, %v5876
    %v5930 = vadd.f32 %v5606, %v5879
    %v5931 = vadd.f32 %v5607, %v5884
    %v5932 = vadd.f32 %v5608, %v5887
    %v5933 = vadd.f32 %v5609, %v5892
    %v5934 = vadd.f32 %v5610, %v5895
    %v5935 = vadd.f32 %v5611, %v5900
    %v5936 = vadd.f32 %v5612, %v5903
    %v5937 = vadd.f32 %v5613, %v5908
    %v5938 = vadd.f32 %v5614, %v5911
    %v5939 = vadd.f32 %v5615, %v5916
    %v5940 = vadd.f32 %v5616, %v5919
    %v5941 = vadd.f32 %v5617, %v5924
    %v5942 = vmax.f32 %v5929, 0.0
    %v5943 = vmax.f32 %v5930, 0.0
    %v5944 = vmax.f32 %v5931, 0.0
    %v5945 = vmax.f32 %v5932, 0.0
    %v5946 = vmax.f32 %v5933, 0.0
    %v5947 = vmax.f32 %v5934, 0.0
    %v5948 = vmax.f32 %v5935, 0.0
    %v5949 = vmax.f32 %v5936, 0.0
    %v5950 = vmax.f32 %v5937, 0.0
    %v5951 = vmax.f32 %v5938, 0.0
    %v5952 = vmax.f32 %v5939, 0.0
    %v5953 = vmax.f32 %v5940, 0.0
    %v5954 = vmax.f32 %v5941, 0.0
    %v5955 = vpack.c.bf16 %v5943, %v5942
    %v5956 = vpack.c.bf16 %v5945, %v5944
    %v5957 = vpack.c.bf16 %v5947, %v5946
    %v5958 = vpack.c.bf16 %v5949, %v5948
    %v5959 = vpack.c.bf16 %v5951, %v5950
    %v5960 = vpack.c.bf16 %v5953, %v5952
    %v5961 = vpack.c.bf16 %v5954, %v5954
    %v5962 = vld [vmem:[%s8] sm:$0x1]
    %v5963 = vld [vmem:[#allocation2] sm:$0x1]
    %5965 = vset.pattern.permute.xlu0 0
    %5966 = vperm.xlu0 %5965, %v5963
    %v5967 = vpop.permute.xlu0 %5966
    %v5969 = vlaneseq
    %v5970 = vshrl.u32 %v5969, 7
    %v5971 = vsub.s32 0, %v5970
    %v5972 = vrot.slane %v5967, %v5971
    %vm5973 = vcmask 818176
    %v5975 = vsel %vm5973, %v5962, 0
    %vm5977 = vcmask 1041408
    %v5979 = vsel %vm5977, %v5961, 0
    %5981 = vmatprep.subr.bf16.mxu0 0
    %5982 = vmatpush1.bf16.msra.mxu0 %v5955
    %5983 = vmatprep.subr.bf16.mxu0 0
    %5984 = vmatpush1.bf16.msra.mxu0 %v5956
    %5985 = vmatprep.subr.bf16.mxu0 0
    %5986 = vmatpush1.bf16.msra.mxu0 %v5957
    %5987 = vmatprep.subr.bf16.mxu0 0
    %5988 = vmatpush1.bf16.msra.mxu0 %v5958
    %5989 = vmatprep.subr.bf16.mxu0 0
    %5990 = vmatpush1.bf16.msra.mxu0 %v5959
    %5991 = vmatprep.subr.bf16.mxu0 0
    %5992 = vmatpush1.bf16.msra.mxu0 %v5960
    %5993 = vmatprep.subr.bf16.mxu0 0
    %5994 = vmatpush1.bf16.msra.mxu0 %v5979
    %5995 = vmatprep.subr.bf16.mxu0 0
    %5996 = vmatpush1.bf16.msra.mxu0 0
    %5997 = vmatprep.subr.bf16.mxu0 0
    %5998 = vmatpush1.bf16.msra.mxu0 0
    %5999 = vmatprep.subr.bf16.mxu0 0
    %6000 = vmatpush1.bf16.msra.mxu0 0
    %6001 = vmatprep.subr.bf16.mxu0 0
    %6002 = vmatpush1.bf16.msra.mxu0 0
    %6003 = vmatprep.subr.bf16.mxu0 0
    %6004 = vmatpush1.bf16.msra.mxu0 0
    %6005 = vmatprep.subr.bf16.mxu0 0
    %6006 = vmatpush1.bf16.msra.mxu0 0
    %6007 = vmatprep.subr.bf16.mxu0 0
    %6008 = vmatpush1.bf16.msra.mxu0 0
    %6009 = vmatprep.subr.bf16.mxu0 0
    %6010 = vmatpush1.bf16.msra.mxu0 0
    %6011 = vmatprep.subr.bf16.mxu0 0
    %6012 = vmatpush1.bf16.msra.mxu0 0
    %6013 = vmatprep.mubr.bf16.mxu0 0
    %6014 = vmatmul.mubr.bf16.gmra.mrb[0].mxu0 %v5975
    %v6015 = vpop.f32.mrb[0].mxu0
    %v6016 = vadd.f32 %v5972, %v6015
    %v6017 = vpop.f32.mrb[0].mxu0
    %v6018 = vpop.f32.mrb[0].mxu0
    %v6019 = vpop.f32.mrb[0].mxu0
    %6020 = vdwg.mxu0
    %v6021 = vsub.f32 0.0, %v6016
    %v6022 = vmul.f32 %v6021, 1.442695
    %v6023 = vpow.pop %v6022
    %v6024 = vadd.f32 %v6023, 1.0
    %v6025 = vrcp.pop %v6024
    %vm6026 = vcmask 8192
    %6027 = vst.msk [vmem:[#allocation3] sm:$0x1] %vm6026, %v6025
    // Predicated region
    $region42: #{mymodel_forward.1} parent=1 // pred_check
      _
    $region43: #{mymodel_forward.1} parent=1 // pred_check_branch
      %6029 = sbr.rel (0) target = $region45
    $region44: #{mymodel_forward.1} parent=1 // pred_region
      %s6031 = ssub.s32 16, 16
      %6032 = vsyncadd [#allocation4], %s6031
      %s6034 = sshll.u32 [#allocation3], 4
      %s6035 = int_to_ptr.vmem [resolvable:$true] %s6034
      %6037 = dma.vmem_to_hbm [thread:$0]  %s6035, 16, %s10, [#allocation4]
    $region45: #{mymodel_forward.1} parent=1 // pred_fallthru
      _
    // Predicated region
    $region46: #{mymodel_forward.1} parent=1 // pred_check
      _
    $region47: #{mymodel_forward.1} parent=1 // pred_check_branch
      %6039 = sbr.rel (0) target = $region49
    $region48: #{mymodel_forward.1} parent=1 // pred_region
      %6040 = dma.done [#allocation4], 16
    $region49: #{mymodel_forward.1} parent=1 // pred_fallthru
      _
    %6041 = vsyncpa [#allocation4], 1

</llo_original>
